<compile_context>
chip_gen: v5e
topology: v5e:2x2
jax: 0.10.0
libtpu: 0.0.40
codegen_flags: <defaults>
</compile_context>

<pallas_src>
import math

import jax
import jax.numpy as jnp
from jax import lax
from jax.experimental import pallas as pl
from jax.experimental.pallas import tpu as pltpu

H1 = 1024
H2 = 512
H3_RAW, H3_PAD = 300, 384   # zero-pad third hidden layer to a multiple of 128
W4_ROWS = 8                 # FC4 stored transposed, padded to 8 sublane rows


def critic_kernel(obs_ref, acts_ref,
                  w1_ref, b1_ref,
                  w2a_ref, w2b_ref, b2_ref,
                  w3_ref, b3_ref,
                  w4t_ref, b4_ref,
                  out_ref):
    f32 = jnp.float32
    bf16 = jnp.bfloat16

    obs = obs_ref[...]    # bf16 (cast in wrapper)
    acts = acts_ref[...]  # bf16

    # FC1 + relu
    h1 = jnp.dot(obs, w1_ref[...], preferred_element_type=f32)
    h1 = jnp.maximum(h1 + b1_ref[...], 0.0)

    # FC2 over cat([h1, acts], 1)  ==  h1 @ W2a + acts @ W2b   (exact)
    h2 = (jnp.dot(h1.astype(bf16), w2a_ref[...], preferred_element_type=f32)
          + jnp.dot(acts, w2b_ref[...], preferred_element_type=f32)
          + b2_ref[...])
    h2 = jnp.maximum(h2, 0.0)

    # FC3 + relu (300 zero-padded to 384; padded columns stay exactly zero)
    h3 = jnp.dot(h2.astype(bf16), w3_ref[...], preferred_element_type=f32)
    h3 = jnp.maximum(h3 + b3_ref[...], 0.0)          # keep f32 into FC4

    # FC4 in f32, computed transposed: (8, H3_PAD) x (TB, H3_PAD) contracted
    # on the feature axis -> (8, TB); only row 0 carries the real weights.
    q = lax.dot_general(w4t_ref[...], h3,
                        dimension_numbers=(((1,), (1,)), ((), ())),
                        preferred_element_type=f32)
    out_ref[...] = (q[0:1, :] + b4_ref[...]).astype(out_ref.dtype)


def _pick_tb(batch):
    # 256 fills the 256-wide MXU on v6e/v7x, but only use it when >= 2 grid
    # steps remain (so v7x's second TensorCore gets work); else 128.
    return 256 if batch >= 512 else 128


def critic_forward(obs, acts, kparams, *, tb=None):
    B, obs_dim = obs.shape
    act_dim = acts.shape[1]
    if tb is None:
        tb = _pick_tb(B)

    # Pad the batch to a multiple of the batch tile.
    b_pad = pl.cdiv(B, tb) * tb
    if b_pad != B:
        obs = jnp.pad(obs, ((0, b_pad - B), (0, 0)))
        acts = jnp.pad(acts, ((0, b_pad - B), (0, 0)))

    # Cast activations once here: halves input DMA, removes in-kernel casts.
    obs = obs.astype(jnp.bfloat16)
    acts = acts.astype(jnp.bfloat16)

    args = (obs, acts,
            kparams["w1"], kparams["b1"],
            kparams["w2a"], kparams["w2b"], kparams["b2"],
            kparams["w3"], kparams["b3"],
            kparams["w4t"], kparams["b4"])

    def batch_spec(d):
        return pl.BlockSpec((tb, d), lambda i: (i, 0))

    def resident_spec(arr):
        # Full-array block, constant index -> stays in VMEM across grid steps.
        return pl.BlockSpec(arr.shape, lambda i: (0, 0))

    in_specs = [batch_spec(obs_dim), batch_spec(act_dim)]
    in_specs += [resident_spec(a) for a in args[2:]]

    out = pl.pallas_call(
        critic_kernel,
        out_shape=jax.ShapeDtypeStruct((1, b_pad), jnp.float32),
        grid_spec=pltpu.PrefetchScalarGridSpec(
            num_scalar_prefetch=0,
            grid=(b_pad // tb,),
            in_specs=in_specs,
            # Lane-dense (1, tb) output block: batch lives on the lane axis.
            out_specs=pl.BlockSpec((1, tb), lambda i: (0, i)),
        ),
        compiler_params=pltpu.CompilerParams(
            dimension_semantics=("parallel",)),
    )(*args)

    # (1, b_pad) -> (b_pad, 1) is a free reshape of a contiguous vector.
    return jnp.reshape(out, (b_pad, 1))[:B]


def init_params(key, obs_dim, act_dim):
    """PyTorch-style Linear init: U(-1/sqrt(fan_in), 1/sqrt(fan_in)), f32."""
    dims = [
        ("1", obs_dim, H1),
        ("2", H1 + act_dim, H2),
        ("3", H2, H3_RAW),
        ("4", H3_RAW, 1),
    ]
    params = {}
    for name, d_in, d_out in dims:
        key, kw, kb = jax.random.split(key, 3)
        bound = 1.0 / math.sqrt(d_in)
        params[f"w{name}"] = jax.random.uniform(kw, (d_in, d_out), jnp.float32,
                                                -bound, bound)
        params[f"b{name}"] = jax.random.uniform(kb, (1, d_out), jnp.float32,
                                                -bound, bound)
    return params


def make_kernel_params(params):
    """Split W2, zero-pad FC3 to 384, build transposed f32 FC4, cast to bf16."""
    w2a = params["w2"][:H1, :]
    w2b = params["w2"][H1:, :]
    w3 = jnp.pad(params["w3"], ((0, 0), (0, H3_PAD - H3_RAW)))
    b3 = jnp.pad(params["b3"], ((0, 0), (0, H3_PAD - H3_RAW)))
    # FC4 stored transposed (1, 300) -> zero-padded to (8, 384), kept f32.
    w4t = jnp.pad(params["w4"].T, ((0, W4_ROWS - 1), (0, H3_PAD - H3_RAW)))

    def bf(x):
        return x.astype(jnp.bfloat16)

    return {
        "w1": bf(params["w1"]), "b1": params["b1"],
        "w2a": bf(w2a), "w2b": bf(w2b), "b2": params["b2"],
        "w3": bf(w3), "b3": b3,
        "w4t": w4t, "b4": params["b4"],
    }


def reference_forward(obs, acts, params):
    h1 = jax.nn.relu(obs @ params["w1"] + params["b1"])
    comb = jnp.concatenate([h1, acts], axis=1)
    h2 = jax.nn.relu(comb @ params["w2"] + params["b2"])
    h3 = jax.nn.relu(h2 @ params["w3"] + params["b3"])
    return h3 @ params["w4"] + params["b4"]


if __name__ == "__main__":
    B, OBS_DIM, ACT_DIM = 256, 32, 8

    key = jax.random.PRNGKey(0)
    kp, ko, ka = jax.random.split(key, 3)

    params = init_params(kp, OBS_DIM, ACT_DIM)       # f32 reference weights
    kparams = make_kernel_params(params)             # device-resident kernel weights

    obs = jax.random.normal(ko, (B, OBS_DIM), jnp.float32)
    acts = jax.random.normal(ka, (B, ACT_DIM), jnp.float32)

    # Compile once; every RL step reuses the same executable + on-device weights.
    fwd = jax.jit(critic_forward, static_argnames=("tb",))

    out = fwd(obs, acts, kparams)
    out = jax.block_until_ready(out)

    ref = reference_forward(obs, acts, params)
    assert out.shape == (B, 1), out.shape

    # bf16 weights/activations (FC1-3) -> loosened tolerance vs f32 reference.
    rel_err = jnp.linalg.norm(out - ref) / jnp.maximum(jnp.linalg.norm(ref), 1e-6)
    assert float(rel_err) < 3e-2, f"relative error too large: {float(rel_err)}"

    print("KERNEL_OK")
</pallas_src>

<mosaic_0001>
module attributes {stable_mosaic.version = 11 : i64} {
  func.func @critic_kernel(%arg0: i32, %arg1: memref<128x32xbf16, #tpu.memory_space<vmem>>, %arg2: memref<128x8xbf16, #tpu.memory_space<vmem>>, %arg3: memref<32x1024xbf16, #tpu.memory_space<vmem>>, %arg4: memref<1x1024xf32, #tpu.memory_space<vmem>>, %arg5: memref<1024x512xbf16, #tpu.memory_space<vmem>>, %arg6: memref<8x512xbf16, #tpu.memory_space<vmem>>, %arg7: memref<1x512xf32, #tpu.memory_space<vmem>>, %arg8: memref<512x384xbf16, #tpu.memory_space<vmem>>, %arg9: memref<1x384xf32, #tpu.memory_space<vmem>>, %arg10: memref<8x384xf32, #tpu.memory_space<vmem>>, %arg11: memref<1x1xf32, #tpu.memory_space<vmem>>, %arg12: memref<1x128xf32, #tpu.memory_space<vmem>>) attributes {dimension_semantics = [#tpu.dimension_semantics<parallel>], iteration_bounds = array<i64: 2>, scalar_prefetch = 0 : i64, scratch_operands = 0 : i64, tpu.core_type = #tpu.core_type<tc>, window_params = [{transform_indices = @transform_0, window_bounds = array<i64: 128, 32>}, {transform_indices = @transform_1, window_bounds = array<i64: 128, 8>}, {pipeline_mode = #tpu.pipeline_mode<synchronous>, transform_indices = @transform_2, window_bounds = array<i64: 32, 1024>}, {pipeline_mode = #tpu.pipeline_mode<synchronous>, transform_indices = @transform_3, window_bounds = array<i64: 1, 1024>}, {pipeline_mode = #tpu.pipeline_mode<synchronous>, transform_indices = @transform_4, window_bounds = array<i64: 1024, 512>}, {pipeline_mode = #tpu.pipeline_mode<synchronous>, transform_indices = @transform_5, window_bounds = array<i64: 8, 512>}, {pipeline_mode = #tpu.pipeline_mode<synchronous>, transform_indices = @transform_6, window_bounds = array<i64: 1, 512>}, {pipeline_mode = #tpu.pipeline_mode<synchronous>, transform_indices = @transform_7, window_bounds = array<i64: 512, 384>}, {pipeline_mode = #tpu.pipeline_mode<synchronous>, transform_indices = @transform_8, window_bounds = array<i64: 1, 384>}, {pipeline_mode = #tpu.pipeline_mode<synchronous>, transform_indices = @transform_9, window_bounds = array<i64: 8, 384>}, {pipeline_mode = #tpu.pipeline_mode<synchronous>, transform_indices = @transform_10, window_bounds = array<i64: 1, 1>}, {transform_indices = @transform_11, window_bounds = array<i64: 1, 128>}]} {
    %c0 = arith.constant 0 : index
    %c0_0 = arith.constant 0 : index
    %0 = vector.load %arg1[%c0, %c0_0] : memref<128x32xbf16, #tpu.memory_space<vmem>>, vector<128x32xbf16>
    %c0_1 = arith.constant 0 : index
    %c0_2 = arith.constant 0 : index
    %1 = vector.load %arg2[%c0_1, %c0_2] : memref<128x8xbf16, #tpu.memory_space<vmem>>, vector<128x8xbf16>
    %c0_3 = arith.constant 0 : index
    %c0_4 = arith.constant 0 : index
    %2 = vector.load %arg3[%c0_3, %c0_4] : memref<32x1024xbf16, #tpu.memory_space<vmem>>, vector<32x1024xbf16>
    %cst = arith.constant dense<0.000000e+00> : vector<128x1024xf32>
    %3 = tpu.matmul %0, %2, %cst {dimension_numbers = #tpu.dot_dimension_numbers<[1], [0], [0], [1], [0, 0, 1, 1], [], []>} : vector<128x32xbf16>, vector<32x1024xbf16>, vector<128x1024xf32> -> vector<128x1024xf32>
    %c0_5 = arith.constant 0 : index
    %c0_6 = arith.constant 0 : index
    %4 = vector.load %arg4[%c0_5, %c0_6] : memref<1x1024xf32, #tpu.memory_space<vmem>>, vector<1x1024xf32>
    %5 = vector.broadcast %4 : vector<1x1024xf32> to vector<128x1024xf32>
    %6 = arith.addf %3, %5 : vector<128x1024xf32>
    %cst_7 = arith.constant 0.000000e+00 : f32
    %7 = vector.broadcast %cst_7 : f32 to vector<128x1024xf32>
    %8 = arith.maximumf %6, %7 : vector<128x1024xf32>
    %9 = arith.truncf %8 : vector<128x1024xf32> to vector<128x1024xbf16>
    %c0_8 = arith.constant 0 : index
    %c0_9 = arith.constant 0 : index
    %10 = vector.load %arg5[%c0_8, %c0_9] : memref<1024x512xbf16, #tpu.memory_space<vmem>>, vector<1024x512xbf16>
    %cst_10 = arith.constant dense<0.000000e+00> : vector<128x512xf32>
    %11 = tpu.matmul %9, %10, %cst_10 {dimension_numbers = #tpu.dot_dimension_numbers<[1], [0], [0], [1], [0, 0, 1, 1], [], []>} : vector<128x1024xbf16>, vector<1024x512xbf16>, vector<128x512xf32> -> vector<128x512xf32>
    %c0_11 = arith.constant 0 : index
    %c0_12 = arith.constant 0 : index
    %12 = vector.load %arg6[%c0_11, %c0_12] : memref<8x512xbf16, #tpu.memory_space<vmem>>, vector<8x512xbf16>
    %cst_13 = arith.constant dense<0.000000e+00> : vector<128x512xf32>
    %13 = tpu.matmul %1, %12, %cst_13 {dimension_numbers = #tpu.dot_dimension_numbers<[1], [0], [0], [1], [0, 0, 1, 1], [], []>} : vector<128x8xbf16>, vector<8x512xbf16>, vector<128x512xf32> -> vector<128x512xf32>
    %14 = arith.addf %11, %13 : vector<128x512xf32>
    %c0_14 = arith.constant 0 : index
    %c0_15 = arith.constant 0 : index
    %15 = vector.load %arg7[%c0_14, %c0_15] : memref<1x512xf32, #tpu.memory_space<vmem>>, vector<1x512xf32>
    %16 = vector.broadcast %15 : vector<1x512xf32> to vector<128x512xf32>
    %17 = arith.addf %14, %16 : vector<128x512xf32>
    %cst_16 = arith.constant 0.000000e+00 : f32
    %18 = vector.broadcast %cst_16 : f32 to vector<128x512xf32>
    %19 = arith.maximumf %17, %18 : vector<128x512xf32>
    %20 = arith.truncf %19 : vector<128x512xf32> to vector<128x512xbf16>
    %c0_17 = arith.constant 0 : index
    %c0_18 = arith.constant 0 : index
    %21 = vector.load %arg8[%c0_17, %c0_18] : memref<512x384xbf16, #tpu.memory_space<vmem>>, vector<512x384xbf16>
    %cst_19 = arith.constant dense<0.000000e+00> : vector<128x384xf32>
    %22 = tpu.matmul %20, %21, %cst_19 {dimension_numbers = #tpu.dot_dimension_numbers<[1], [0], [0], [1], [0, 0, 1, 1], [], []>} : vector<128x512xbf16>, vector<512x384xbf16>, vector<128x384xf32> -> vector<128x384xf32>
    %c0_20 = arith.constant 0 : index
    %c0_21 = arith.constant 0 : index
    %23 = vector.load %arg9[%c0_20, %c0_21] : memref<1x384xf32, #tpu.memory_space<vmem>>, vector<1x384xf32>
    %24 = vector.broadcast %23 : vector<1x384xf32> to vector<128x384xf32>
    %25 = arith.addf %22, %24 : vector<128x384xf32>
    %cst_22 = arith.constant 0.000000e+00 : f32
    %26 = vector.broadcast %cst_22 : f32 to vector<128x384xf32>
    %27 = arith.maximumf %25, %26 : vector<128x384xf32>
    %c0_23 = arith.constant 0 : index
    %c0_24 = arith.constant 0 : index
    %28 = vector.load %arg10[%c0_23, %c0_24] : memref<8x384xf32, #tpu.memory_space<vmem>>, vector<8x384xf32>
    %cst_25 = arith.constant dense<0.000000e+00> : vector<8x128xf32>
    %29 = tpu.matmul %28, %27, %cst_25 {dimension_numbers = #tpu.dot_dimension_numbers<[1], [1], [0], [0], [0, 0, 1, 0], [], []>} : vector<8x384xf32>, vector<128x384xf32>, vector<8x128xf32> -> vector<8x128xf32>
    %30 = vector.extract_strided_slice %29 {offsets = [0, 0], sizes = [1, 128], strides = [1, 1]} : vector<8x128xf32> to vector<1x128xf32>
    %c0_26 = arith.constant 0 : index
    %c0_27 = arith.constant 0 : index
    %31 = vector.load %arg11[%c0_26, %c0_27] : memref<1x1xf32, #tpu.memory_space<vmem>>, vector<1x1xf32>
    %32 = vector.broadcast %31 : vector<1x1xf32> to vector<1x128xf32>
    %33 = arith.addf %30, %32 : vector<1x128xf32>
    %c0_28 = arith.constant 0 : index
    %c0_29 = arith.constant 0 : index
    %34 = vector.load %arg12[%c0_28, %c0_29] : memref<1x128xf32, #tpu.memory_space<vmem>>, vector<1x128xf32>
    tpu.vector_store %arg12[%c0_28, %c0_29], %33 {strides = array<i32>} : memref<1x128xf32, #tpu.memory_space<vmem>>, vector<1x128xf32>,
    return
  }
  func.func @transform_0(%arg0: i32) -> (i32, i32) {
    %c0_i32 = arith.constant 0 : i32
    %c0_i32_0 = arith.constant 0 : i32
    return %arg0, %c0_i32 : i32, i32
  }
  func.func @transform_1(%arg0: i32) -> (i32, i32) {
    %c0_i32 = arith.constant 0 : i32
    %c0_i32_0 = arith.constant 0 : i32
    return %arg0, %c0_i32 : i32, i32
  }
  func.func @transform_2(%arg0: i32) -> (i32, i32) {
    %c0_i32 = arith.constant 0 : i32
    %c0_i32_0 = arith.constant 0 : i32
    %c0_i32_1 = arith.constant 0 : i32
    return %c0_i32, %c0_i32_0 : i32, i32
  }
  func.func @transform_3(%arg0: i32) -> (i32, i32) {
    %c0_i32 = arith.constant 0 : i32
    %c0_i32_0 = arith.constant 0 : i32
    %c0_i32_1 = arith.constant 0 : i32
    return %c0_i32, %c0_i32_0 : i32, i32
  }
  func.func @transform_4(%arg0: i32) -> (i32, i32) {
    %c0_i32 = arith.constant 0 : i32
    %c0_i32_0 = arith.constant 0 : i32
    %c0_i32_1 = arith.constant 0 : i32
    return %c0_i32, %c0_i32_0 : i32, i32
  }
  func.func @transform_5(%arg0: i32) -> (i32, i32) {
    %c0_i32 = arith.constant 0 : i32
    %c0_i32_0 = arith.constant 0 : i32
    %c0_i32_1 = arith.constant 0 : i32
    return %c0_i32, %c0_i32_0 : i32, i32
  }
  func.func @transform_6(%arg0: i32) -> (i32, i32) {
    %c0_i32 = arith.constant 0 : i32
    %c0_i32_0 = arith.constant 0 : i32
    %c0_i32_1 = arith.constant 0 : i32
    return %c0_i32, %c0_i32_0 : i32, i32
  }
  func.func @transform_7(%arg0: i32) -> (i32, i32) {
    %c0_i32 = arith.constant 0 : i32
    %c0_i32_0 = arith.constant 0 : i32
    %c0_i32_1 = arith.constant 0 : i32
    return %c0_i32, %c0_i32_0 : i32, i32
  }
  func.func @transform_8(%arg0: i32) -> (i32, i32) {
    %c0_i32 = arith.constant 0 : i32
    %c0_i32_0 = arith.constant 0 : i32
    %c0_i32_1 = arith.constant 0 : i32
    return %c0_i32, %c0_i32_0 : i32, i32
  }
  func.func @transform_9(%arg0: i32) -> (i32, i32) {
    %c0_i32 = arith.constant 0 : i32
    %c0_i32_0 = arith.constant 0 : i32
    %c0_i32_1 = arith.constant 0 : i32
    return %c0_i32, %c0_i32_0 : i32, i32
  }
  func.func @transform_10(%arg0: i32) -> (i32, i32) {
    %c0_i32 = arith.constant 0 : i32
    %c0_i32_0 = arith.constant 0 : i32
    %c0_i32_1 = arith.constant 0 : i32
    return %c0_i32, %c0_i32_0 : i32, i32
  }
  func.func @transform_11(%arg0: i32) -> (i32, i32) {
    %c0_i32 = arith.constant 0 : i32
    %c0_i32_0 = arith.constant 0 : i32
    return %c0_i32, %arg0 : i32, i32
  }
}

</mosaic_0001>

<llo_original>
// kernel: critic_forward.1
$region0: #{critic_forward.1}
  #allocation0 [shape = 'u32[]', space=smem, size = 0x4, offset = 0x4, fixed_abs, tag = 'smem constant byte address 0x4 - core index']
  #allocation1 [shape = 'u32[72,128]{1,0:T(1,128)}', space=vmem, size = 0x9000, scoped, tag = 'internal scratch']
  #allocation2 [shape = 'f32[1,1]{1,0:T(1,128)S(1)}', space=vmem, size = 0x200, scoped, tag = 'scoped memory for critic_forward.1']
  %s0 = inlined_call_operand.vmem [shape: bf16[256,32], index: 0, kind: input, shape index: {}]
  %s1 = inlined_call_operand.vmem [shape: bf16[256,8], index: 1, kind: input, shape index: {}]
  %s2 = inlined_call_operand.vmem [shape: bf16[32,1024], index: 2, kind: input, shape index: {}]
  %s3 = inlined_call_operand.vmem [shape: f32[1,1024], index: 3, kind: input, shape index: {}]
  %s4 = inlined_call_operand.hbm [shape: bf16[1024,512], index: 4, kind: input, shape index: {}]
  %s5 = inlined_call_operand.vmem [shape: bf16[8,512], index: 5, kind: input, shape index: {}]
  %s6 = inlined_call_operand.vmem [shape: f32[1,512], index: 6, kind: input, shape index: {}]
  %s7 = inlined_call_operand.hbm [shape: bf16[512,384], index: 7, kind: input, shape index: {}]
  %s8 = inlined_call_operand.vmem [shape: f32[1,384], index: 8, kind: input, shape index: {}]
  %s9 = inlined_call_operand.vmem [shape: f32[8,384], index: 9, kind: input, shape index: {}]
  %s10 = inlined_call_operand.<no memory space> [shape: f32[1,1], index: 10, kind: input, shape index: {}]
  %s11 = inlined_call_operand.hbm [shape: f32[1,256], index: 11, kind: output, shape index: {}]
  %s12 = sld [smem:[#allocation0]]
  $region85: #{critic_forward.1} parent=0
    _
  %s14 = ssub.s32 1, %s12
  %s15 = scalar_select 0, %s14, %s12
  %v16 = vstv %s10
  %17 = vst [vmem:[#allocation2] sm:$0x1] %v16
  $region1: #{critic_forward.1} parent=0
    #allocation3 [shape = 'u8[1048576]{0}', space=vmem, size = 0x100000, scoped, tag = 'input window, operand 4, single buffered']
    #allocation4 [shape = 's32[2]{0}', space=sflag, size = 0x8, scoped, tag = 'scoped memory for critic_forward.1']
    #allocation5 [shape = 's32[2]{0}', space=sflag, size = 0x8, scoped, tag = 'scoped memory for critic_forward.1']
    #allocation6 [shape = 'u8[393216]{0}', space=vmem, size = 0x60000, scoped, tag = 'input window, operand 7, single buffered']
    #allocation7 [shape = 's32[1]{0}', space=sflag, size = 0x4, scoped, tag = 'scoped memory for critic_forward.1']
    #allocation8 [shape = 'u8[1024]{0}', space=vmem, size = 0x400, scoped, tag = 'output window, operand 0']
    %18 = vsyncpa [#allocation4], 0
    %19 = vsyncpa [#allocation7], 0
    %20 = vsyncpa [#allocation5], 0
    %s21 = scalar_lea.sflag [#allocation5], 1
    %22 = vsyncpa %s21, 0
    loop: start=0, step=1, limit=4
    $region2: #{critic_forward.1} parent=1 // loop_pre_header
      _
    $region3: #{critic_forward.1} parent=1 // loop_header
      %s24 = sphi 0, %s28
      %p25 = scmp.ge.s32.totalorder %s24, 4
      %s34 = sphi 0, %s36
      %s37 = sphi 0, %s34
      %s38 = sphi 0, %s37
      %s54 = sphi 0, %s38
      %s60 = sphi 0, %s62
      %s63 = sphi 0, %s60
      %s64 = sphi 0, %s63
      %s80 = sphi 0, %s64
      %s84 = sphi 0, %s84
      %s86 = sphi 0, %s84
      %s87 = sphi 0, %s86
      %s101 = sphi 0, %s87
      %s105 = sphi 0, %s105
      %s107 = sphi 0, %s105
      %s108 = sphi 0, %s107
      %s122 = sphi 0, %s108
      %s126 = sphi 0, %s126
      %s128 = sphi 0, %s126
      %s129 = sphi 0, %s128
      %s143 = sphi 0, %s129
      %s147 = sphi 0, %s147
      %s149 = sphi 0, %s147
      %s150 = sphi 0, %s149
      %s164 = sphi 0, %s150
      %s168 = sphi 0, %s168
      %s170 = sphi 0, %s168
      %s171 = sphi 0, %s170
      %s185 = sphi 0, %s171
      %s189 = sphi 0, %s189
      %s191 = sphi 0, %s189
      %s192 = sphi 0, %s191
      %s206 = sphi 0, %s192
      %s210 = sphi 0, %s210
      %s212 = sphi 0, %s210
      %s213 = sphi 0, %s212
      %s227 = sphi 0, %s213
      %s231 = sphi 0, %s231
      %s233 = sphi 0, %s231
      %s234 = sphi 0, %s233
      %s248 = sphi 0, %s234
      %s252 = sphi 0, %s252
      %s254 = sphi 0, %s252
      %s255 = sphi 0, %s254
      %s269 = sphi 0, %s255
      %s275 = sphi 0, %s277
      %s278 = sphi 0, %s275
      %s279 = sphi 0, %s278
      %s295 = sphi 0, %s279
    $region4: #{critic_forward.1} parent=1 // loop_header_branch
      %27 = sbr.rel (%p25) target = $region8
    $region5: #{critic_forward.1} parent=1 // loop_body
      %s29 = ssub.s32 %s24, 1
      %s30 = ssub.s32 %s24, 2
      %s31 = sadd.s32 %s24, 1
      %s32 = ssub.s32 %s24, %s31
      %p33 = scmp.eq.s32.totalorder %s32, 0
      %s35 = sadd.s32 %s34, 1
      %s36 = scalar_select %p33, %s34, %s35
      %p39 = pneg %p33
      %p40 = scmp.eq.s32.totalorder %s24, 1
      %p41 = por %p39, %p40
      %p42 = scmp.ne.s32.totalorder %s34, %s37
      %p43 = scmp.eq.s32.totalorder %s24, 0
      %p44 = por %p42, %p43
      %p45 = scmp.ne.s32.totalorder %s34, %s37
      %p46 = scmp.eq.s32.totalorder %s29, 1
      %p47 = por %p45, %p46
      %p48 = scmp.ne.s32.totalorder %s37, %s38
      %p49 = scmp.eq.s32.totalorder %s29, 0
      %p50 = por %p48, %p49
      %p51 = scmp.ne.s32.totalorder %s37, %s38
      %p52 = scmp.eq.s32.totalorder %s30, 1
      %p53 = por %p51, %p52
      %p55 = scmp.ne.s32.totalorder %s38, %s54
      %p56 = scmp.eq.s32.totalorder %s30, 0
      %p57 = por %p55, %p56
      %s58 = ssub.s32 %s24, %s31
      %p59 = scmp.eq.s32.totalorder %s58, 0
      %s61 = sadd.s32 %s60, 1
      %s62 = scalar_select %p59, %s60, %s61
      %p65 = pneg %p59
      %p66 = scmp.eq.s32.totalorder %s24, 1
      %p67 = por %p65, %p66
      %p68 = scmp.ne.s32.totalorder %s60, %s63
      %p69 = scmp.eq.s32.totalorder %s24, 0
      %p70 = por %p68, %p69
      %p71 = scmp.ne.s32.totalorder %s60, %s63
      %p72 = scmp.eq.s32.totalorder %s29, 1
      %p73 = por %p71, %p72
      %p74 = scmp.ne.s32.totalorder %s63, %s64
      %p75 = scmp.eq.s32.totalorder %s29, 0
      %p76 = por %p74, %p75
      %p77 = scmp.ne.s32.totalorder %s63, %s64
      %p78 = scmp.eq.s32.totalorder %s30, 1
      %p79 = por %p77, %p78
      %p81 = scmp.ne.s32.totalorder %s64, %s80
      %p82 = scmp.eq.s32.totalorder %s30, 0
      %p83 = por %p81, %p82
      %s85 = sadd.s32 %s84, 1
      %p88 = scmp.eq.s32.totalorder %s24, 1
      %p89 = scmp.ne.s32.totalorder %s84, %s86
      %p90 = scmp.eq.s32.totalorder %s24, 0
      %p91 = por %p89, %p90
      %p92 = scmp.ne.s32.totalorder %s84, %s86
      %p93 = scmp.eq.s32.totalorder %s29, 1
      %p94 = por %p92, %p93
      %p95 = scmp.ne.s32.totalorder %s86, %s87
      %p96 = scmp.eq.s32.totalorder %s29, 0
      %p97 = por %p95, %p96
      %p98 = scmp.ne.s32.totalorder %s86, %s87
      %p99 = scmp.eq.s32.totalorder %s30, 1
      %p100 = por %p98, %p99
      %p102 = scmp.ne.s32.totalorder %s87, %s101
      %p103 = scmp.eq.s32.totalorder %s30, 0
      %p104 = por %p102, %p103
      %s106 = sadd.s32 %s105, 1
      %p109 = scmp.eq.s32.totalorder %s24, 1
      %p110 = scmp.ne.s32.totalorder %s105, %s107
      %p111 = scmp.eq.s32.totalorder %s24, 0
      %p112 = por %p110, %p111
      %p113 = scmp.ne.s32.totalorder %s105, %s107
      %p114 = scmp.eq.s32.totalorder %s29, 1
      %p115 = por %p113, %p114
      %p116 = scmp.ne.s32.totalorder %s107, %s108
      %p117 = scmp.eq.s32.totalorder %s29, 0
      %p118 = por %p116, %p117
      %p119 = scmp.ne.s32.totalorder %s107, %s108
      %p120 = scmp.eq.s32.totalorder %s30, 1
      %p121 = por %p119, %p120
      %p123 = scmp.ne.s32.totalorder %s108, %s122
      %p124 = scmp.eq.s32.totalorder %s30, 0
      %p125 = por %p123, %p124
      %s127 = sadd.s32 %s126, 1
      %p130 = scmp.eq.s32.totalorder %s24, 1
      %p131 = scmp.ne.s32.totalorder %s126, %s128
      %p132 = scmp.eq.s32.totalorder %s24, 0
      %p133 = por %p131, %p132
      %p134 = scmp.ne.s32.totalorder %s126, %s128
      %p135 = scmp.eq.s32.totalorder %s29, 1
      %p136 = por %p134, %p135
      %p137 = scmp.ne.s32.totalorder %s128, %s129
      %p138 = scmp.eq.s32.totalorder %s29, 0
      %p139 = por %p137, %p138
      %p140 = scmp.ne.s32.totalorder %s128, %s129
      %p141 = scmp.eq.s32.totalorder %s30, 1
      %p142 = por %p140, %p141
      %p144 = scmp.ne.s32.totalorder %s129, %s143
      %p145 = scmp.eq.s32.totalorder %s30, 0
      %p146 = por %p144, %p145
      %s148 = sadd.s32 %s147, 1
      %p151 = scmp.eq.s32.totalorder %s24, 1
      %p152 = scmp.ne.s32.totalorder %s147, %s149
      %p153 = scmp.eq.s32.totalorder %s24, 0
      %p154 = por %p152, %p153
      %p155 = scmp.ne.s32.totalorder %s147, %s149
      %p156 = scmp.eq.s32.totalorder %s29, 1
      %p157 = por %p155, %p156
      %p158 = scmp.ne.s32.totalorder %s149, %s150
      %p159 = scmp.eq.s32.totalorder %s29, 0
      %p160 = por %p158, %p159
      %p161 = scmp.ne.s32.totalorder %s149, %s150
      %p162 = scmp.eq.s32.totalorder %s30, 1
      %p163 = por %p161, %p162
      %p165 = scmp.ne.s32.totalorder %s150, %s164
      %p166 = scmp.eq.s32.totalorder %s30, 0
      %p167 = por %p165, %p166
      %s169 = sadd.s32 %s168, 1
      %p172 = scmp.eq.s32.totalorder %s24, 1
      %p173 = scmp.ne.s32.totalorder %s168, %s170
      %p174 = scmp.eq.s32.totalorder %s24, 0
      %p175 = por %p173, %p174
      %p176 = scmp.ne.s32.totalorder %s168, %s170
      %p177 = scmp.eq.s32.totalorder %s29, 1
      %p178 = por %p176, %p177
      %p179 = scmp.ne.s32.totalorder %s170, %s171
      %p180 = scmp.eq.s32.totalorder %s29, 0
      %p181 = por %p179, %p180
      %p182 = scmp.ne.s32.totalorder %s170, %s171
      %p183 = scmp.eq.s32.totalorder %s30, 1
      %p184 = por %p182, %p183
      %p186 = scmp.ne.s32.totalorder %s171, %s185
      %p187 = scmp.eq.s32.totalorder %s30, 0
      %p188 = por %p186, %p187
      %s190 = sadd.s32 %s189, 1
      %p193 = scmp.eq.s32.totalorder %s24, 1
      %p194 = scmp.ne.s32.totalorder %s189, %s191
      %p195 = scmp.eq.s32.totalorder %s24, 0
      %p196 = por %p194, %p195
      %p197 = scmp.ne.s32.totalorder %s189, %s191
      %p198 = scmp.eq.s32.totalorder %s29, 1
      %p199 = por %p197, %p198
      %p200 = scmp.ne.s32.totalorder %s191, %s192
      %p201 = scmp.eq.s32.totalorder %s29, 0
      %p202 = por %p200, %p201
      %p203 = scmp.ne.s32.totalorder %s191, %s192
      %p204 = scmp.eq.s32.totalorder %s30, 1
      %p205 = por %p203, %p204
      %p207 = scmp.ne.s32.totalorder %s192, %s206
      %p208 = scmp.eq.s32.totalorder %s30, 0
      %p209 = por %p207, %p208
      %s211 = sadd.s32 %s210, 1
      %p214 = scmp.eq.s32.totalorder %s24, 1
      %p215 = scmp.ne.s32.totalorder %s210, %s212
      %p216 = scmp.eq.s32.totalorder %s24, 0
      %p217 = por %p215, %p216
      %p218 = scmp.ne.s32.totalorder %s210, %s212
      %p219 = scmp.eq.s32.totalorder %s29, 1
      %p220 = por %p218, %p219
      %p221 = scmp.ne.s32.totalorder %s212, %s213
      %p222 = scmp.eq.s32.totalorder %s29, 0
      %p223 = por %p221, %p222
      %p224 = scmp.ne.s32.totalorder %s212, %s213
      %p225 = scmp.eq.s32.totalorder %s30, 1
      %p226 = por %p224, %p225
      %p228 = scmp.ne.s32.totalorder %s213, %s227
      %p229 = scmp.eq.s32.totalorder %s30, 0
      %p230 = por %p228, %p229
      %s232 = sadd.s32 %s231, 1
      %p235 = scmp.eq.s32.totalorder %s24, 1
      %p236 = scmp.ne.s32.totalorder %s231, %s233
      %p237 = scmp.eq.s32.totalorder %s24, 0
      %p238 = por %p236, %p237
      %p239 = scmp.ne.s32.totalorder %s231, %s233
      %p240 = scmp.eq.s32.totalorder %s29, 1
      %p241 = por %p239, %p240
      %p242 = scmp.ne.s32.totalorder %s233, %s234
      %p243 = scmp.eq.s32.totalorder %s29, 0
      %p244 = por %p242, %p243
      %p245 = scmp.ne.s32.totalorder %s233, %s234
      %p246 = scmp.eq.s32.totalorder %s30, 1
      %p247 = por %p245, %p246
      %p249 = scmp.ne.s32.totalorder %s234, %s248
      %p250 = scmp.eq.s32.totalorder %s30, 0
      %p251 = por %p249, %p250
      %s253 = sadd.s32 %s252, 1
      %p256 = scmp.eq.s32.totalorder %s24, 1
      %p257 = scmp.ne.s32.totalorder %s252, %s254
      %p258 = scmp.eq.s32.totalorder %s24, 0
      %p259 = por %p257, %p258
      %p260 = scmp.ne.s32.totalorder %s252, %s254
      %p261 = scmp.eq.s32.totalorder %s29, 1
      %p262 = por %p260, %p261
      %p263 = scmp.ne.s32.totalorder %s254, %s255
      %p264 = scmp.eq.s32.totalorder %s29, 0
      %p265 = por %p263, %p264
      %p266 = scmp.ne.s32.totalorder %s254, %s255
      %p267 = scmp.eq.s32.totalorder %s30, 1
      %p268 = por %p266, %p267
      %p270 = scmp.ne.s32.totalorder %s255, %s269
      %p271 = scmp.eq.s32.totalorder %s30, 0
      %p272 = por %p270, %p271
      %s273 = ssub.s32 %s24, %s31
      %p274 = scmp.eq.s32.totalorder %s273, 0
      %s276 = sadd.s32 %s275, 1
      %s277 = scalar_select %p274, %s275, %s276
      %p280 = pneg %p274
      %p281 = scmp.eq.s32.totalorder %s24, 1
      %p282 = por %p280, %p281
      %p283 = scmp.ne.s32.totalorder %s275, %s278
      %p284 = scmp.eq.s32.totalorder %s24, 0
      %p285 = por %p283, %p284
      %p286 = scmp.ne.s32.totalorder %s275, %s278
      %p287 = scmp.eq.s32.totalorder %s29, 1
      %p288 = por %p286, %p287
      %p289 = scmp.ne.s32.totalorder %s278, %s279
      %p290 = scmp.eq.s32.totalorder %s29, 0
      %p291 = por %p289, %p290
      %p292 = scmp.ne.s32.totalorder %s278, %s279
      %p293 = scmp.eq.s32.totalorder %s30, 1
      %p294 = por %p292, %p293
      %p296 = scmp.ne.s32.totalorder %s279, %s295
      %p297 = scmp.eq.s32.totalorder %s30, 0
      %p298 = por %p296, %p297
      %p299 = scmp.le.s32.totalorder 1, %s24
      %p300 = scmp.lt.s32.totalorder %s24, 3
      %p301 = pnand %p299, %p300
      %p302 = pneg %p301
      // Predicated region
      $region9: #{critic_forward.1} parent=5 // pred_check
        _
      $region10: #{critic_forward.1} parent=5 // pred_check_branch
        %304 = sbr.rel (%p301) target = $region12
      $region11: #{critic_forward.1} parent=5 // pred_region
        %s305 = ssub.s32 %s24, 1
        // Predicated region
        $region13: #{critic_forward.1} parent=11 // pred_check
          %p306 = pneg %p97
        $region14: #{critic_forward.1} parent=11 // pred_check_branch
          %308 = sbr.rel (%p306) target = $region16
        $region15: #{critic_forward.1} parent=11 // pred_region
          _
        $region16: #{critic_forward.1} parent=11 // pred_fallthru
          _
        // Predicated region
        $region17: #{critic_forward.1} parent=11 // pred_check
          %p309 = pneg %p118
        $region18: #{critic_forward.1} parent=11 // pred_check_branch
          %311 = sbr.rel (%p309) target = $region20
        $region19: #{critic_forward.1} parent=11 // pred_region
          _
        $region20: #{critic_forward.1} parent=11 // pred_fallthru
          _
        // Predicated region
        $region21: #{critic_forward.1} parent=11 // pred_check
          %p312 = pneg %p139
        $region22: #{critic_forward.1} parent=11 // pred_check_branch
          %314 = sbr.rel (%p312) target = $region24
        $region23: #{critic_forward.1} parent=11 // pred_region
          %316 = vsyncadd [#allocation4], 0
          %s317 = sshll.u32 %s4, 4
          %s318 = int_to_ptr.hbm [resolvable:$true] %s317
          %s319 = sshll.u32 [#allocation3], 4
          %s320 = int_to_ptr.vmem [resolvable:$true] %s319
          %325 = dma.hbm_to_vmem [thread:$0]  %s318, 32768, %s320, [#allocation4], 256, 256, 16
        $region24: #{critic_forward.1} parent=11 // pred_fallthru
          _
        // Predicated region
        $region25: #{critic_forward.1} parent=11 // pred_check
          %p326 = pneg %p160
        $region26: #{critic_forward.1} parent=11 // pred_check_branch
          %328 = sbr.rel (%p326) target = $region28
        $region27: #{critic_forward.1} parent=11 // pred_region
          _
        $region28: #{critic_forward.1} parent=11 // pred_fallthru
          _
        // Predicated region
        $region29: #{critic_forward.1} parent=11 // pred_check
          %p329 = pneg %p181
        $region30: #{critic_forward.1} parent=11 // pred_check_branch
          %331 = sbr.rel (%p329) target = $region32
        $region31: #{critic_forward.1} parent=11 // pred_region
          _
        $region32: #{critic_forward.1} parent=11 // pred_fallthru
          _
        // Predicated region
        $region33: #{critic_forward.1} parent=11 // pred_check
          %p332 = pneg %p202
        $region34: #{critic_forward.1} parent=11 // pred_check_branch
          %334 = sbr.rel (%p332) target = $region36
        $region35: #{critic_forward.1} parent=11 // pred_region
          %336 = vsyncadd [#allocation7], 0
          %s337 = sshll.u32 %s7, 4
          %s338 = int_to_ptr.hbm [resolvable:$true] %s337
          %s339 = sshll.u32 [#allocation6], 4
          %s340 = int_to_ptr.vmem [resolvable:$true] %s339
          %345 = dma.hbm_to_vmem [thread:$0]  %s338, 12288, %s340, [#allocation7], 192, 192, 12
        $region36: #{critic_forward.1} parent=11 // pred_fallthru
          _
        // Predicated region
        $region37: #{critic_forward.1} parent=11 // pred_check
          %p346 = pneg %p223
        $region38: #{critic_forward.1} parent=11 // pred_check_branch
          %348 = sbr.rel (%p346) target = $region40
        $region39: #{critic_forward.1} parent=11 // pred_region
          _
        $region40: #{critic_forward.1} parent=11 // pred_fallthru
          _
        // Predicated region
        $region41: #{critic_forward.1} parent=11 // pred_check
          %p349 = pneg %p244
        $region42: #{critic_forward.1} parent=11 // pred_check_branch
          %351 = sbr.rel (%p349) target = $region44
        $region43: #{critic_forward.1} parent=11 // pred_region
          _
        $region44: #{critic_forward.1} parent=11 // pred_fallthru
          _
        // Predicated region
        $region45: #{critic_forward.1} parent=11 // pred_check
          %p352 = pneg %p265
        $region46: #{critic_forward.1} parent=11 // pred_check_branch
          %354 = sbr.rel (%p352) target = $region48
        $region47: #{critic_forward.1} parent=11 // pred_region
          _
        $region48: #{critic_forward.1} parent=11 // pred_fallthru
          _
      $region12: #{critic_forward.1} parent=5 // pred_fallthru
        _
      %p355 = scmp.lt.s32.totalorder %s24, 2
      // Predicated region
      $region49: #{critic_forward.1} parent=5 // pred_check
        %p356 = pneg %p355
      $region50: #{critic_forward.1} parent=5 // pred_check_branch
        %358 = sbr.rel (%p356) target = $region52
      $region51: #{critic_forward.1} parent=5 // pred_region
        // Predicated region
        $region53: #{critic_forward.1} parent=51 // pred_check
          %p359 = pneg %p44
        $region54: #{critic_forward.1} parent=51 // pred_check_branch
          %361 = sbr.rel (%p359) target = $region56
        $region55: #{critic_forward.1} parent=51 // pred_region
          %s362 = smul.u32 16, %s24
          %p363 = scmp.lt.s32.totalorder %s362, 31
          %s364 = scalar_select %p363, %s362, 31
          %s365 = smul.addr %s364, 4
          %s366 = scalar_lea.vmem %s0, %s365
          %s367 = smul.u32 16, %s24
        $region56: #{critic_forward.1} parent=51 // pred_fallthru
          _
        // Predicated region
        $region57: #{critic_forward.1} parent=51 // pred_check
          %p368 = pneg %p70
        $region58: #{critic_forward.1} parent=51 // pred_check_branch
          %370 = sbr.rel (%p368) target = $region60
        $region59: #{critic_forward.1} parent=51 // pred_region
          %s371 = smul.u32 16, %s24
          %p372 = scmp.lt.s32.totalorder %s371, 31
          %s373 = scalar_select %p372, %s371, 31
          %s374 = smul.addr %s373, 4
          %s375 = scalar_lea.vmem %s1, %s374
          %s376 = smul.u32 16, %s24
        $region60: #{critic_forward.1} parent=51 // pred_fallthru
          _
      $region52: #{critic_forward.1} parent=5 // pred_fallthru
        _
      %p377 = scmp.le.s32.totalorder 1, %s24
      %p378 = scmp.lt.s32.totalorder %s24, 3
      %p379 = pnand %p377, %p378
      %p380 = pneg %p379
      // Predicated region
      $region61: #{critic_forward.1} parent=5 // pred_check
        _
      $region62: #{critic_forward.1} parent=5 // pred_check_branch
        %382 = sbr.rel (%p379) target = $region64
      $region63: #{critic_forward.1} parent=5 // pred_region
        %s383 = ssub.s32 %s24, 1
        // Predicated region
        $region65: #{critic_forward.1} parent=63 // pred_check
          %p384 = pneg %p139
        $region66: #{critic_forward.1} parent=63 // pred_check_branch
          %386 = sbr.rel (%p384) target = $region68
        $region67: #{critic_forward.1} parent=63 // pred_region
          %388 = dma.done [#allocation4], 32768
        $region68: #{critic_forward.1} parent=63 // pred_fallthru
          _
        // Predicated region
        $region69: #{critic_forward.1} parent=63 // pred_check
          %p389 = pneg %p202
        $region70: #{critic_forward.1} parent=63 // pred_check_branch
          %391 = sbr.rel (%p389) target = $region72
        $region71: #{critic_forward.1} parent=63 // pred_region
          %393 = dma.done [#allocation7], 12288
        $region72: #{critic_forward.1} parent=63 // pred_fallthru
          _
        %s394 = smul.u32 16, %s29
        %p395 = scmp.lt.s32.totalorder %s394, 31
        %s396 = scalar_select %p395, %s394, 31
        %s397 = smul.addr %s396, 4
        %s398 = scalar_lea.vmem %s0, %s397
        %p399 = pneg %p50
        %p400 = pneg %p47
        %s401 = smul.u32 16, %s29
        %p402 = scmp.lt.s32.totalorder %s401, 31
        %s403 = scalar_select %p402, %s401, 31
        %s404 = smul.addr %s403, 4
        %s405 = scalar_lea.vmem %s1, %s404
        %p406 = pneg %p76
        %p407 = pneg %p73
        %p408 = pneg %p97
        %p409 = pneg %p94
        %p410 = pneg %p118
        %p411 = pneg %p115
        %p412 = pneg %p139
        %p413 = pneg %p136
        %p414 = pneg %p160
        %p415 = pneg %p157
        %p416 = pneg %p181
        %p417 = pneg %p178
        %p418 = pneg %p202
        %p419 = pneg %p199
        %p420 = pneg %p223
        %p421 = pneg %p220
        %p422 = pneg %p244
        %p423 = pneg %p241
        %p424 = pneg %p265
        %p425 = pneg %p262
        %p426 = pneg %p291
        %p427 = pneg %p288
        %s428 = sand.u32 %s278, 1
        %s429 = scalar_lea.sflag [#allocation5], %s428
        %s430 = sand.u32 %s278, 1
        %s431 = scalar_lea.vmem [#allocation8], %s430
        %s432 = smul.u32 16, %s29
        %p433 = scmp.lt.s32.totalorder %s432, 31
        %s434 = scalar_select %p433, %s432, 31
        %s435 = smul.addr %s434, 4
        %s436 = scalar_lea.vmem %s0, %s435
        %s437 = smul.u32 16, %s29
        %s438 = smul.u32 16, %s29
        %p439 = scmp.lt.s32.totalorder %s438, 31
        %s440 = scalar_select %p439, %s438, 31
        %s441 = smul.addr %s440, 4
        %s442 = scalar_lea.vmem %s1, %s441
        %s443 = smul.u32 16, %s29
        %v445 = vld [vmem:[%s436] sm:$0xf]
        %v446 = vld [vmem:[%s436 + $0x4] sm:$0xf]
        %v447 = vld [vmem:[%s436 + $0x8] sm:$0xf]
        %v448 = vld [vmem:[%s436 + $0xc] sm:$0xf]
        %v449 = vld [vmem:[%s436 + $0x10] sm:$0xf]
        %v450 = vld [vmem:[%s436 + $0x14] sm:$0xf]
        %v451 = vld [vmem:[%s436 + $0x18] sm:$0xf]
        %v452 = vld [vmem:[%s436 + $0x1c] sm:$0xf]
        %v453 = vld [vmem:[%s436 + $0x20] sm:$0xf]
        %v454 = vld [vmem:[%s436 + $0x24] sm:$0xf]
        %v455 = vld [vmem:[%s436 + $0x28] sm:$0xf]
        %v456 = vld [vmem:[%s436 + $0x2c] sm:$0xf]
        %v457 = vld [vmem:[%s436 + $0x30] sm:$0xf]
        %v458 = vld [vmem:[%s436 + $0x34] sm:$0xf]
        %v459 = vld [vmem:[%s436 + $0x38] sm:$0xf]
        %v460 = vld [vmem:[%s436 + $0x3c] sm:$0xf]
        %v461 = vld [vmem:[%s442] sm:$0xf]
        %v462 = vld [vmem:[%s442 + $0x4] sm:$0xf]
        %v463 = vld [vmem:[%s442 + $0x8] sm:$0xf]
        %v464 = vld [vmem:[%s442 + $0xc] sm:$0xf]
        %v465 = vld [vmem:[%s442 + $0x10] sm:$0xf]
        %v466 = vld [vmem:[%s442 + $0x14] sm:$0xf]
        %v467 = vld [vmem:[%s442 + $0x18] sm:$0xf]
        %v468 = vld [vmem:[%s442 + $0x1c] sm:$0xf]
        %v469 = vld [vmem:[%s442 + $0x20] sm:$0xf]
        %v470 = vld [vmem:[%s442 + $0x24] sm:$0xf]
        %v471 = vld [vmem:[%s442 + $0x28] sm:$0xf]
        %v472 = vld [vmem:[%s442 + $0x2c] sm:$0xf]
        %v473 = vld [vmem:[%s442 + $0x30] sm:$0xf]
        %v474 = vld [vmem:[%s442 + $0x34] sm:$0xf]
        %v475 = vld [vmem:[%s442 + $0x38] sm:$0xf]
        %v476 = vld [vmem:[%s442 + $0x3c] sm:$0xf]
        %v477 = vld [vmem:[%s2] sm:$0xff]
        %v478 = vld [vmem:[%s2 + $0x8] sm:$0xff]
        %v479 = vld [vmem:[%s2 + $0x10] sm:$0xff]
        %v480 = vld [vmem:[%s2 + $0x18] sm:$0xff]
        %v481 = vld [vmem:[%s2 + $0x20] sm:$0xff]
        %v482 = vld [vmem:[%s2 + $0x28] sm:$0xff]
        %v483 = vld [vmem:[%s2 + $0x30] sm:$0xff]
        %v484 = vld [vmem:[%s2 + $0x38] sm:$0xff]
        %v485 = vld [vmem:[%s2 + $0x40] sm:$0xff]
        %v486 = vld [vmem:[%s2 + $0x48] sm:$0xff]
        %v487 = vld [vmem:[%s2 + $0x50] sm:$0xff]
        %v488 = vld [vmem:[%s2 + $0x58] sm:$0xff]
        %v489 = vld [vmem:[%s2 + $0x60] sm:$0xff]
        %v490 = vld [vmem:[%s2 + $0x68] sm:$0xff]
        %v491 = vld [vmem:[%s2 + $0x70] sm:$0xff]
        %v492 = vld [vmem:[%s2 + $0x78] sm:$0xff]
        %v493 = vld [vmem:[%s3] sm:$0xff]
        %v495 = vperm.slane %v493, 0
        %v496 = vperm.slane %v493, 1
        %v497 = vperm.slane %v493, 2
        %v498 = vperm.slane %v493, 3
        %v499 = vperm.slane %v493, 4
        %v500 = vperm.slane %v493, 5
        %v501 = vperm.slane %v493, 6
        %v502 = vperm.slane %v493, 7
        %v527 = vunpack.c.l.b16 %v445
        %v528 = vunpack.c.l.b16 %v446
        %v529 = vunpack.c.l.b16 %v447
        %v530 = vunpack.c.l.b16 %v448
        %v531 = vunpack.c.l.b16 %v449
        %v532 = vunpack.c.l.b16 %v450
        %v533 = vunpack.c.l.b16 %v451
        %v534 = vunpack.c.l.b16 %v452
        %v535 = vunpack.c.l.b16 %v453
        %v536 = vunpack.c.l.b16 %v454
        %v537 = vunpack.c.l.b16 %v455
        %v538 = vunpack.c.l.b16 %v456
        %v539 = vunpack.c.l.b16 %v457
        %v540 = vunpack.c.l.b16 %v458
        %v541 = vunpack.c.l.b16 %v459
        %v542 = vunpack.c.l.b16 %v460
        %v543 = vpack.c.b16 %v528, %v527
        %v544 = vpack.c.b16 %v530, %v529
        %v545 = vpack.c.b16 %v532, %v531
        %v546 = vpack.c.b16 %v534, %v533
        %v547 = vpack.c.b16 %v536, %v535
        %v548 = vpack.c.b16 %v538, %v537
        %v549 = vpack.c.b16 %v540, %v539
        %v550 = vpack.c.b16 %v542, %v541
        %v567 = vunpack.c.l.b16 %v477
        %v568 = vunpack.c.h.b16 %v477
        %v569 = vunpack.c.l.b16 %v478
        %v570 = vunpack.c.h.b16 %v478
        %v571 = vunpack.c.l.b16 %v479
        %v572 = vunpack.c.h.b16 %v479
        %v573 = vunpack.c.l.b16 %v480
        %v574 = vunpack.c.h.b16 %v480
        %v575 = vunpack.c.l.b16 %v481
        %v576 = vunpack.c.h.b16 %v481
        %v577 = vunpack.c.l.b16 %v482
        %v578 = vunpack.c.h.b16 %v482
        %v579 = vunpack.c.l.b16 %v483
        %v580 = vunpack.c.h.b16 %v483
        %v581 = vunpack.c.l.b16 %v484
        %v582 = vunpack.c.h.b16 %v484
        %v583 = vunpack.c.l.b16 %v485
        %v584 = vunpack.c.h.b16 %v485
        %v585 = vunpack.c.l.b16 %v486
        %v586 = vunpack.c.h.b16 %v486
        %v587 = vunpack.c.l.b16 %v487
        %v588 = vunpack.c.h.b16 %v487
        %v589 = vunpack.c.l.b16 %v488
        %v590 = vunpack.c.h.b16 %v488
        %v591 = vunpack.c.l.b16 %v489
        %v592 = vunpack.c.h.b16 %v489
        %v593 = vunpack.c.l.b16 %v490
        %v594 = vunpack.c.h.b16 %v490
        %v595 = vunpack.c.l.b16 %v491
        %v596 = vunpack.c.h.b16 %v491
        %v597 = vunpack.c.l.b16 %v492
        %v598 = vunpack.c.h.b16 %v492
        %v599 = vpack.c.b16 %v575, %v567
        %v600 = vpack.c.b16 %v576, %v568
        %v601 = vpack.c.b16 %v577, %v569
        %v602 = vpack.c.b16 %v578, %v570
        %v603 = vpack.c.b16 %v579, %v571
        %v604 = vpack.c.b16 %v580, %v572
        %v605 = vpack.c.b16 %v581, %v573
        %v606 = vpack.c.b16 %v582, %v574
        %v607 = vpack.c.b16 %v591, %v583
        %v608 = vpack.c.b16 %v592, %v584
        %v609 = vpack.c.b16 %v593, %v585
        %v610 = vpack.c.b16 %v594, %v586
        %v611 = vpack.c.b16 %v595, %v587
        %v612 = vpack.c.b16 %v596, %v588
        %v613 = vpack.c.b16 %v597, %v589
        %v614 = vpack.c.b16 %v598, %v590
        %vm631 = vcmask 261120
        %v633 = vsel %vm631, %v543, 0
        %v636 = vsel %vm631, %v544, 0
        %v639 = vsel %vm631, %v545, 0
        %v642 = vsel %vm631, %v546, 0
        %v645 = vsel %vm631, %v547, 0
        %v648 = vsel %vm631, %v548, 0
        %v651 = vsel %vm631, %v549, 0
        %v654 = vsel %vm631, %v550, 0
        %656 = vmatpush.bf16.msra.mxu0 0
        %657 = vmatpush.bf16.msra.mxu0 0
        %658 = vmatpush.bf16.msra.mxu0 0
        %659 = vmatpush.bf16.msra.mxu0 0
        %660 = vmatpush.bf16.msra.mxu0 0
        %661 = vmatpush.bf16.msra.mxu0 0
        %662 = vmatpush.bf16.msra.mxu0 %v607
        %663 = vmatpush.bf16.msra.mxu0 %v599
        %664 = vmatmul.bf16.gmra.mxu0 %v633
        %v665 = vpop.f32.mrf.mxu0
        %v666 = vadd.f32 %v495, %v665
        %v667 = vpop.f32.mrf.mxu0
        %v668 = vadd.f32 %v495, %v667
        %669 = vmatmul.bf16.gmra.mxu0 %v636
        %v670 = vpop.f32.mrf.mxu0
        %v671 = vadd.f32 %v495, %v670
        %v672 = vpop.f32.mrf.mxu0
        %v673 = vadd.f32 %v495, %v672
        %674 = vmatmul.bf16.gmra.mxu0 %v639
        %v675 = vpop.f32.mrf.mxu0
        %v676 = vadd.f32 %v495, %v675
        %v677 = vpop.f32.mrf.mxu0
        %v678 = vadd.f32 %v495, %v677
        %679 = vmatmul.bf16.gmra.mxu0 %v642
        %v680 = vpop.f32.mrf.mxu0
        %v681 = vadd.f32 %v495, %v680
        %v682 = vpop.f32.mrf.mxu0
        %v683 = vadd.f32 %v495, %v682
        %684 = vmatmul.bf16.gmra.mxu0 %v645
        %v685 = vpop.f32.mrf.mxu0
        %v686 = vadd.f32 %v495, %v685
        %v687 = vpop.f32.mrf.mxu0
        %v688 = vadd.f32 %v495, %v687
        %689 = vmatmul.bf16.gmra.mxu0 %v648
        %v690 = vpop.f32.mrf.mxu0
        %v691 = vadd.f32 %v495, %v690
        %v692 = vpop.f32.mrf.mxu0
        %v693 = vadd.f32 %v495, %v692
        %694 = vmatmul.bf16.gmra.mxu0 %v651
        %v695 = vpop.f32.mrf.mxu0
        %v696 = vadd.f32 %v495, %v695
        %v697 = vpop.f32.mrf.mxu0
        %v698 = vadd.f32 %v495, %v697
        %699 = vmatmul.bf16.gmra.mxu0 %v654
        %v700 = vpop.f32.mrf.mxu0
        %v701 = vadd.f32 %v495, %v700
        %v702 = vpop.f32.mrf.mxu0
        %v703 = vadd.f32 %v495, %v702
        %704 = vdwg.mxu0
        %705 = vmatpush.bf16.msra.mxu0 0
        %706 = vmatpush.bf16.msra.mxu0 0
        %707 = vmatpush.bf16.msra.mxu0 0
        %708 = vmatpush.bf16.msra.mxu0 0
        %709 = vmatpush.bf16.msra.mxu0 0
        %710 = vmatpush.bf16.msra.mxu0 0
        %711 = vmatpush.bf16.msra.mxu0 %v608
        %712 = vmatpush.bf16.msra.mxu0 %v600
        %713 = vmatmul.bf16.gmra.mxu0 %v633
        %v714 = vpop.f32.mrf.mxu0
        %v715 = vadd.f32 %v496, %v714
        %v716 = vpop.f32.mrf.mxu0
        %v717 = vadd.f32 %v496, %v716
        %718 = vmatmul.bf16.gmra.mxu0 %v636
        %v719 = vpop.f32.mrf.mxu0
        %v720 = vadd.f32 %v496, %v719
        %v721 = vpop.f32.mrf.mxu0
        %v722 = vadd.f32 %v496, %v721
        %723 = vmatmul.bf16.gmra.mxu0 %v639
        %v724 = vpop.f32.mrf.mxu0
        %v725 = vadd.f32 %v496, %v724
        %v726 = vpop.f32.mrf.mxu0
        %v727 = vadd.f32 %v496, %v726
        %728 = vmatmul.bf16.gmra.mxu0 %v642
        %v729 = vpop.f32.mrf.mxu0
        %v730 = vadd.f32 %v496, %v729
        %v731 = vpop.f32.mrf.mxu0
        %v732 = vadd.f32 %v496, %v731
        %733 = vmatmul.bf16.gmra.mxu0 %v645
        %v734 = vpop.f32.mrf.mxu0
        %v735 = vadd.f32 %v496, %v734
        %v736 = vpop.f32.mrf.mxu0
        %v737 = vadd.f32 %v496, %v736
        %738 = vmatmul.bf16.gmra.mxu0 %v648
        %v739 = vpop.f32.mrf.mxu0
        %v740 = vadd.f32 %v496, %v739
        %v741 = vpop.f32.mrf.mxu0
        %v742 = vadd.f32 %v496, %v741
        %743 = vmatmul.bf16.gmra.mxu0 %v651
        %v744 = vpop.f32.mrf.mxu0
        %v745 = vadd.f32 %v496, %v744
        %v746 = vpop.f32.mrf.mxu0
        %v747 = vadd.f32 %v496, %v746
        %748 = vmatmul.bf16.gmra.mxu0 %v654
        %v749 = vpop.f32.mrf.mxu0
        %v750 = vadd.f32 %v496, %v749
        %v751 = vpop.f32.mrf.mxu0
        %v752 = vadd.f32 %v496, %v751
        %753 = vdwg.mxu0
        %754 = vmatpush.bf16.msra.mxu0 0
        %755 = vmatpush.bf16.msra.mxu0 0
        %756 = vmatpush.bf16.msra.mxu0 0
        %757 = vmatpush.bf16.msra.mxu0 0
        %758 = vmatpush.bf16.msra.mxu0 0
        %759 = vmatpush.bf16.msra.mxu0 0
        %760 = vmatpush.bf16.msra.mxu0 %v609
        %761 = vmatpush.bf16.msra.mxu0 %v601
        %762 = vmatmul.bf16.gmra.mxu0 %v633
        %v763 = vpop.f32.mrf.mxu0
        %v764 = vadd.f32 %v497, %v763
        %v765 = vpop.f32.mrf.mxu0
        %v766 = vadd.f32 %v497, %v765
        %767 = vmatmul.bf16.gmra.mxu0 %v636
        %v768 = vpop.f32.mrf.mxu0
        %v769 = vadd.f32 %v497, %v768
        %v770 = vpop.f32.mrf.mxu0
        %v771 = vadd.f32 %v497, %v770
        %772 = vmatmul.bf16.gmra.mxu0 %v639
        %v773 = vpop.f32.mrf.mxu0
        %v774 = vadd.f32 %v497, %v773
        %v775 = vpop.f32.mrf.mxu0
        %v776 = vadd.f32 %v497, %v775
        %777 = vmatmul.bf16.gmra.mxu0 %v642
        %v778 = vpop.f32.mrf.mxu0
        %v779 = vadd.f32 %v497, %v778
        %v780 = vpop.f32.mrf.mxu0
        %v781 = vadd.f32 %v497, %v780
        %782 = vmatmul.bf16.gmra.mxu0 %v645
        %v783 = vpop.f32.mrf.mxu0
        %v784 = vadd.f32 %v497, %v783
        %v785 = vpop.f32.mrf.mxu0
        %v786 = vadd.f32 %v497, %v785
        %787 = vmatmul.bf16.gmra.mxu0 %v648
        %v788 = vpop.f32.mrf.mxu0
        %v789 = vadd.f32 %v497, %v788
        %v790 = vpop.f32.mrf.mxu0
        %v791 = vadd.f32 %v497, %v790
        %792 = vmatmul.bf16.gmra.mxu0 %v651
        %v793 = vpop.f32.mrf.mxu0
        %v794 = vadd.f32 %v497, %v793
        %v795 = vpop.f32.mrf.mxu0
        %v796 = vadd.f32 %v497, %v795
        %797 = vmatmul.bf16.gmra.mxu0 %v654
        %v798 = vpop.f32.mrf.mxu0
        %v799 = vadd.f32 %v497, %v798
        %v800 = vpop.f32.mrf.mxu0
        %v801 = vadd.f32 %v497, %v800
        %802 = vdwg.mxu0
        %803 = vmatpush.bf16.msra.mxu0 0
        %804 = vmatpush.bf16.msra.mxu0 0
        %805 = vmatpush.bf16.msra.mxu0 0
        %806 = vmatpush.bf16.msra.mxu0 0
        %807 = vmatpush.bf16.msra.mxu0 0
        %808 = vmatpush.bf16.msra.mxu0 0
        %809 = vmatpush.bf16.msra.mxu0 %v610
        %810 = vmatpush.bf16.msra.mxu0 %v602
        %811 = vmatmul.bf16.gmra.mxu0 %v633
        %v812 = vpop.f32.mrf.mxu0
        %v813 = vadd.f32 %v498, %v812
        %v814 = vpop.f32.mrf.mxu0
        %v815 = vadd.f32 %v498, %v814
        %816 = vmatmul.bf16.gmra.mxu0 %v636
        %v817 = vpop.f32.mrf.mxu0
        %v818 = vadd.f32 %v498, %v817
        %v819 = vpop.f32.mrf.mxu0
        %v820 = vadd.f32 %v498, %v819
        %821 = vmatmul.bf16.gmra.mxu0 %v639
        %v822 = vpop.f32.mrf.mxu0
        %v823 = vadd.f32 %v498, %v822
        %v824 = vpop.f32.mrf.mxu0
        %v825 = vadd.f32 %v498, %v824
        %826 = vmatmul.bf16.gmra.mxu0 %v642
        %v827 = vpop.f32.mrf.mxu0
        %v828 = vadd.f32 %v498, %v827
        %v829 = vpop.f32.mrf.mxu0
        %v830 = vadd.f32 %v498, %v829
        %831 = vmatmul.bf16.gmra.mxu0 %v645
        %v832 = vpop.f32.mrf.mxu0
        %v833 = vadd.f32 %v498, %v832
        %v834 = vpop.f32.mrf.mxu0
        %v835 = vadd.f32 %v498, %v834
        %836 = vmatmul.bf16.gmra.mxu0 %v648
        %v837 = vpop.f32.mrf.mxu0
        %v838 = vadd.f32 %v498, %v837
        %v839 = vpop.f32.mrf.mxu0
        %v840 = vadd.f32 %v498, %v839
        %841 = vmatmul.bf16.gmra.mxu0 %v651
        %v842 = vpop.f32.mrf.mxu0
        %v843 = vadd.f32 %v498, %v842
        %v844 = vpop.f32.mrf.mxu0
        %v845 = vadd.f32 %v498, %v844
        %846 = vmatmul.bf16.gmra.mxu0 %v654
        %v847 = vpop.f32.mrf.mxu0
        %v848 = vadd.f32 %v498, %v847
        %v849 = vpop.f32.mrf.mxu0
        %v850 = vadd.f32 %v498, %v849
        %851 = vdwg.mxu0
        %852 = vmatpush.bf16.msra.mxu0 0
        %853 = vmatpush.bf16.msra.mxu0 0
        %854 = vmatpush.bf16.msra.mxu0 0
        %855 = vmatpush.bf16.msra.mxu0 0
        %856 = vmatpush.bf16.msra.mxu0 0
        %857 = vmatpush.bf16.msra.mxu0 0
        %858 = vmatpush.bf16.msra.mxu0 %v611
        %859 = vmatpush.bf16.msra.mxu0 %v603
        %860 = vmatmul.bf16.gmra.mxu0 %v633
        %v861 = vpop.f32.mrf.mxu0
        %v862 = vadd.f32 %v499, %v861
        %v863 = vpop.f32.mrf.mxu0
        %v864 = vadd.f32 %v499, %v863
        %865 = vmatmul.bf16.gmra.mxu0 %v636
        %v866 = vpop.f32.mrf.mxu0
        %v867 = vadd.f32 %v499, %v866
        %v868 = vpop.f32.mrf.mxu0
        %v869 = vadd.f32 %v499, %v868
        %870 = vmatmul.bf16.gmra.mxu0 %v639
        %v871 = vpop.f32.mrf.mxu0
        %v872 = vadd.f32 %v499, %v871
        %v873 = vpop.f32.mrf.mxu0
        %v874 = vadd.f32 %v499, %v873
        %875 = vmatmul.bf16.gmra.mxu0 %v642
        %v876 = vpop.f32.mrf.mxu0
        %v877 = vadd.f32 %v499, %v876
        %v878 = vpop.f32.mrf.mxu0
        %v879 = vadd.f32 %v499, %v878
        %880 = vmatmul.bf16.gmra.mxu0 %v645
        %v881 = vpop.f32.mrf.mxu0
        %v882 = vadd.f32 %v499, %v881
        %v883 = vpop.f32.mrf.mxu0
        %v884 = vadd.f32 %v499, %v883
        %885 = vmatmul.bf16.gmra.mxu0 %v648
        %v886 = vpop.f32.mrf.mxu0
        %v887 = vadd.f32 %v499, %v886
        %v888 = vpop.f32.mrf.mxu0
        %v889 = vadd.f32 %v499, %v888
        %890 = vmatmul.bf16.gmra.mxu0 %v651
        %v891 = vpop.f32.mrf.mxu0
        %v892 = vadd.f32 %v499, %v891
        %v893 = vpop.f32.mrf.mxu0
        %v894 = vadd.f32 %v499, %v893
        %895 = vmatmul.bf16.gmra.mxu0 %v654
        %v896 = vpop.f32.mrf.mxu0
        %v897 = vadd.f32 %v499, %v896
        %v898 = vpop.f32.mrf.mxu0
        %v899 = vadd.f32 %v499, %v898
        %900 = vdwg.mxu0
        %901 = vmatpush.bf16.msra.mxu0 0
        %902 = vmatpush.bf16.msra.mxu0 0
        %903 = vmatpush.bf16.msra.mxu0 0
        %904 = vmatpush.bf16.msra.mxu0 0
        %905 = vmatpush.bf16.msra.mxu0 0
        %906 = vmatpush.bf16.msra.mxu0 0
        %907 = vmatpush.bf16.msra.mxu0 %v612
        %908 = vmatpush.bf16.msra.mxu0 %v604
        %909 = vmatmul.bf16.gmra.mxu0 %v633
        %v910 = vpop.f32.mrf.mxu0
        %v911 = vadd.f32 %v500, %v910
        %v912 = vpop.f32.mrf.mxu0
        %v913 = vadd.f32 %v500, %v912
        %914 = vmatmul.bf16.gmra.mxu0 %v636
        %v915 = vpop.f32.mrf.mxu0
        %v916 = vadd.f32 %v500, %v915
        %v917 = vpop.f32.mrf.mxu0
        %v918 = vadd.f32 %v500, %v917
        %919 = vmatmul.bf16.gmra.mxu0 %v639
        %v920 = vpop.f32.mrf.mxu0
        %v921 = vadd.f32 %v500, %v920
        %v922 = vpop.f32.mrf.mxu0
        %v923 = vadd.f32 %v500, %v922
        %924 = vmatmul.bf16.gmra.mxu0 %v642
        %v925 = vpop.f32.mrf.mxu0
        %v926 = vadd.f32 %v500, %v925
        %v927 = vpop.f32.mrf.mxu0
        %v928 = vadd.f32 %v500, %v927
        %929 = vmatmul.bf16.gmra.mxu0 %v645
        %v930 = vpop.f32.mrf.mxu0
        %v931 = vadd.f32 %v500, %v930
        %v932 = vpop.f32.mrf.mxu0
        %v933 = vadd.f32 %v500, %v932
        %934 = vmatmul.bf16.gmra.mxu0 %v648
        %v935 = vpop.f32.mrf.mxu0
        %v936 = vadd.f32 %v500, %v935
        %v937 = vpop.f32.mrf.mxu0
        %v938 = vadd.f32 %v500, %v937
        %939 = vmatmul.bf16.gmra.mxu0 %v651
        %v940 = vpop.f32.mrf.mxu0
        %v941 = vadd.f32 %v500, %v940
        %v942 = vpop.f32.mrf.mxu0
        %v943 = vadd.f32 %v500, %v942
        %944 = vmatmul.bf16.gmra.mxu0 %v654
        %v945 = vpop.f32.mrf.mxu0
        %v946 = vadd.f32 %v500, %v945
        %v947 = vpop.f32.mrf.mxu0
        %v948 = vadd.f32 %v500, %v947
        %949 = vdwg.mxu0
        %950 = vmatpush.bf16.msra.mxu0 0
        %951 = vmatpush.bf16.msra.mxu0 0
        %952 = vmatpush.bf16.msra.mxu0 0
        %953 = vmatpush.bf16.msra.mxu0 0
        %954 = vmatpush.bf16.msra.mxu0 0
        %955 = vmatpush.bf16.msra.mxu0 0
        %956 = vmatpush.bf16.msra.mxu0 %v613
        %957 = vmatpush.bf16.msra.mxu0 %v605
        %958 = vmatmul.bf16.gmra.mxu0 %v633
        %v959 = vpop.f32.mrf.mxu0
        %v960 = vadd.f32 %v501, %v959
        %v961 = vpop.f32.mrf.mxu0
        %v962 = vadd.f32 %v501, %v961
        %963 = vmatmul.bf16.gmra.mxu0 %v636
        %v964 = vpop.f32.mrf.mxu0
        %v965 = vadd.f32 %v501, %v964
        %v966 = vpop.f32.mrf.mxu0
        %v967 = vadd.f32 %v501, %v966
        %968 = vmatmul.bf16.gmra.mxu0 %v639
        %v969 = vpop.f32.mrf.mxu0
        %v970 = vadd.f32 %v501, %v969
        %v971 = vpop.f32.mrf.mxu0
        %v972 = vadd.f32 %v501, %v971
        %973 = vmatmul.bf16.gmra.mxu0 %v642
        %v974 = vpop.f32.mrf.mxu0
        %v975 = vadd.f32 %v501, %v974
        %v976 = vpop.f32.mrf.mxu0
        %v977 = vadd.f32 %v501, %v976
        %978 = vmatmul.bf16.gmra.mxu0 %v645
        %v979 = vpop.f32.mrf.mxu0
        %v980 = vadd.f32 %v501, %v979
        %v981 = vpop.f32.mrf.mxu0
        %v982 = vadd.f32 %v501, %v981
        %983 = vmatmul.bf16.gmra.mxu0 %v648
        %v984 = vpop.f32.mrf.mxu0
        %v985 = vadd.f32 %v501, %v984
        %v986 = vpop.f32.mrf.mxu0
        %v987 = vadd.f32 %v501, %v986
        %988 = vmatmul.bf16.gmra.mxu0 %v651
        %v989 = vpop.f32.mrf.mxu0
        %v990 = vadd.f32 %v501, %v989
        %v991 = vpop.f32.mrf.mxu0
        %v992 = vadd.f32 %v501, %v991
        %993 = vmatmul.bf16.gmra.mxu0 %v654
        %v994 = vpop.f32.mrf.mxu0
        %v995 = vadd.f32 %v501, %v994
        %v996 = vpop.f32.mrf.mxu0
        %v997 = vadd.f32 %v501, %v996
        %998 = vdwg.mxu0
        %999 = vmatpush.bf16.msra.mxu0 0
        %1000 = vmatpush.bf16.msra.mxu0 0
        %1001 = vmatpush.bf16.msra.mxu0 0
        %1002 = vmatpush.bf16.msra.mxu0 0
        %1003 = vmatpush.bf16.msra.mxu0 0
        %1004 = vmatpush.bf16.msra.mxu0 0
        %1005 = vmatpush.bf16.msra.mxu0 %v614
        %1006 = vmatpush.bf16.msra.mxu0 %v606
        %1007 = vmatmul.bf16.gmra.mxu0 %v633
        %v1008 = vpop.f32.mrf.mxu0
        %v1009 = vadd.f32 %v502, %v1008
        %v1010 = vpop.f32.mrf.mxu0
        %v1011 = vadd.f32 %v502, %v1010
        %1012 = vmatmul.bf16.gmra.mxu0 %v636
        %v1013 = vpop.f32.mrf.mxu0
        %v1014 = vadd.f32 %v502, %v1013
        %v1015 = vpop.f32.mrf.mxu0
        %v1016 = vadd.f32 %v502, %v1015
        %1017 = vmatmul.bf16.gmra.mxu0 %v639
        %v1018 = vpop.f32.mrf.mxu0
        %v1019 = vadd.f32 %v502, %v1018
        %v1020 = vpop.f32.mrf.mxu0
        %v1021 = vadd.f32 %v502, %v1020
        %1022 = vmatmul.bf16.gmra.mxu0 %v642
        %v1023 = vpop.f32.mrf.mxu0
        %v1024 = vadd.f32 %v502, %v1023
        %v1025 = vpop.f32.mrf.mxu0
        %v1026 = vadd.f32 %v502, %v1025
        %1027 = vmatmul.bf16.gmra.mxu0 %v645
        %v1028 = vpop.f32.mrf.mxu0
        %v1029 = vadd.f32 %v502, %v1028
        %v1030 = vpop.f32.mrf.mxu0
        %v1031 = vadd.f32 %v502, %v1030
        %1032 = vmatmul.bf16.gmra.mxu0 %v648
        %v1033 = vpop.f32.mrf.mxu0
        %v1034 = vadd.f32 %v502, %v1033
        %v1035 = vpop.f32.mrf.mxu0
        %v1036 = vadd.f32 %v502, %v1035
        %1037 = vmatmul.bf16.gmra.mxu0 %v651
        %v1038 = vpop.f32.mrf.mxu0
        %v1039 = vadd.f32 %v502, %v1038
        %v1040 = vpop.f32.mrf.mxu0
        %v1041 = vadd.f32 %v502, %v1040
        %1042 = vmatmul.bf16.gmra.mxu0 %v654
        %v1043 = vpop.f32.mrf.mxu0
        %v1044 = vadd.f32 %v502, %v1043
        %v1045 = vpop.f32.mrf.mxu0
        %v1046 = vadd.f32 %v502, %v1045
        %1047 = vdwg.mxu0
        %v1048 = vmax.f32 %v666, 0.0
        %v1049 = vmax.f32 %v715, 0.0
        %v1050 = vmax.f32 %v764, 0.0
        %v1051 = vmax.f32 %v813, 0.0
        %v1052 = vmax.f32 %v862, 0.0
        %v1053 = vmax.f32 %v911, 0.0
        %v1054 = vmax.f32 %v960, 0.0
        %v1055 = vmax.f32 %v1009, 0.0
        %v1056 = vmax.f32 %v668, 0.0
        %v1057 = vmax.f32 %v717, 0.0
        %v1058 = vmax.f32 %v766, 0.0
        %v1059 = vmax.f32 %v815, 0.0
        %v1060 = vmax.f32 %v864, 0.0
        %v1061 = vmax.f32 %v913, 0.0
        %v1062 = vmax.f32 %v962, 0.0
        %v1063 = vmax.f32 %v1011, 0.0
        %v1064 = vmax.f32 %v671, 0.0
        %v1065 = vmax.f32 %v720, 0.0
        %v1066 = vmax.f32 %v769, 0.0
        %v1067 = vmax.f32 %v818, 0.0
        %v1068 = vmax.f32 %v867, 0.0
        %v1069 = vmax.f32 %v916, 0.0
        %v1070 = vmax.f32 %v965, 0.0
        %v1071 = vmax.f32 %v1014, 0.0
        %v1072 = vmax.f32 %v673, 0.0
        %v1073 = vmax.f32 %v722, 0.0
        %v1074 = vmax.f32 %v771, 0.0
        %v1075 = vmax.f32 %v820, 0.0
        %v1076 = vmax.f32 %v869, 0.0
        %v1077 = vmax.f32 %v918, 0.0
        %v1078 = vmax.f32 %v967, 0.0
        %v1079 = vmax.f32 %v1016, 0.0
        %v1080 = vmax.f32 %v676, 0.0
        %v1081 = vmax.f32 %v725, 0.0
        %v1082 = vmax.f32 %v774, 0.0
        %v1083 = vmax.f32 %v823, 0.0
        %v1084 = vmax.f32 %v872, 0.0
        %v1085 = vmax.f32 %v921, 0.0
        %v1086 = vmax.f32 %v970, 0.0
        %v1087 = vmax.f32 %v1019, 0.0
        %v1088 = vmax.f32 %v678, 0.0
        %v1089 = vmax.f32 %v727, 0.0
        %v1090 = vmax.f32 %v776, 0.0
        %v1091 = vmax.f32 %v825, 0.0
        %v1092 = vmax.f32 %v874, 0.0
        %v1093 = vmax.f32 %v923, 0.0
        %v1094 = vmax.f32 %v972, 0.0
        %v1095 = vmax.f32 %v1021, 0.0
        %v1096 = vmax.f32 %v681, 0.0
        %v1097 = vmax.f32 %v730, 0.0
        %v1098 = vmax.f32 %v779, 0.0
        %v1099 = vmax.f32 %v828, 0.0
        %v1100 = vmax.f32 %v877, 0.0
        %v1101 = vmax.f32 %v926, 0.0
        %v1102 = vmax.f32 %v975, 0.0
        %v1103 = vmax.f32 %v1024, 0.0
        %v1104 = vmax.f32 %v683, 0.0
        %v1105 = vmax.f32 %v732, 0.0
        %v1106 = vmax.f32 %v781, 0.0
        %v1107 = vmax.f32 %v830, 0.0
        %v1108 = vmax.f32 %v879, 0.0
        %v1109 = vmax.f32 %v928, 0.0
        %v1110 = vmax.f32 %v977, 0.0
        %v1111 = vmax.f32 %v1026, 0.0
        %v1112 = vmax.f32 %v686, 0.0
        %v1113 = vmax.f32 %v735, 0.0
        %v1114 = vmax.f32 %v784, 0.0
        %v1115 = vmax.f32 %v833, 0.0
        %v1116 = vmax.f32 %v882, 0.0
        %v1117 = vmax.f32 %v931, 0.0
        %v1118 = vmax.f32 %v980, 0.0
        %v1119 = vmax.f32 %v1029, 0.0
        %v1120 = vmax.f32 %v688, 0.0
        %v1121 = vmax.f32 %v737, 0.0
        %v1122 = vmax.f32 %v786, 0.0
        %v1123 = vmax.f32 %v835, 0.0
        %v1124 = vmax.f32 %v884, 0.0
        %v1125 = vmax.f32 %v933, 0.0
        %v1126 = vmax.f32 %v982, 0.0
        %v1127 = vmax.f32 %v1031, 0.0
        %v1128 = vmax.f32 %v691, 0.0
        %v1129 = vmax.f32 %v740, 0.0
        %v1130 = vmax.f32 %v789, 0.0
        %v1131 = vmax.f32 %v838, 0.0
        %v1132 = vmax.f32 %v887, 0.0
        %v1133 = vmax.f32 %v936, 0.0
        %v1134 = vmax.f32 %v985, 0.0
        %v1135 = vmax.f32 %v1034, 0.0
        %v1136 = vmax.f32 %v693, 0.0
        %v1137 = vmax.f32 %v742, 0.0
        %v1138 = vmax.f32 %v791, 0.0
        %v1139 = vmax.f32 %v840, 0.0
        %v1140 = vmax.f32 %v889, 0.0
        %v1141 = vmax.f32 %v938, 0.0
        %v1142 = vmax.f32 %v987, 0.0
        %v1143 = vmax.f32 %v1036, 0.0
        %v1144 = vmax.f32 %v696, 0.0
        %v1145 = vmax.f32 %v745, 0.0
        %v1146 = vmax.f32 %v794, 0.0
        %v1147 = vmax.f32 %v843, 0.0
        %v1148 = vmax.f32 %v892, 0.0
        %v1149 = vmax.f32 %v941, 0.0
        %v1150 = vmax.f32 %v990, 0.0
        %v1151 = vmax.f32 %v1039, 0.0
        %v1152 = vmax.f32 %v698, 0.0
        %v1153 = vmax.f32 %v747, 0.0
        %v1154 = vmax.f32 %v796, 0.0
        %v1155 = vmax.f32 %v845, 0.0
        %v1156 = vmax.f32 %v894, 0.0
        %v1157 = vmax.f32 %v943, 0.0
        %v1158 = vmax.f32 %v992, 0.0
        %v1159 = vmax.f32 %v1041, 0.0
        %v1160 = vmax.f32 %v701, 0.0
        %v1161 = vmax.f32 %v750, 0.0
        %v1162 = vmax.f32 %v799, 0.0
        %v1163 = vmax.f32 %v848, 0.0
        %v1164 = vmax.f32 %v897, 0.0
        %v1165 = vmax.f32 %v946, 0.0
        %v1166 = vmax.f32 %v995, 0.0
        %v1167 = vmax.f32 %v1044, 0.0
        %v1168 = vmax.f32 %v703, 0.0
        %v1169 = vmax.f32 %v752, 0.0
        %v1170 = vmax.f32 %v801, 0.0
        %v1171 = vmax.f32 %v850, 0.0
        %v1172 = vmax.f32 %v899, 0.0
        %v1173 = vmax.f32 %v948, 0.0
        %v1174 = vmax.f32 %v997, 0.0
        %v1175 = vmax.f32 %v1046, 0.0
        %v1176 = vpack.c.bf16 %v1056, %v1048
        %v1177 = vpack.c.bf16 %v1057, %v1049
        %v1178 = vpack.c.bf16 %v1058, %v1050
        %v1179 = vpack.c.bf16 %v1059, %v1051
        %v1180 = vpack.c.bf16 %v1060, %v1052
        %v1181 = vpack.c.bf16 %v1061, %v1053
        %v1182 = vpack.c.bf16 %v1062, %v1054
        %v1183 = vpack.c.bf16 %v1063, %v1055
        %v1184 = vpack.c.bf16 %v1072, %v1064
        %v1185 = vpack.c.bf16 %v1073, %v1065
        %v1186 = vpack.c.bf16 %v1074, %v1066
        %v1187 = vpack.c.bf16 %v1075, %v1067
        %v1188 = vpack.c.bf16 %v1076, %v1068
        %v1189 = vpack.c.bf16 %v1077, %v1069
        %v1190 = vpack.c.bf16 %v1078, %v1070
        %v1191 = vpack.c.bf16 %v1079, %v1071
        %v1192 = vpack.c.bf16 %v1088, %v1080
        %v1193 = vpack.c.bf16 %v1089, %v1081
        %v1194 = vpack.c.bf16 %v1090, %v1082
        %v1195 = vpack.c.bf16 %v1091, %v1083
        %v1196 = vpack.c.bf16 %v1092, %v1084
        %v1197 = vpack.c.bf16 %v1093, %v1085
        %v1198 = vpack.c.bf16 %v1094, %v1086
        %v1199 = vpack.c.bf16 %v1095, %v1087
        %v1200 = vpack.c.bf16 %v1104, %v1096
        %v1201 = vpack.c.bf16 %v1105, %v1097
        %v1202 = vpack.c.bf16 %v1106, %v1098
        %v1203 = vpack.c.bf16 %v1107, %v1099
        %v1204 = vpack.c.bf16 %v1108, %v1100
        %v1205 = vpack.c.bf16 %v1109, %v1101
        %v1206 = vpack.c.bf16 %v1110, %v1102
        %v1207 = vpack.c.bf16 %v1111, %v1103
        %v1208 = vpack.c.bf16 %v1120, %v1112
        %v1209 = vpack.c.bf16 %v1121, %v1113
        %v1210 = vpack.c.bf16 %v1122, %v1114
        %v1211 = vpack.c.bf16 %v1123, %v1115
        %v1212 = vpack.c.bf16 %v1124, %v1116
        %v1213 = vpack.c.bf16 %v1125, %v1117
        %v1214 = vpack.c.bf16 %v1126, %v1118
        %v1215 = vpack.c.bf16 %v1127, %v1119
        %v1216 = vpack.c.bf16 %v1136, %v1128
        %v1217 = vpack.c.bf16 %v1137, %v1129
        %v1218 = vpack.c.bf16 %v1138, %v1130
        %v1219 = vpack.c.bf16 %v1139, %v1131
        %v1220 = vpack.c.bf16 %v1140, %v1132
        %v1221 = vpack.c.bf16 %v1141, %v1133
        %v1222 = vpack.c.bf16 %v1142, %v1134
        %v1223 = vpack.c.bf16 %v1143, %v1135
        %v1224 = vpack.c.bf16 %v1152, %v1144
        %v1225 = vpack.c.bf16 %v1153, %v1145
        %v1226 = vpack.c.bf16 %v1154, %v1146
        %v1227 = vpack.c.bf16 %v1155, %v1147
        %v1228 = vpack.c.bf16 %v1156, %v1148
        %v1229 = vpack.c.bf16 %v1157, %v1149
        %v1230 = vpack.c.bf16 %v1158, %v1150
        %v1231 = vpack.c.bf16 %v1159, %v1151
        %v1232 = vpack.c.bf16 %v1168, %v1160
        %v1233 = vpack.c.bf16 %v1169, %v1161
        %v1234 = vpack.c.bf16 %v1170, %v1162
        %v1235 = vpack.c.bf16 %v1171, %v1163
        %v1236 = vpack.c.bf16 %v1172, %v1164
        %v1237 = vpack.c.bf16 %v1173, %v1165
        %v1238 = vpack.c.bf16 %v1174, %v1166
        %v1239 = vpack.c.bf16 %v1175, %v1167
        %v1240 = vld [vmem:[#allocation3] sm:$0xff]
        %v1241 = vld [vmem:[#allocation3 + $0x8] sm:$0xff]
        %v1242 = vld [vmem:[#allocation3 + $0x10] sm:$0xff]
        %v1243 = vld [vmem:[#allocation3 + $0x18] sm:$0xff]
        %v1244 = vld [vmem:[#allocation3 + $0x20] sm:$0xff]
        %v1245 = vld [vmem:[#allocation3 + $0x28] sm:$0xff]
        %v1246 = vld [vmem:[#allocation3 + $0x30] sm:$0xff]
        %v1247 = vld [vmem:[#allocation3 + $0x38] sm:$0xff]
        %v1248 = vld [vmem:[#allocation3 + $0x40] sm:$0xff]
        %v1249 = vld [vmem:[#allocation3 + $0x48] sm:$0xff]
        %v1250 = vld [vmem:[#allocation3 + $0x50] sm:$0xff]
        %v1251 = vld [vmem:[#allocation3 + $0x58] sm:$0xff]
        %v1252 = vld [vmem:[#allocation3 + $0x60] sm:$0xff]
        %v1253 = vld [vmem:[#allocation3 + $0x68] sm:$0xff]
        %v1254 = vld [vmem:[#allocation3 + $0x70] sm:$0xff]
        %v1255 = vld [vmem:[#allocation3 + $0x78] sm:$0xff]
        %v1256 = vld [vmem:[#allocation3 + $0x80] sm:$0xff]
        %v1257 = vld [vmem:[#allocation3 + $0x88] sm:$0xff]
        %v1258 = vld [vmem:[#allocation3 + $0x90] sm:$0xff]
        %v1259 = vld [vmem:[#allocation3 + $0x98] sm:$0xff]
        %v1260 = vld [vmem:[#allocation3 + $0xa0] sm:$0xff]
        %v1261 = vld [vmem:[#allocation3 + $0xa8] sm:$0xff]
        %v1262 = vld [vmem:[#allocation3 + $0xb0] sm:$0xff]
        %v1263 = vld [vmem:[#allocation3 + $0xb8] sm:$0xff]
        %v1264 = vld [vmem:[#allocation3 + $0xc0] sm:$0xff]
        %v1265 = vld [vmem:[#allocation3 + $0xc8] sm:$0xff]
        %v1266 = vld [vmem:[#allocation3 + $0xd0] sm:$0xff]
        %v1267 = vld [vmem:[#allocation3 + $0xd8] sm:$0xff]
        %v1268 = vld [vmem:[#allocation3 + $0xe0] sm:$0xff]
        %v1269 = vld [vmem:[#allocation3 + $0xe8] sm:$0xff]
        %v1270 = vld [vmem:[#allocation3 + $0xf0] sm:$0xff]
        %v1271 = vld [vmem:[#allocation3 + $0xf8] sm:$0xff]
        %v1272 = vld [vmem:[#allocation3 + $0x100] sm:$0xff]
        %v1273 = vld [vmem:[#allocation3 + $0x108] sm:$0xff]
        %v1274 = vld [vmem:[#allocation3 + $0x110] sm:$0xff]
        %v1275 = vld [vmem:[#allocation3 + $0x118] sm:$0xff]
        %v1276 = vld [vmem:[#allocation3 + $0x120] sm:$0xff]
        %v1277 = vld [vmem:[#allocation3 + $0x128] sm:$0xff]
        %v1278 = vld [vmem:[#allocation3 + $0x130] sm:$0xff]
        %v1279 = vld [vmem:[#allocation3 + $0x138] sm:$0xff]
        %v1280 = vld [vmem:[#allocation3 + $0x140] sm:$0xff]
        %v1281 = vld [vmem:[#allocation3 + $0x148] sm:$0xff]
        %v1282 = vld [vmem:[#allocation3 + $0x150] sm:$0xff]
        %v1283 = vld [vmem:[#allocation3 + $0x158] sm:$0xff]
        %v1284 = vld [vmem:[#allocation3 + $0x160] sm:$0xff]
        %v1285 = vld [vmem:[#allocation3 + $0x168] sm:$0xff]
        %v1286 = vld [vmem:[#allocation3 + $0x170] sm:$0xff]
        %v1287 = vld [vmem:[#allocation3 + $0x178] sm:$0xff]
        %v1288 = vld [vmem:[#allocation3 + $0x180] sm:$0xff]
        %v1289 = vld [vmem:[#allocation3 + $0x188] sm:$0xff]
        %v1290 = vld [vmem:[#allocation3 + $0x190] sm:$0xff]
        %v1291 = vld [vmem:[#allocation3 + $0x198] sm:$0xff]
        %v1292 = vld [vmem:[#allocation3 + $0x1a0] sm:$0xff]
        %v1293 = vld [vmem:[#allocation3 + $0x1a8] sm:$0xff]
        %v1294 = vld [vmem:[#allocation3 + $0x1b0] sm:$0xff]
        %v1295 = vld [vmem:[#allocation3 + $0x1b8] sm:$0xff]
        %v1296 = vld [vmem:[#allocation3 + $0x1c0] sm:$0xff]
        %v1297 = vld [vmem:[#allocation3 + $0x1c8] sm:$0xff]
        %v1298 = vld [vmem:[#allocation3 + $0x1d0] sm:$0xff]
        %v1299 = vld [vmem:[#allocation3 + $0x1d8] sm:$0xff]
        %v1300 = vld [vmem:[#allocation3 + $0x1e0] sm:$0xff]
        %v1301 = vld [vmem:[#allocation3 + $0x1e8] sm:$0xff]
        %v1302 = vld [vmem:[#allocation3 + $0x1f0] sm:$0xff]
        %v1303 = vld [vmem:[#allocation3 + $0x1f8] sm:$0xff]
        %v1304 = vld [vmem:[#allocation3 + $0x200] sm:$0xff]
        %v1305 = vld [vmem:[#allocation3 + $0x208] sm:$0xff]
        %v1306 = vld [vmem:[#allocation3 + $0x210] sm:$0xff]
        %v1307 = vld [vmem:[#allocation3 + $0x218] sm:$0xff]
        %v1308 = vld [vmem:[#allocation3 + $0x220] sm:$0xff]
        %v1309 = vld [vmem:[#allocation3 + $0x228] sm:$0xff]
        %v1310 = vld [vmem:[#allocation3 + $0x230] sm:$0xff]
        %v1311 = vld [vmem:[#allocation3 + $0x238] sm:$0xff]
        %v1312 = vld [vmem:[#allocation3 + $0x240] sm:$0xff]
        %v1313 = vld [vmem:[#allocation3 + $0x248] sm:$0xff]
        %v1314 = vld [vmem:[#allocation3 + $0x250] sm:$0xff]
        %v1315 = vld [vmem:[#allocation3 + $0x258] sm:$0xff]
        %v1316 = vld [vmem:[#allocation3 + $0x260] sm:$0xff]
        %v1317 = vld [vmem:[#allocation3 + $0x268] sm:$0xff]
        %v1318 = vld [vmem:[#allocation3 + $0x270] sm:$0xff]
        %v1319 = vld [vmem:[#allocation3 + $0x278] sm:$0xff]
        %v1320 = vld [vmem:[#allocation3 + $0x280] sm:$0xff]
        %v1321 = vld [vmem:[#allocation3 + $0x288] sm:$0xff]
        %v1322 = vld [vmem:[#allocation3 + $0x290] sm:$0xff]
        %v1323 = vld [vmem:[#allocation3 + $0x298] sm:$0xff]
        %v1324 = vld [vmem:[#allocation3 + $0x2a0] sm:$0xff]
        %v1325 = vld [vmem:[#allocation3 + $0x2a8] sm:$0xff]
        %v1326 = vld [vmem:[#allocation3 + $0x2b0] sm:$0xff]
        %v1327 = vld [vmem:[#allocation3 + $0x2b8] sm:$0xff]
        %v1328 = vld [vmem:[#allocation3 + $0x2c0] sm:$0xff]
        %v1329 = vld [vmem:[#allocation3 + $0x2c8] sm:$0xff]
        %v1330 = vld [vmem:[#allocation3 + $0x2d0] sm:$0xff]
        %v1331 = vld [vmem:[#allocation3 + $0x2d8] sm:$0xff]
        %v1332 = vld [vmem:[#allocation3 + $0x2e0] sm:$0xff]
        %v1333 = vld [vmem:[#allocation3 + $0x2e8] sm:$0xff]
        %v1334 = vld [vmem:[#allocation3 + $0x2f0] sm:$0xff]
        %v1335 = vld [vmem:[#allocation3 + $0x2f8] sm:$0xff]
        %v1336 = vld [vmem:[#allocation3 + $0x300] sm:$0xff]
        %v1337 = vld [vmem:[#allocation3 + $0x308] sm:$0xff]
        %v1338 = vld [vmem:[#allocation3 + $0x310] sm:$0xff]
        %v1339 = vld [vmem:[#allocation3 + $0x318] sm:$0xff]
        %v1340 = vld [vmem:[#allocation3 + $0x320] sm:$0xff]
        %v1341 = vld [vmem:[#allocation3 + $0x328] sm:$0xff]
        %v1342 = vld [vmem:[#allocation3 + $0x330] sm:$0xff]
        %v1343 = vld [vmem:[#allocation3 + $0x338] sm:$0xff]
        %v1344 = vld [vmem:[#allocation3 + $0x340] sm:$0xff]
        %v1345 = vld [vmem:[#allocation3 + $0x348] sm:$0xff]
        %v1346 = vld [vmem:[#allocation3 + $0x350] sm:$0xff]
        %v1347 = vld [vmem:[#allocation3 + $0x358] sm:$0xff]
        %v1348 = vld [vmem:[#allocation3 + $0x360] sm:$0xff]
        %v1349 = vld [vmem:[#allocation3 + $0x368] sm:$0xff]
        %v1350 = vld [vmem:[#allocation3 + $0x370] sm:$0xff]
        %v1351 = vld [vmem:[#allocation3 + $0x378] sm:$0xff]
        %v1352 = vld [vmem:[#allocation3 + $0x380] sm:$0xff]
        %v1353 = vld [vmem:[#allocation3 + $0x388] sm:$0xff]
        %v1354 = vld [vmem:[#allocation3 + $0x390] sm:$0xff]
        %v1355 = vld [vmem:[#allocation3 + $0x398] sm:$0xff]
        %v1356 = vld [vmem:[#allocation3 + $0x3a0] sm:$0xff]
        %v1357 = vld [vmem:[#allocation3 + $0x3a8] sm:$0xff]
        %v1358 = vld [vmem:[#allocation3 + $0x3b0] sm:$0xff]
        %v1359 = vld [vmem:[#allocation3 + $0x3b8] sm:$0xff]
        %v1360 = vld [vmem:[#allocation3 + $0x3c0] sm:$0xff]
        %v1361 = vld [vmem:[#allocation3 + $0x3c8] sm:$0xff]
        %v1362 = vld [vmem:[#allocation3 + $0x3d0] sm:$0xff]
        %v1363 = vld [vmem:[#allocation3 + $0x3d8] sm:$0xff]
        %v1364 = vld [vmem:[#allocation3 + $0x3e0] sm:$0xff]
        %v1365 = vld [vmem:[#allocation3 + $0x3e8] sm:$0xff]
        %v1366 = vld [vmem:[#allocation3 + $0x3f0] sm:$0xff]
        %v1367 = vld [vmem:[#allocation3 + $0x3f8] sm:$0xff]
        %v1368 = vld [vmem:[#allocation3 + $0x400] sm:$0xff]
        %v1369 = vld [vmem:[#allocation3 + $0x408] sm:$0xff]
        %v1370 = vld [vmem:[#allocation3 + $0x410] sm:$0xff]
        %v1371 = vld [vmem:[#allocation3 + $0x418] sm:$0xff]
        %v1372 = vld [vmem:[#allocation3 + $0x420] sm:$0xff]
        %v1373 = vld [vmem:[#allocation3 + $0x428] sm:$0xff]
        %v1374 = vld [vmem:[#allocation3 + $0x430] sm:$0xff]
        %v1375 = vld [vmem:[#allocation3 + $0x438] sm:$0xff]
        %v1376 = vld [vmem:[#allocation3 + $0x440] sm:$0xff]
        %v1377 = vld [vmem:[#allocation3 + $0x448] sm:$0xff]
        %v1378 = vld [vmem:[#allocation3 + $0x450] sm:$0xff]
        %v1379 = vld [vmem:[#allocation3 + $0x458] sm:$0xff]
        %v1380 = vld [vmem:[#allocation3 + $0x460] sm:$0xff]
        %v1381 = vld [vmem:[#allocation3 + $0x468] sm:$0xff]
        %v1382 = vld [vmem:[#allocation3 + $0x470] sm:$0xff]
        %v1383 = vld [vmem:[#allocation3 + $0x478] sm:$0xff]
        %v1384 = vld [vmem:[#allocation3 + $0x480] sm:$0xff]
        %v1385 = vld [vmem:[#allocation3 + $0x488] sm:$0xff]
        %v1386 = vld [vmem:[#allocation3 + $0x490] sm:$0xff]
        %v1387 = vld [vmem:[#allocation3 + $0x498] sm:$0xff]
        %v1388 = vld [vmem:[#allocation3 + $0x4a0] sm:$0xff]
        %v1389 = vld [vmem:[#allocation3 + $0x4a8] sm:$0xff]
        %v1390 = vld [vmem:[#allocation3 + $0x4b0] sm:$0xff]
        %v1391 = vld [vmem:[#allocation3 + $0x4b8] sm:$0xff]
        %v1392 = vld [vmem:[#allocation3 + $0x4c0] sm:$0xff]
        %v1393 = vld [vmem:[#allocation3 + $0x4c8] sm:$0xff]
        %v1394 = vld [vmem:[#allocation3 + $0x4d0] sm:$0xff]
        %v1395 = vld [vmem:[#allocation3 + $0x4d8] sm:$0xff]
        %v1396 = vld [vmem:[#allocation3 + $0x4e0] sm:$0xff]
        %v1397 = vld [vmem:[#allocation3 + $0x4e8] sm:$0xff]
        %v1398 = vld [vmem:[#allocation3 + $0x4f0] sm:$0xff]
        %v1399 = vld [vmem:[#allocation3 + $0x4f8] sm:$0xff]
        %v1400 = vld [vmem:[#allocation3 + $0x500] sm:$0xff]
        %v1401 = vld [vmem:[#allocation3 + $0x508] sm:$0xff]
        %v1402 = vld [vmem:[#allocation3 + $0x510] sm:$0xff]
        %v1403 = vld [vmem:[#allocation3 + $0x518] sm:$0xff]
        %v1404 = vld [vmem:[#allocation3 + $0x520] sm:$0xff]
        %v1405 = vld [vmem:[#allocation3 + $0x528] sm:$0xff]
        %v1406 = vld [vmem:[#allocation3 + $0x530] sm:$0xff]
        %v1407 = vld [vmem:[#allocation3 + $0x538] sm:$0xff]
        %v1408 = vld [vmem:[#allocation3 + $0x540] sm:$0xff]
        %v1409 = vld [vmem:[#allocation3 + $0x548] sm:$0xff]
        %v1410 = vld [vmem:[#allocation3 + $0x550] sm:$0xff]
        %v1411 = vld [vmem:[#allocation3 + $0x558] sm:$0xff]
        %v1412 = vld [vmem:[#allocation3 + $0x560] sm:$0xff]
        %v1413 = vld [vmem:[#allocation3 + $0x568] sm:$0xff]
        %v1414 = vld [vmem:[#allocation3 + $0x570] sm:$0xff]
        %v1415 = vld [vmem:[#allocation3 + $0x578] sm:$0xff]
        %v1416 = vld [vmem:[#allocation3 + $0x580] sm:$0xff]
        %v1417 = vld [vmem:[#allocation3 + $0x588] sm:$0xff]
        %v1418 = vld [vmem:[#allocation3 + $0x590] sm:$0xff]
        %v1419 = vld [vmem:[#allocation3 + $0x598] sm:$0xff]
        %v1420 = vld [vmem:[#allocation3 + $0x5a0] sm:$0xff]
        %v1421 = vld [vmem:[#allocation3 + $0x5a8] sm:$0xff]
        %v1422 = vld [vmem:[#allocation3 + $0x5b0] sm:$0xff]
        %v1423 = vld [vmem:[#allocation3 + $0x5b8] sm:$0xff]
        %v1424 = vld [vmem:[#allocation3 + $0x5c0] sm:$0xff]
        %v1425 = vld [vmem:[#allocation3 + $0x5c8] sm:$0xff]
        %v1426 = vld [vmem:[#allocation3 + $0x5d0] sm:$0xff]
        %v1427 = vld [vmem:[#allocation3 + $0x5d8] sm:$0xff]
        %v1428 = vld [vmem:[#allocation3 + $0x5e0] sm:$0xff]
        %v1429 = vld [vmem:[#allocation3 + $0x5e8] sm:$0xff]
        %v1430 = vld [vmem:[#allocation3 + $0x5f0] sm:$0xff]
        %v1431 = vld [vmem:[#allocation3 + $0x5f8] sm:$0xff]
        %v1432 = vld [vmem:[#allocation3 + $0x600] sm:$0xff]
        %v1433 = vld [vmem:[#allocation3 + $0x608] sm:$0xff]
        %v1434 = vld [vmem:[#allocation3 + $0x610] sm:$0xff]
        %v1435 = vld [vmem:[#allocation3 + $0x618] sm:$0xff]
        %v1436 = vld [vmem:[#allocation3 + $0x620] sm:$0xff]
        %v1437 = vld [vmem:[#allocation3 + $0x628] sm:$0xff]
        %v1438 = vld [vmem:[#allocation3 + $0x630] sm:$0xff]
        %v1439 = vld [vmem:[#allocation3 + $0x638] sm:$0xff]
        %v1440 = vld [vmem:[#allocation3 + $0x640] sm:$0xff]
        %v1441 = vld [vmem:[#allocation3 + $0x648] sm:$0xff]
        %v1442 = vld [vmem:[#allocation3 + $0x650] sm:$0xff]
        %v1443 = vld [vmem:[#allocation3 + $0x658] sm:$0xff]
        %v1444 = vld [vmem:[#allocation3 + $0x660] sm:$0xff]
        %v1445 = vld [vmem:[#allocation3 + $0x668] sm:$0xff]
        %v1446 = vld [vmem:[#allocation3 + $0x670] sm:$0xff]
        %v1447 = vld [vmem:[#allocation3 + $0x678] sm:$0xff]
        %v1448 = vld [vmem:[#allocation3 + $0x680] sm:$0xff]
        %v1449 = vld [vmem:[#allocation3 + $0x688] sm:$0xff]
        %v1450 = vld [vmem:[#allocation3 + $0x690] sm:$0xff]
        %v1451 = vld [vmem:[#allocation3 + $0x698] sm:$0xff]
        %v1452 = vld [vmem:[#allocation3 + $0x6a0] sm:$0xff]
        %v1453 = vld [vmem:[#allocation3 + $0x6a8] sm:$0xff]
        %v1454 = vld [vmem:[#allocation3 + $0x6b0] sm:$0xff]
        %v1455 = vld [vmem:[#allocation3 + $0x6b8] sm:$0xff]
        %v1456 = vld [vmem:[#allocation3 + $0x6c0] sm:$0xff]
        %v1457 = vld [vmem:[#allocation3 + $0x6c8] sm:$0xff]
        %v1458 = vld [vmem:[#allocation3 + $0x6d0] sm:$0xff]
        %v1459 = vld [vmem:[#allocation3 + $0x6d8] sm:$0xff]
        %v1460 = vld [vmem:[#allocation3 + $0x6e0] sm:$0xff]
        %v1461 = vld [vmem:[#allocation3 + $0x6e8] sm:$0xff]
        %v1462 = vld [vmem:[#allocation3 + $0x6f0] sm:$0xff]
        %v1463 = vld [vmem:[#allocation3 + $0x6f8] sm:$0xff]
        %v1464 = vld [vmem:[#allocation3 + $0x700] sm:$0xff]
        %v1465 = vld [vmem:[#allocation3 + $0x708] sm:$0xff]
        %v1466 = vld [vmem:[#allocation3 + $0x710] sm:$0xff]
        %v1467 = vld [vmem:[#allocation3 + $0x718] sm:$0xff]
        %v1468 = vld [vmem:[#allocation3 + $0x720] sm:$0xff]
        %v1469 = vld [vmem:[#allocation3 + $0x728] sm:$0xff]
        %v1470 = vld [vmem:[#allocation3 + $0x730] sm:$0xff]
        %v1471 = vld [vmem:[#allocation3 + $0x738] sm:$0xff]
        %v1472 = vld [vmem:[#allocation3 + $0x740] sm:$0xff]
        %v1473 = vld [vmem:[#allocation3 + $0x748] sm:$0xff]
        %v1474 = vld [vmem:[#allocation3 + $0x750] sm:$0xff]
        %v1475 = vld [vmem:[#allocation3 + $0x758] sm:$0xff]
        %v1476 = vld [vmem:[#allocation3 + $0x760] sm:$0xff]
        %v1477 = vld [vmem:[#allocation3 + $0x768] sm:$0xff]
        %v1478 = vld [vmem:[#allocation3 + $0x770] sm:$0xff]
        %v1479 = vld [vmem:[#allocation3 + $0x778] sm:$0xff]
        %v1480 = vld [vmem:[#allocation3 + $0x780] sm:$0xff]
        %v1481 = vld [vmem:[#allocation3 + $0x788] sm:$0xff]
        %v1482 = vld [vmem:[#allocation3 + $0x790] sm:$0xff]
        %v1483 = vld [vmem:[#allocation3 + $0x798] sm:$0xff]
        %v1484 = vld [vmem:[#allocation3 + $0x7a0] sm:$0xff]
        %v1485 = vld [vmem:[#allocation3 + $0x7a8] sm:$0xff]
        %v1486 = vld [vmem:[#allocation3 + $0x7b0] sm:$0xff]
        %v1487 = vld [vmem:[#allocation3 + $0x7b8] sm:$0xff]
        %v1488 = vld [vmem:[#allocation3 + $0x7c0] sm:$0xff]
        %v1489 = vld [vmem:[#allocation3 + $0x7c8] sm:$0xff]
        %v1490 = vld [vmem:[#allocation3 + $0x7d0] sm:$0xff]
        %v1491 = vld [vmem:[#allocation3 + $0x7d8] sm:$0xff]
        %v1492 = vld [vmem:[#allocation3 + $0x7e0] sm:$0xff]
        %v1493 = vld [vmem:[#allocation3 + $0x7e8] sm:$0xff]
        %v1494 = vld [vmem:[#allocation3 + $0x7f0] sm:$0xff]
        %v1495 = vld [vmem:[#allocation3 + $0x7f8] sm:$0xff]
        %v1496 = vld [vmem:[%s5] sm:$0xff]
        %v1497 = vld [vmem:[%s5 + $0x8] sm:$0xff]
        %v1514 = vunpack.c.l.b16 %v461
        %v1515 = vunpack.c.l.b16 %v462
        %v1516 = vunpack.c.l.b16 %v463
        %v1517 = vunpack.c.l.b16 %v464
        %v1518 = vunpack.c.l.b16 %v465
        %v1519 = vunpack.c.l.b16 %v466
        %v1520 = vunpack.c.l.b16 %v467
        %v1521 = vunpack.c.l.b16 %v468
        %v1522 = vunpack.c.l.b16 %v469
        %v1523 = vunpack.c.l.b16 %v470
        %v1524 = vunpack.c.l.b16 %v471
        %v1525 = vunpack.c.l.b16 %v472
        %v1526 = vunpack.c.l.b16 %v473
        %v1527 = vunpack.c.l.b16 %v474
        %v1528 = vunpack.c.l.b16 %v475
        %v1529 = vunpack.c.l.b16 %v476
        %v1530 = vpack.c.b16 %v1515, %v1514
        %v1531 = vpack.c.b16 %v1517, %v1516
        %v1532 = vpack.c.b16 %v1519, %v1518
        %v1533 = vpack.c.b16 %v1521, %v1520
        %v1534 = vpack.c.b16 %v1523, %v1522
        %v1535 = vpack.c.b16 %v1525, %v1524
        %v1536 = vpack.c.b16 %v1527, %v1526
        %v1537 = vpack.c.b16 %v1529, %v1528
        %v1540 = vunpack.c.l.b16 %v1496
        %v1541 = vunpack.c.h.b16 %v1496
        %v1542 = vunpack.c.l.b16 %v1497
        %v1543 = vunpack.c.h.b16 %v1497
        %v1544 = vpack.c.b16 %v1540, %v1540
        %v1545 = vpack.c.b16 %v1541, %v1541
        %v1546 = vpack.c.b16 %v1542, %v1542
        %v1547 = vpack.c.b16 %v1543, %v1543
        %vm1548 = vcmask 64512
        %v1550 = vsel %vm1548, %v1530, 0
        %v1553 = vsel %vm1548, %v1531, 0
        %v1556 = vsel %vm1548, %v1532, 0
        %v1559 = vsel %vm1548, %v1533, 0
        %v1562 = vsel %vm1548, %v1534, 0
        %v1565 = vsel %vm1548, %v1535, 0
        %v1568 = vsel %vm1548, %v1536, 0
        %v1571 = vsel %vm1548, %v1537, 0
        %vm1573 = vcmask 1043456
        %v1575 = vsel %vm1573, %v1544, 0
        %v1578 = vsel %vm1573, %v1545, 0
        %v1581 = vsel %vm1573, %v1546, 0
        %v1584 = vsel %vm1573, %v1547, 0
        %1586 = vmatpush.bf16.msra.mxu0 0
        %1587 = vmatpush.bf16.msra.mxu0 0
        %1588 = vmatpush.bf16.msra.mxu0 0
        %1589 = vmatpush.bf16.msra.mxu0 0
        %1590 = vmatpush.bf16.msra.mxu0 0
        %1591 = vmatpush.bf16.msra.mxu0 0
        %1592 = vmatpush.bf16.msra.mxu0 0
        %1593 = vmatpush.bf16.msra.mxu0 %v1575
        %1594 = vmatmul.bf16.gmra.mxu0 %v1550
        %v1595 = vpop.f32.mrf.mxu0
        %v1596 = vadd.f32 0.0, %v1595
        %v1597 = vpop.f32.mrf.mxu0
        %v1598 = vadd.f32 0.0, %v1597
        %1599 = vmatmul.bf16.gmra.mxu0 %v1553
        %v1600 = vpop.f32.mrf.mxu0
        %v1601 = vadd.f32 0.0, %v1600
        %v1602 = vpop.f32.mrf.mxu0
        %v1603 = vadd.f32 0.0, %v1602
        %1604 = vmatmul.bf16.gmra.mxu0 %v1556
        %v1605 = vpop.f32.mrf.mxu0
        %v1606 = vadd.f32 0.0, %v1605
        %v1607 = vpop.f32.mrf.mxu0
        %v1608 = vadd.f32 0.0, %v1607
        %1609 = vmatmul.bf16.gmra.mxu0 %v1559
        %v1610 = vpop.f32.mrf.mxu0
        %v1611 = vadd.f32 0.0, %v1610
        %v1612 = vpop.f32.mrf.mxu0
        %v1613 = vadd.f32 0.0, %v1612
        %1614 = vmatmul.bf16.gmra.mxu0 %v1562
        %v1615 = vpop.f32.mrf.mxu0
        %v1616 = vadd.f32 0.0, %v1615
        %v1617 = vpop.f32.mrf.mxu0
        %v1618 = vadd.f32 0.0, %v1617
        %1619 = vmatmul.bf16.gmra.mxu0 %v1565
        %v1620 = vpop.f32.mrf.mxu0
        %v1621 = vadd.f32 0.0, %v1620
        %v1622 = vpop.f32.mrf.mxu0
        %v1623 = vadd.f32 0.0, %v1622
        %1624 = vmatmul.bf16.gmra.mxu0 %v1568
        %v1625 = vpop.f32.mrf.mxu0
        %v1626 = vadd.f32 0.0, %v1625
        %v1627 = vpop.f32.mrf.mxu0
        %v1628 = vadd.f32 0.0, %v1627
        %1629 = vmatmul.bf16.gmra.mxu0 %v1571
        %v1630 = vpop.f32.mrf.mxu0
        %v1631 = vadd.f32 0.0, %v1630
        %v1632 = vpop.f32.mrf.mxu0
        %v1633 = vadd.f32 0.0, %v1632
        %1634 = vdwg.mxu0
        %1635 = vmatpush.bf16.msra.mxu0 0
        %1636 = vmatpush.bf16.msra.mxu0 0
        %1637 = vmatpush.bf16.msra.mxu0 0
        %1638 = vmatpush.bf16.msra.mxu0 0
        %1639 = vmatpush.bf16.msra.mxu0 0
        %1640 = vmatpush.bf16.msra.mxu0 0
        %1641 = vmatpush.bf16.msra.mxu0 0
        %1642 = vmatpush.bf16.msra.mxu0 %v1578
        %1643 = vmatmul.bf16.gmra.mxu0 %v1550
        %v1644 = vpop.f32.mrf.mxu0
        %v1645 = vadd.f32 0.0, %v1644
        %v1646 = vpop.f32.mrf.mxu0
        %v1647 = vadd.f32 0.0, %v1646
        %1648 = vmatmul.bf16.gmra.mxu0 %v1553
        %v1649 = vpop.f32.mrf.mxu0
        %v1650 = vadd.f32 0.0, %v1649
        %v1651 = vpop.f32.mrf.mxu0
        %v1652 = vadd.f32 0.0, %v1651
        %1653 = vmatmul.bf16.gmra.mxu0 %v1556
        %v1654 = vpop.f32.mrf.mxu0
        %v1655 = vadd.f32 0.0, %v1654
        %v1656 = vpop.f32.mrf.mxu0
        %v1657 = vadd.f32 0.0, %v1656
        %1658 = vmatmul.bf16.gmra.mxu0 %v1559
        %v1659 = vpop.f32.mrf.mxu0
        %v1660 = vadd.f32 0.0, %v1659
        %v1661 = vpop.f32.mrf.mxu0
        %v1662 = vadd.f32 0.0, %v1661
        %1663 = vmatmul.bf16.gmra.mxu0 %v1562
        %v1664 = vpop.f32.mrf.mxu0
        %v1665 = vadd.f32 0.0, %v1664
        %v1666 = vpop.f32.mrf.mxu0
        %v1667 = vadd.f32 0.0, %v1666
        %1668 = vmatmul.bf16.gmra.mxu0 %v1565
        %v1669 = vpop.f32.mrf.mxu0
        %v1670 = vadd.f32 0.0, %v1669
        %v1671 = vpop.f32.mrf.mxu0
        %v1672 = vadd.f32 0.0, %v1671
        %1673 = vmatmul.bf16.gmra.mxu0 %v1568
        %v1674 = vpop.f32.mrf.mxu0
        %v1675 = vadd.f32 0.0, %v1674
        %v1676 = vpop.f32.mrf.mxu0
        %v1677 = vadd.f32 0.0, %v1676
        %1678 = vmatmul.bf16.gmra.mxu0 %v1571
        %v1679 = vpop.f32.mrf.mxu0
        %v1680 = vadd.f32 0.0, %v1679
        %v1681 = vpop.f32.mrf.mxu0
        %v1682 = vadd.f32 0.0, %v1681
        %1683 = vdwg.mxu0
        %1684 = vmatpush.bf16.msra.mxu0 0
        %1685 = vmatpush.bf16.msra.mxu0 0
        %1686 = vmatpush.bf16.msra.mxu0 0
        %1687 = vmatpush.bf16.msra.mxu0 0
        %1688 = vmatpush.bf16.msra.mxu0 0
        %1689 = vmatpush.bf16.msra.mxu0 0
        %1690 = vmatpush.bf16.msra.mxu0 0
        %1691 = vmatpush.bf16.msra.mxu0 %v1581
        %1692 = vmatmul.bf16.gmra.mxu0 %v1550
        %v1693 = vpop.f32.mrf.mxu0
        %v1694 = vadd.f32 0.0, %v1693
        %v1695 = vpop.f32.mrf.mxu0
        %v1696 = vadd.f32 0.0, %v1695
        %1697 = vmatmul.bf16.gmra.mxu0 %v1553
        %v1698 = vpop.f32.mrf.mxu0
        %v1699 = vadd.f32 0.0, %v1698
        %v1700 = vpop.f32.mrf.mxu0
        %v1701 = vadd.f32 0.0, %v1700
        %1702 = vmatmul.bf16.gmra.mxu0 %v1556
        %v1703 = vpop.f32.mrf.mxu0
        %v1704 = vadd.f32 0.0, %v1703
        %v1705 = vpop.f32.mrf.mxu0
        %v1706 = vadd.f32 0.0, %v1705
        %1707 = vmatmul.bf16.gmra.mxu0 %v1559
        %v1708 = vpop.f32.mrf.mxu0
        %v1709 = vadd.f32 0.0, %v1708
        %v1710 = vpop.f32.mrf.mxu0
        %v1711 = vadd.f32 0.0, %v1710
        %1712 = vmatmul.bf16.gmra.mxu0 %v1562
        %v1713 = vpop.f32.mrf.mxu0
        %v1714 = vadd.f32 0.0, %v1713
        %v1715 = vpop.f32.mrf.mxu0
        %v1716 = vadd.f32 0.0, %v1715
        %1717 = vmatmul.bf16.gmra.mxu0 %v1565
        %v1718 = vpop.f32.mrf.mxu0
        %v1719 = vadd.f32 0.0, %v1718
        %v1720 = vpop.f32.mrf.mxu0
        %v1721 = vadd.f32 0.0, %v1720
        %1722 = vmatmul.bf16.gmra.mxu0 %v1568
        %v1723 = vpop.f32.mrf.mxu0
        %v1724 = vadd.f32 0.0, %v1723
        %v1725 = vpop.f32.mrf.mxu0
        %v1726 = vadd.f32 0.0, %v1725
        %1727 = vmatmul.bf16.gmra.mxu0 %v1571
        %v1728 = vpop.f32.mrf.mxu0
        %v1729 = vadd.f32 0.0, %v1728
        %v1730 = vpop.f32.mrf.mxu0
        %v1731 = vadd.f32 0.0, %v1730
        %1732 = vdwg.mxu0
        %1733 = vmatpush.bf16.msra.mxu0 0
        %1734 = vmatpush.bf16.msra.mxu0 0
        %1735 = vmatpush.bf16.msra.mxu0 0
        %1736 = vmatpush.bf16.msra.mxu0 0
        %1737 = vmatpush.bf16.msra.mxu0 0
        %1738 = vmatpush.bf16.msra.mxu0 0
        %1739 = vmatpush.bf16.msra.mxu0 0
        %1740 = vmatpush.bf16.msra.mxu0 %v1584
        %1741 = vmatmul.bf16.gmra.mxu0 %v1550
        %v1742 = vpop.f32.mrf.mxu0
        %v1743 = vadd.f32 0.0, %v1742
        %v1744 = vpop.f32.mrf.mxu0
        %v1745 = vadd.f32 0.0, %v1744
        %1746 = vmatmul.bf16.gmra.mxu0 %v1553
        %v1747 = vpop.f32.mrf.mxu0
        %v1748 = vadd.f32 0.0, %v1747
        %v1749 = vpop.f32.mrf.mxu0
        %v1750 = vadd.f32 0.0, %v1749
        %1751 = vmatmul.bf16.gmra.mxu0 %v1556
        %v1752 = vpop.f32.mrf.mxu0
        %v1753 = vadd.f32 0.0, %v1752
        %v1754 = vpop.f32.mrf.mxu0
        %v1755 = vadd.f32 0.0, %v1754
        %1756 = vmatmul.bf16.gmra.mxu0 %v1559
        %v1757 = vpop.f32.mrf.mxu0
        %v1758 = vadd.f32 0.0, %v1757
        %v1759 = vpop.f32.mrf.mxu0
        %v1760 = vadd.f32 0.0, %v1759
        %1761 = vmatmul.bf16.gmra.mxu0 %v1562
        %v1762 = vpop.f32.mrf.mxu0
        %v1763 = vadd.f32 0.0, %v1762
        %v1764 = vpop.f32.mrf.mxu0
        %v1765 = vadd.f32 0.0, %v1764
        %1766 = vmatmul.bf16.gmra.mxu0 %v1565
        %v1767 = vpop.f32.mrf.mxu0
        %v1768 = vadd.f32 0.0, %v1767
        %v1769 = vpop.f32.mrf.mxu0
        %v1770 = vadd.f32 0.0, %v1769
        %1771 = vmatmul.bf16.gmra.mxu0 %v1568
        %v1772 = vpop.f32.mrf.mxu0
        %v1773 = vadd.f32 0.0, %v1772
        %v1774 = vpop.f32.mrf.mxu0
        %v1775 = vadd.f32 0.0, %v1774
        %1776 = vmatmul.bf16.gmra.mxu0 %v1571
        %v1777 = vpop.f32.mrf.mxu0
        %v1778 = vadd.f32 0.0, %v1777
        %v1779 = vpop.f32.mrf.mxu0
        %v1780 = vadd.f32 0.0, %v1779
        %1781 = vdwg.mxu0
        %v2038 = vunpack.c.l.b16 %v1240
        %v2039 = vunpack.c.h.b16 %v1240
        %v2040 = vunpack.c.l.b16 %v1241
        %v2041 = vunpack.c.h.b16 %v1241
        %v2042 = vunpack.c.l.b16 %v1242
        %v2043 = vunpack.c.h.b16 %v1242
        %v2044 = vunpack.c.l.b16 %v1243
        %v2045 = vunpack.c.h.b16 %v1243
        %v2046 = vunpack.c.l.b16 %v1244
        %v2047 = vunpack.c.h.b16 %v1244
        %v2048 = vunpack.c.l.b16 %v1245
        %v2049 = vunpack.c.h.b16 %v1245
        %v2050 = vunpack.c.l.b16 %v1246
        %v2051 = vunpack.c.h.b16 %v1246
        %v2052 = vunpack.c.l.b16 %v1247
        %v2053 = vunpack.c.h.b16 %v1247
        %v2054 = vunpack.c.l.b16 %v1248
        %v2055 = vunpack.c.h.b16 %v1248
        %v2056 = vunpack.c.l.b16 %v1249
        %v2057 = vunpack.c.h.b16 %v1249
        %v2058 = vunpack.c.l.b16 %v1250
        %v2059 = vunpack.c.h.b16 %v1250
        %v2060 = vunpack.c.l.b16 %v1251
        %v2061 = vunpack.c.h.b16 %v1251
        %v2062 = vunpack.c.l.b16 %v1252
        %v2063 = vunpack.c.h.b16 %v1252
        %v2064 = vunpack.c.l.b16 %v1253
        %v2065 = vunpack.c.h.b16 %v1253
        %v2066 = vunpack.c.l.b16 %v1254
        %v2067 = vunpack.c.h.b16 %v1254
        %v2068 = vunpack.c.l.b16 %v1255
        %v2069 = vunpack.c.h.b16 %v1255
        %v2070 = vunpack.c.l.b16 %v1256
        %v2071 = vunpack.c.h.b16 %v1256
        %v2072 = vunpack.c.l.b16 %v1257
        %v2073 = vunpack.c.h.b16 %v1257
        %v2074 = vunpack.c.l.b16 %v1258
        %v2075 = vunpack.c.h.b16 %v1258
        %v2076 = vunpack.c.l.b16 %v1259
        %v2077 = vunpack.c.h.b16 %v1259
        %v2078 = vunpack.c.l.b16 %v1260
        %v2079 = vunpack.c.h.b16 %v1260
        %v2080 = vunpack.c.l.b16 %v1261
        %v2081 = vunpack.c.h.b16 %v1261
        %v2082 = vunpack.c.l.b16 %v1262
        %v2083 = vunpack.c.h.b16 %v1262
        %v2084 = vunpack.c.l.b16 %v1263
        %v2085 = vunpack.c.h.b16 %v1263
        %v2086 = vunpack.c.l.b16 %v1264
        %v2087 = vunpack.c.h.b16 %v1264
        %v2088 = vunpack.c.l.b16 %v1265
        %v2089 = vunpack.c.h.b16 %v1265
        %v2090 = vunpack.c.l.b16 %v1266
        %v2091 = vunpack.c.h.b16 %v1266
        %v2092 = vunpack.c.l.b16 %v1267
        %v2093 = vunpack.c.h.b16 %v1267
        %v2094 = vunpack.c.l.b16 %v1268
        %v2095 = vunpack.c.h.b16 %v1268
        %v2096 = vunpack.c.l.b16 %v1269
        %v2097 = vunpack.c.h.b16 %v1269
        %v2098 = vunpack.c.l.b16 %v1270
        %v2099 = vunpack.c.h.b16 %v1270
        %v2100 = vunpack.c.l.b16 %v1271
        %v2101 = vunpack.c.h.b16 %v1271
        %v2102 = vunpack.c.l.b16 %v1272
        %v2103 = vunpack.c.h.b16 %v1272
        %v2104 = vunpack.c.l.b16 %v1273
        %v2105 = vunpack.c.h.b16 %v1273
        %v2106 = vunpack.c.l.b16 %v1274
        %v2107 = vunpack.c.h.b16 %v1274
        %v2108 = vunpack.c.l.b16 %v1275
        %v2109 = vunpack.c.h.b16 %v1275
        %v2110 = vunpack.c.l.b16 %v1276
        %v2111 = vunpack.c.h.b16 %v1276
        %v2112 = vunpack.c.l.b16 %v1277
        %v2113 = vunpack.c.h.b16 %v1277
        %v2114 = vunpack.c.l.b16 %v1278
        %v2115 = vunpack.c.h.b16 %v1278
        %v2116 = vunpack.c.l.b16 %v1279
        %v2117 = vunpack.c.h.b16 %v1279
        %v2118 = vunpack.c.l.b16 %v1280
        %v2119 = vunpack.c.h.b16 %v1280
        %v2120 = vunpack.c.l.b16 %v1281
        %v2121 = vunpack.c.h.b16 %v1281
        %v2122 = vunpack.c.l.b16 %v1282
        %v2123 = vunpack.c.h.b16 %v1282
        %v2124 = vunpack.c.l.b16 %v1283
        %v2125 = vunpack.c.h.b16 %v1283
        %v2126 = vunpack.c.l.b16 %v1284
        %v2127 = vunpack.c.h.b16 %v1284
        %v2128 = vunpack.c.l.b16 %v1285
        %v2129 = vunpack.c.h.b16 %v1285
        %v2130 = vunpack.c.l.b16 %v1286
        %v2131 = vunpack.c.h.b16 %v1286
        %v2132 = vunpack.c.l.b16 %v1287
        %v2133 = vunpack.c.h.b16 %v1287
        %v2134 = vunpack.c.l.b16 %v1288
        %v2135 = vunpack.c.h.b16 %v1288
        %v2136 = vunpack.c.l.b16 %v1289
        %v2137 = vunpack.c.h.b16 %v1289
        %v2138 = vunpack.c.l.b16 %v1290
        %v2139 = vunpack.c.h.b16 %v1290
        %v2140 = vunpack.c.l.b16 %v1291
        %v2141 = vunpack.c.h.b16 %v1291
        %v2142 = vunpack.c.l.b16 %v1292
        %v2143 = vunpack.c.h.b16 %v1292
        %v2144 = vunpack.c.l.b16 %v1293
        %v2145 = vunpack.c.h.b16 %v1293
        %v2146 = vunpack.c.l.b16 %v1294
        %v2147 = vunpack.c.h.b16 %v1294
        %v2148 = vunpack.c.l.b16 %v1295
        %v2149 = vunpack.c.h.b16 %v1295
        %v2150 = vunpack.c.l.b16 %v1296
        %v2151 = vunpack.c.h.b16 %v1296
        %v2152 = vunpack.c.l.b16 %v1297
        %v2153 = vunpack.c.h.b16 %v1297
        %v2154 = vunpack.c.l.b16 %v1298
        %v2155 = vunpack.c.h.b16 %v1298
        %v2156 = vunpack.c.l.b16 %v1299
        %v2157 = vunpack.c.h.b16 %v1299
        %v2158 = vunpack.c.l.b16 %v1300
        %v2159 = vunpack.c.h.b16 %v1300
        %v2160 = vunpack.c.l.b16 %v1301
        %v2161 = vunpack.c.h.b16 %v1301
        %v2162 = vunpack.c.l.b16 %v1302
        %v2163 = vunpack.c.h.b16 %v1302
        %v2164 = vunpack.c.l.b16 %v1303
        %v2165 = vunpack.c.h.b16 %v1303
        %v2166 = vunpack.c.l.b16 %v1304
        %v2167 = vunpack.c.h.b16 %v1304
        %v2168 = vunpack.c.l.b16 %v1305
        %v2169 = vunpack.c.h.b16 %v1305
        %v2170 = vunpack.c.l.b16 %v1306
        %v2171 = vunpack.c.h.b16 %v1306
        %v2172 = vunpack.c.l.b16 %v1307
        %v2173 = vunpack.c.h.b16 %v1307
        %v2174 = vunpack.c.l.b16 %v1308
        %v2175 = vunpack.c.h.b16 %v1308
        %v2176 = vunpack.c.l.b16 %v1309
        %v2177 = vunpack.c.h.b16 %v1309
        %v2178 = vunpack.c.l.b16 %v1310
        %v2179 = vunpack.c.h.b16 %v1310
        %v2180 = vunpack.c.l.b16 %v1311
        %v2181 = vunpack.c.h.b16 %v1311
        %v2182 = vunpack.c.l.b16 %v1312
        %v2183 = vunpack.c.h.b16 %v1312
        %v2184 = vunpack.c.l.b16 %v1313
        %v2185 = vunpack.c.h.b16 %v1313
        %v2186 = vunpack.c.l.b16 %v1314
        %v2187 = vunpack.c.h.b16 %v1314
        %v2188 = vunpack.c.l.b16 %v1315
        %v2189 = vunpack.c.h.b16 %v1315
        %v2190 = vunpack.c.l.b16 %v1316
        %v2191 = vunpack.c.h.b16 %v1316
        %v2192 = vunpack.c.l.b16 %v1317
        %v2193 = vunpack.c.h.b16 %v1317
        %v2194 = vunpack.c.l.b16 %v1318
        %v2195 = vunpack.c.h.b16 %v1318
        %v2196 = vunpack.c.l.b16 %v1319
        %v2197 = vunpack.c.h.b16 %v1319
        %v2198 = vunpack.c.l.b16 %v1320
        %v2199 = vunpack.c.h.b16 %v1320
        %v2200 = vunpack.c.l.b16 %v1321
        %v2201 = vunpack.c.h.b16 %v1321
        %v2202 = vunpack.c.l.b16 %v1322
        %v2203 = vunpack.c.h.b16 %v1322
        %v2204 = vunpack.c.l.b16 %v1323
        %v2205 = vunpack.c.h.b16 %v1323
        %v2206 = vunpack.c.l.b16 %v1324
        %v2207 = vunpack.c.h.b16 %v1324
        %v2208 = vunpack.c.l.b16 %v1325
        %v2209 = vunpack.c.h.b16 %v1325
        %v2210 = vunpack.c.l.b16 %v1326
        %v2211 = vunpack.c.h.b16 %v1326
        %v2212 = vunpack.c.l.b16 %v1327
        %v2213 = vunpack.c.h.b16 %v1327
        %v2214 = vunpack.c.l.b16 %v1328
        %v2215 = vunpack.c.h.b16 %v1328
        %v2216 = vunpack.c.l.b16 %v1329
        %v2217 = vunpack.c.h.b16 %v1329
        %v2218 = vunpack.c.l.b16 %v1330
        %v2219 = vunpack.c.h.b16 %v1330
        %v2220 = vunpack.c.l.b16 %v1331
        %v2221 = vunpack.c.h.b16 %v1331
        %v2222 = vunpack.c.l.b16 %v1332
        %v2223 = vunpack.c.h.b16 %v1332
        %v2224 = vunpack.c.l.b16 %v1333
        %v2225 = vunpack.c.h.b16 %v1333
        %v2226 = vunpack.c.l.b16 %v1334
        %v2227 = vunpack.c.h.b16 %v1334
        %v2228 = vunpack.c.l.b16 %v1335
        %v2229 = vunpack.c.h.b16 %v1335
        %v2230 = vunpack.c.l.b16 %v1336
        %v2231 = vunpack.c.h.b16 %v1336
        %v2232 = vunpack.c.l.b16 %v1337
        %v2233 = vunpack.c.h.b16 %v1337
        %v2234 = vunpack.c.l.b16 %v1338
        %v2235 = vunpack.c.h.b16 %v1338
        %v2236 = vunpack.c.l.b16 %v1339
        %v2237 = vunpack.c.h.b16 %v1339
        %v2238 = vunpack.c.l.b16 %v1340
        %v2239 = vunpack.c.h.b16 %v1340
        %v2240 = vunpack.c.l.b16 %v1341
        %v2241 = vunpack.c.h.b16 %v1341
        %v2242 = vunpack.c.l.b16 %v1342
        %v2243 = vunpack.c.h.b16 %v1342
        %v2244 = vunpack.c.l.b16 %v1343
        %v2245 = vunpack.c.h.b16 %v1343
        %v2246 = vunpack.c.l.b16 %v1344
        %v2247 = vunpack.c.h.b16 %v1344
        %v2248 = vunpack.c.l.b16 %v1345
        %v2249 = vunpack.c.h.b16 %v1345
        %v2250 = vunpack.c.l.b16 %v1346
        %v2251 = vunpack.c.h.b16 %v1346
        %v2252 = vunpack.c.l.b16 %v1347
        %v2253 = vunpack.c.h.b16 %v1347
        %v2254 = vunpack.c.l.b16 %v1348
        %v2255 = vunpack.c.h.b16 %v1348
        %v2256 = vunpack.c.l.b16 %v1349
        %v2257 = vunpack.c.h.b16 %v1349
        %v2258 = vunpack.c.l.b16 %v1350
        %v2259 = vunpack.c.h.b16 %v1350
        %v2260 = vunpack.c.l.b16 %v1351
        %v2261 = vunpack.c.h.b16 %v1351
        %v2262 = vunpack.c.l.b16 %v1352
        %v2263 = vunpack.c.h.b16 %v1352
        %v2264 = vunpack.c.l.b16 %v1353
        %v2265 = vunpack.c.h.b16 %v1353
        %v2266 = vunpack.c.l.b16 %v1354
        %v2267 = vunpack.c.h.b16 %v1354
        %v2268 = vunpack.c.l.b16 %v1355
        %v2269 = vunpack.c.h.b16 %v1355
        %v2270 = vunpack.c.l.b16 %v1356
        %v2271 = vunpack.c.h.b16 %v1356
        %v2272 = vunpack.c.l.b16 %v1357
        %v2273 = vunpack.c.h.b16 %v1357
        %v2274 = vunpack.c.l.b16 %v1358
        %v2275 = vunpack.c.h.b16 %v1358
        %v2276 = vunpack.c.l.b16 %v1359
        %v2277 = vunpack.c.h.b16 %v1359
        %v2278 = vunpack.c.l.b16 %v1360
        %v2279 = vunpack.c.h.b16 %v1360
        %v2280 = vunpack.c.l.b16 %v1361
        %v2281 = vunpack.c.h.b16 %v1361
        %v2282 = vunpack.c.l.b16 %v1362
        %v2283 = vunpack.c.h.b16 %v1362
        %v2284 = vunpack.c.l.b16 %v1363
        %v2285 = vunpack.c.h.b16 %v1363
        %v2286 = vunpack.c.l.b16 %v1364
        %v2287 = vunpack.c.h.b16 %v1364
        %v2288 = vunpack.c.l.b16 %v1365
        %v2289 = vunpack.c.h.b16 %v1365
        %v2290 = vunpack.c.l.b16 %v1366
        %v2291 = vunpack.c.h.b16 %v1366
        %v2292 = vunpack.c.l.b16 %v1367
        %v2293 = vunpack.c.h.b16 %v1367
        %v2294 = vunpack.c.l.b16 %v1368
        %v2295 = vunpack.c.h.b16 %v1368
        %v2296 = vunpack.c.l.b16 %v1369
        %v2297 = vunpack.c.h.b16 %v1369
        %v2298 = vunpack.c.l.b16 %v1370
        %v2299 = vunpack.c.h.b16 %v1370
        %v2300 = vunpack.c.l.b16 %v1371
        %v2301 = vunpack.c.h.b16 %v1371
        %v2302 = vunpack.c.l.b16 %v1372
        %v2303 = vunpack.c.h.b16 %v1372
        %v2304 = vunpack.c.l.b16 %v1373
        %v2305 = vunpack.c.h.b16 %v1373
        %v2306 = vunpack.c.l.b16 %v1374
        %v2307 = vunpack.c.h.b16 %v1374
        %v2308 = vunpack.c.l.b16 %v1375
        %v2309 = vunpack.c.h.b16 %v1375
        %v2310 = vunpack.c.l.b16 %v1376
        %v2311 = vunpack.c.h.b16 %v1376
        %v2312 = vunpack.c.l.b16 %v1377
        %v2313 = vunpack.c.h.b16 %v1377
        %v2314 = vunpack.c.l.b16 %v1378
        %v2315 = vunpack.c.h.b16 %v1378
        %v2316 = vunpack.c.l.b16 %v1379
        %v2317 = vunpack.c.h.b16 %v1379
        %v2318 = vunpack.c.l.b16 %v1380
        %v2319 = vunpack.c.h.b16 %v1380
        %v2320 = vunpack.c.l.b16 %v1381
        %v2321 = vunpack.c.h.b16 %v1381
        %v2322 = vunpack.c.l.b16 %v1382
        %v2323 = vunpack.c.h.b16 %v1382
        %v2324 = vunpack.c.l.b16 %v1383
        %v2325 = vunpack.c.h.b16 %v1383
        %v2326 = vunpack.c.l.b16 %v1384
        %v2327 = vunpack.c.h.b16 %v1384
        %v2328 = vunpack.c.l.b16 %v1385
        %v2329 = vunpack.c.h.b16 %v1385
        %v2330 = vunpack.c.l.b16 %v1386
        %v2331 = vunpack.c.h.b16 %v1386
        %v2332 = vunpack.c.l.b16 %v1387
        %v2333 = vunpack.c.h.b16 %v1387
        %v2334 = vunpack.c.l.b16 %v1388
        %v2335 = vunpack.c.h.b16 %v1388
        %v2336 = vunpack.c.l.b16 %v1389
        %v2337 = vunpack.c.h.b16 %v1389
        %v2338 = vunpack.c.l.b16 %v1390
        %v2339 = vunpack.c.h.b16 %v1390
        %v2340 = vunpack.c.l.b16 %v1391
        %v2341 = vunpack.c.h.b16 %v1391
        %v2342 = vunpack.c.l.b16 %v1392
        %v2343 = vunpack.c.h.b16 %v1392
        %v2344 = vunpack.c.l.b16 %v1393
        %v2345 = vunpack.c.h.b16 %v1393
        %v2346 = vunpack.c.l.b16 %v1394
        %v2347 = vunpack.c.h.b16 %v1394
        %v2348 = vunpack.c.l.b16 %v1395
        %v2349 = vunpack.c.h.b16 %v1395
        %v2350 = vunpack.c.l.b16 %v1396
        %v2351 = vunpack.c.h.b16 %v1396
        %v2352 = vunpack.c.l.b16 %v1397
        %v2353 = vunpack.c.h.b16 %v1397
        %v2354 = vunpack.c.l.b16 %v1398
        %v2355 = vunpack.c.h.b16 %v1398
        %v2356 = vunpack.c.l.b16 %v1399
        %v2357 = vunpack.c.h.b16 %v1399
        %v2358 = vunpack.c.l.b16 %v1400
        %v2359 = vunpack.c.h.b16 %v1400
        %v2360 = vunpack.c.l.b16 %v1401
        %v2361 = vunpack.c.h.b16 %v1401
        %v2362 = vunpack.c.l.b16 %v1402
        %v2363 = vunpack.c.h.b16 %v1402
        %v2364 = vunpack.c.l.b16 %v1403
        %v2365 = vunpack.c.h.b16 %v1403
        %v2366 = vunpack.c.l.b16 %v1404
        %v2367 = vunpack.c.h.b16 %v1404
        %v2368 = vunpack.c.l.b16 %v1405
        %v2369 = vunpack.c.h.b16 %v1405
        %v2370 = vunpack.c.l.b16 %v1406
        %v2371 = vunpack.c.h.b16 %v1406
        %v2372 = vunpack.c.l.b16 %v1407
        %v2373 = vunpack.c.h.b16 %v1407
        %v2374 = vunpack.c.l.b16 %v1408
        %v2375 = vunpack.c.h.b16 %v1408
        %v2376 = vunpack.c.l.b16 %v1409
        %v2377 = vunpack.c.h.b16 %v1409
        %v2378 = vunpack.c.l.b16 %v1410
        %v2379 = vunpack.c.h.b16 %v1410
        %v2380 = vunpack.c.l.b16 %v1411
        %v2381 = vunpack.c.h.b16 %v1411
        %v2382 = vunpack.c.l.b16 %v1412
        %v2383 = vunpack.c.h.b16 %v1412
        %v2384 = vunpack.c.l.b16 %v1413
        %v2385 = vunpack.c.h.b16 %v1413
        %v2386 = vunpack.c.l.b16 %v1414
        %v2387 = vunpack.c.h.b16 %v1414
        %v2388 = vunpack.c.l.b16 %v1415
        %v2389 = vunpack.c.h.b16 %v1415
        %v2390 = vunpack.c.l.b16 %v1416
        %v2391 = vunpack.c.h.b16 %v1416
        %v2392 = vunpack.c.l.b16 %v1417
        %v2393 = vunpack.c.h.b16 %v1417
        %v2394 = vunpack.c.l.b16 %v1418
        %v2395 = vunpack.c.h.b16 %v1418
        %v2396 = vunpack.c.l.b16 %v1419
        %v2397 = vunpack.c.h.b16 %v1419
        %v2398 = vunpack.c.l.b16 %v1420
        %v2399 = vunpack.c.h.b16 %v1420
        %v2400 = vunpack.c.l.b16 %v1421
        %v2401 = vunpack.c.h.b16 %v1421
        %v2402 = vunpack.c.l.b16 %v1422
        %v2403 = vunpack.c.h.b16 %v1422
        %v2404 = vunpack.c.l.b16 %v1423
        %v2405 = vunpack.c.h.b16 %v1423
        %v2406 = vunpack.c.l.b16 %v1424
        %v2407 = vunpack.c.h.b16 %v1424
        %v2408 = vunpack.c.l.b16 %v1425
        %v2409 = vunpack.c.h.b16 %v1425
        %v2410 = vunpack.c.l.b16 %v1426
        %v2411 = vunpack.c.h.b16 %v1426
        %v2412 = vunpack.c.l.b16 %v1427
        %v2413 = vunpack.c.h.b16 %v1427
        %v2414 = vunpack.c.l.b16 %v1428
        %v2415 = vunpack.c.h.b16 %v1428
        %v2416 = vunpack.c.l.b16 %v1429
        %v2417 = vunpack.c.h.b16 %v1429
        %v2418 = vunpack.c.l.b16 %v1430
        %v2419 = vunpack.c.h.b16 %v1430
        %v2420 = vunpack.c.l.b16 %v1431
        %v2421 = vunpack.c.h.b16 %v1431
        %v2422 = vunpack.c.l.b16 %v1432
        %v2423 = vunpack.c.h.b16 %v1432
        %v2424 = vunpack.c.l.b16 %v1433
        %v2425 = vunpack.c.h.b16 %v1433
        %v2426 = vunpack.c.l.b16 %v1434
        %v2427 = vunpack.c.h.b16 %v1434
        %v2428 = vunpack.c.l.b16 %v1435
        %v2429 = vunpack.c.h.b16 %v1435
        %v2430 = vunpack.c.l.b16 %v1436
        %v2431 = vunpack.c.h.b16 %v1436
        %v2432 = vunpack.c.l.b16 %v1437
        %v2433 = vunpack.c.h.b16 %v1437
        %v2434 = vunpack.c.l.b16 %v1438
        %v2435 = vunpack.c.h.b16 %v1438
        %v2436 = vunpack.c.l.b16 %v1439
        %v2437 = vunpack.c.h.b16 %v1439
        %v2438 = vunpack.c.l.b16 %v1440
        %v2439 = vunpack.c.h.b16 %v1440
        %v2440 = vunpack.c.l.b16 %v1441
        %v2441 = vunpack.c.h.b16 %v1441
        %v2442 = vunpack.c.l.b16 %v1442
        %v2443 = vunpack.c.h.b16 %v1442
        %v2444 = vunpack.c.l.b16 %v1443
        %v2445 = vunpack.c.h.b16 %v1443
        %v2446 = vunpack.c.l.b16 %v1444
        %v2447 = vunpack.c.h.b16 %v1444
        %v2448 = vunpack.c.l.b16 %v1445
        %v2449 = vunpack.c.h.b16 %v1445
        %v2450 = vunpack.c.l.b16 %v1446
        %v2451 = vunpack.c.h.b16 %v1446
        %v2452 = vunpack.c.l.b16 %v1447
        %v2453 = vunpack.c.h.b16 %v1447
        %v2454 = vunpack.c.l.b16 %v1448
        %v2455 = vunpack.c.h.b16 %v1448
        %v2456 = vunpack.c.l.b16 %v1449
        %v2457 = vunpack.c.h.b16 %v1449
        %v2458 = vunpack.c.l.b16 %v1450
        %v2459 = vunpack.c.h.b16 %v1450
        %v2460 = vunpack.c.l.b16 %v1451
        %v2461 = vunpack.c.h.b16 %v1451
        %v2462 = vunpack.c.l.b16 %v1452
        %v2463 = vunpack.c.h.b16 %v1452
        %v2464 = vunpack.c.l.b16 %v1453
        %v2465 = vunpack.c.h.b16 %v1453
        %v2466 = vunpack.c.l.b16 %v1454
        %v2467 = vunpack.c.h.b16 %v1454
        %v2468 = vunpack.c.l.b16 %v1455
        %v2469 = vunpack.c.h.b16 %v1455
        %v2470 = vunpack.c.l.b16 %v1456
        %v2471 = vunpack.c.h.b16 %v1456
        %v2472 = vunpack.c.l.b16 %v1457
        %v2473 = vunpack.c.h.b16 %v1457
        %v2474 = vunpack.c.l.b16 %v1458
        %v2475 = vunpack.c.h.b16 %v1458
        %v2476 = vunpack.c.l.b16 %v1459
        %v2477 = vunpack.c.h.b16 %v1459
        %v2478 = vunpack.c.l.b16 %v1460
        %v2479 = vunpack.c.h.b16 %v1460
        %v2480 = vunpack.c.l.b16 %v1461
        %v2481 = vunpack.c.h.b16 %v1461
        %v2482 = vunpack.c.l.b16 %v1462
        %v2483 = vunpack.c.h.b16 %v1462
        %v2484 = vunpack.c.l.b16 %v1463
        %v2485 = vunpack.c.h.b16 %v1463
        %v2486 = vunpack.c.l.b16 %v1464
        %v2487 = vunpack.c.h.b16 %v1464
        %v2488 = vunpack.c.l.b16 %v1465
        %v2489 = vunpack.c.h.b16 %v1465
        %v2490 = vunpack.c.l.b16 %v1466
        %v2491 = vunpack.c.h.b16 %v1466
        %v2492 = vunpack.c.l.b16 %v1467
        %v2493 = vunpack.c.h.b16 %v1467
        %v2494 = vunpack.c.l.b16 %v1468
        %v2495 = vunpack.c.h.b16 %v1468
        %v2496 = vunpack.c.l.b16 %v1469
        %v2497 = vunpack.c.h.b16 %v1469
        %v2498 = vunpack.c.l.b16 %v1470
        %v2499 = vunpack.c.h.b16 %v1470
        %v2500 = vunpack.c.l.b16 %v1471
        %v2501 = vunpack.c.h.b16 %v1471
        %v2502 = vunpack.c.l.b16 %v1472
        %v2503 = vunpack.c.h.b16 %v1472
        %v2504 = vunpack.c.l.b16 %v1473
        %v2505 = vunpack.c.h.b16 %v1473
        %v2506 = vunpack.c.l.b16 %v1474
        %v2507 = vunpack.c.h.b16 %v1474
        %v2508 = vunpack.c.l.b16 %v1475
        %v2509 = vunpack.c.h.b16 %v1475
        %v2510 = vunpack.c.l.b16 %v1476
        %v2511 = vunpack.c.h.b16 %v1476
        %v2512 = vunpack.c.l.b16 %v1477
        %v2513 = vunpack.c.h.b16 %v1477
        %v2514 = vunpack.c.l.b16 %v1478
        %v2515 = vunpack.c.h.b16 %v1478
        %v2516 = vunpack.c.l.b16 %v1479
        %v2517 = vunpack.c.h.b16 %v1479
        %v2518 = vunpack.c.l.b16 %v1480
        %v2519 = vunpack.c.h.b16 %v1480
        %v2520 = vunpack.c.l.b16 %v1481
        %v2521 = vunpack.c.h.b16 %v1481
        %v2522 = vunpack.c.l.b16 %v1482
        %v2523 = vunpack.c.h.b16 %v1482
        %v2524 = vunpack.c.l.b16 %v1483
        %v2525 = vunpack.c.h.b16 %v1483
        %v2526 = vunpack.c.l.b16 %v1484
        %v2527 = vunpack.c.h.b16 %v1484
        %v2528 = vunpack.c.l.b16 %v1485
        %v2529 = vunpack.c.h.b16 %v1485
        %v2530 = vunpack.c.l.b16 %v1486
        %v2531 = vunpack.c.h.b16 %v1486
        %v2532 = vunpack.c.l.b16 %v1487
        %v2533 = vunpack.c.h.b16 %v1487
        %v2534 = vunpack.c.l.b16 %v1488
        %v2535 = vunpack.c.h.b16 %v1488
        %v2536 = vunpack.c.l.b16 %v1489
        %v2537 = vunpack.c.h.b16 %v1489
        %v2538 = vunpack.c.l.b16 %v1490
        %v2539 = vunpack.c.h.b16 %v1490
        %v2540 = vunpack.c.l.b16 %v1491
        %v2541 = vunpack.c.h.b16 %v1491
        %v2542 = vunpack.c.l.b16 %v1492
        %v2543 = vunpack.c.h.b16 %v1492
        %v2544 = vunpack.c.l.b16 %v1493
        %v2545 = vunpack.c.h.b16 %v1493
        %v2546 = vunpack.c.l.b16 %v1494
        %v2547 = vunpack.c.h.b16 %v1494
        %v2548 = vunpack.c.l.b16 %v1495
        %v2549 = vunpack.c.h.b16 %v1495
        %v2550 = vpack.c.b16 %v2042, %v2038
        %v2551 = vpack.c.b16 %v2043, %v2039
        %v2552 = vpack.c.b16 %v2044, %v2040
        %v2553 = vpack.c.b16 %v2045, %v2041
        %v2554 = vpack.c.b16 %v2050, %v2046
        %v2555 = vpack.c.b16 %v2051, %v2047
        %v2556 = vpack.c.b16 %v2052, %v2048
        %v2557 = vpack.c.b16 %v2053, %v2049
        %v2558 = vpack.c.b16 %v2058, %v2054
        %v2559 = vpack.c.b16 %v2059, %v2055
        %v2560 = vpack.c.b16 %v2060, %v2056
        %v2561 = vpack.c.b16 %v2061, %v2057
        %v2562 = vpack.c.b16 %v2066, %v2062
        %v2563 = vpack.c.b16 %v2067, %v2063
        %v2564 = vpack.c.b16 %v2068, %v2064
        %v2565 = vpack.c.b16 %v2069, %v2065
        %v2566 = vpack.c.b16 %v2074, %v2070
        %v2567 = vpack.c.b16 %v2075, %v2071
        %v2568 = vpack.c.b16 %v2076, %v2072
        %v2569 = vpack.c.b16 %v2077, %v2073
        %v2570 = vpack.c.b16 %v2082, %v2078
        %v2571 = vpack.c.b16 %v2083, %v2079
        %v2572 = vpack.c.b16 %v2084, %v2080
        %v2573 = vpack.c.b16 %v2085, %v2081
        %v2574 = vpack.c.b16 %v2090, %v2086
        %v2575 = vpack.c.b16 %v2091, %v2087
        %v2576 = vpack.c.b16 %v2092, %v2088
        %v2577 = vpack.c.b16 %v2093, %v2089
        %v2578 = vpack.c.b16 %v2098, %v2094
        %v2579 = vpack.c.b16 %v2099, %v2095
        %v2580 = vpack.c.b16 %v2100, %v2096
        %v2581 = vpack.c.b16 %v2101, %v2097
        %v2582 = vpack.c.b16 %v2106, %v2102
        %v2583 = vpack.c.b16 %v2107, %v2103
        %v2584 = vpack.c.b16 %v2108, %v2104
        %v2585 = vpack.c.b16 %v2109, %v2105
        %v2586 = vpack.c.b16 %v2114, %v2110
        %v2587 = vpack.c.b16 %v2115, %v2111
        %v2588 = vpack.c.b16 %v2116, %v2112
        %v2589 = vpack.c.b16 %v2117, %v2113
        %v2590 = vpack.c.b16 %v2122, %v2118
        %v2591 = vpack.c.b16 %v2123, %v2119
        %v2592 = vpack.c.b16 %v2124, %v2120
        %v2593 = vpack.c.b16 %v2125, %v2121
        %v2594 = vpack.c.b16 %v2130, %v2126
        %v2595 = vpack.c.b16 %v2131, %v2127
        %v2596 = vpack.c.b16 %v2132, %v2128
        %v2597 = vpack.c.b16 %v2133, %v2129
        %v2598 = vpack.c.b16 %v2138, %v2134
        %v2599 = vpack.c.b16 %v2139, %v2135
        %v2600 = vpack.c.b16 %v2140, %v2136
        %v2601 = vpack.c.b16 %v2141, %v2137
        %v2602 = vpack.c.b16 %v2146, %v2142
        %v2603 = vpack.c.b16 %v2147, %v2143
        %v2604 = vpack.c.b16 %v2148, %v2144
        %v2605 = vpack.c.b16 %v2149, %v2145
        %v2606 = vpack.c.b16 %v2154, %v2150
        %v2607 = vpack.c.b16 %v2155, %v2151
        %v2608 = vpack.c.b16 %v2156, %v2152
        %v2609 = vpack.c.b16 %v2157, %v2153
        %v2610 = vpack.c.b16 %v2162, %v2158
        %v2611 = vpack.c.b16 %v2163, %v2159
        %v2612 = vpack.c.b16 %v2164, %v2160
        %v2613 = vpack.c.b16 %v2165, %v2161
        %v2614 = vpack.c.b16 %v2170, %v2166
        %v2615 = vpack.c.b16 %v2171, %v2167
        %v2616 = vpack.c.b16 %v2172, %v2168
        %v2617 = vpack.c.b16 %v2173, %v2169
        %v2618 = vpack.c.b16 %v2178, %v2174
        %v2619 = vpack.c.b16 %v2179, %v2175
        %v2620 = vpack.c.b16 %v2180, %v2176
        %v2621 = vpack.c.b16 %v2181, %v2177
        %v2622 = vpack.c.b16 %v2186, %v2182
        %v2623 = vpack.c.b16 %v2187, %v2183
        %v2624 = vpack.c.b16 %v2188, %v2184
        %v2625 = vpack.c.b16 %v2189, %v2185
        %v2626 = vpack.c.b16 %v2194, %v2190
        %v2627 = vpack.c.b16 %v2195, %v2191
        %v2628 = vpack.c.b16 %v2196, %v2192
        %v2629 = vpack.c.b16 %v2197, %v2193
        %v2630 = vpack.c.b16 %v2202, %v2198
        %v2631 = vpack.c.b16 %v2203, %v2199
        %v2632 = vpack.c.b16 %v2204, %v2200
        %v2633 = vpack.c.b16 %v2205, %v2201
        %v2634 = vpack.c.b16 %v2210, %v2206
        %v2635 = vpack.c.b16 %v2211, %v2207
        %v2636 = vpack.c.b16 %v2212, %v2208
        %v2637 = vpack.c.b16 %v2213, %v2209
        %v2638 = vpack.c.b16 %v2218, %v2214
        %v2639 = vpack.c.b16 %v2219, %v2215
        %v2640 = vpack.c.b16 %v2220, %v2216
        %v2641 = vpack.c.b16 %v2221, %v2217
        %v2642 = vpack.c.b16 %v2226, %v2222
        %v2643 = vpack.c.b16 %v2227, %v2223
        %v2644 = vpack.c.b16 %v2228, %v2224
        %v2645 = vpack.c.b16 %v2229, %v2225
        %v2646 = vpack.c.b16 %v2234, %v2230
        %v2647 = vpack.c.b16 %v2235, %v2231
        %v2648 = vpack.c.b16 %v2236, %v2232
        %v2649 = vpack.c.b16 %v2237, %v2233
        %v2650 = vpack.c.b16 %v2242, %v2238
        %v2651 = vpack.c.b16 %v2243, %v2239
        %v2652 = vpack.c.b16 %v2244, %v2240
        %v2653 = vpack.c.b16 %v2245, %v2241
        %v2654 = vpack.c.b16 %v2250, %v2246
        %v2655 = vpack.c.b16 %v2251, %v2247
        %v2656 = vpack.c.b16 %v2252, %v2248
        %v2657 = vpack.c.b16 %v2253, %v2249
        %v2658 = vpack.c.b16 %v2258, %v2254
        %v2659 = vpack.c.b16 %v2259, %v2255
        %v2660 = vpack.c.b16 %v2260, %v2256
        %v2661 = vpack.c.b16 %v2261, %v2257
        %v2662 = vpack.c.b16 %v2266, %v2262
        %v2663 = vpack.c.b16 %v2267, %v2263
        %v2664 = vpack.c.b16 %v2268, %v2264
        %v2665 = vpack.c.b16 %v2269, %v2265
        %v2666 = vpack.c.b16 %v2274, %v2270
        %v2667 = vpack.c.b16 %v2275, %v2271
        %v2668 = vpack.c.b16 %v2276, %v2272
        %v2669 = vpack.c.b16 %v2277, %v2273
        %v2670 = vpack.c.b16 %v2282, %v2278
        %v2671 = vpack.c.b16 %v2283, %v2279
        %v2672 = vpack.c.b16 %v2284, %v2280
        %v2673 = vpack.c.b16 %v2285, %v2281
        %v2674 = vpack.c.b16 %v2290, %v2286
        %v2675 = vpack.c.b16 %v2291, %v2287
        %v2676 = vpack.c.b16 %v2292, %v2288
        %v2677 = vpack.c.b16 %v2293, %v2289
        %v2678 = vpack.c.b16 %v2298, %v2294
        %v2679 = vpack.c.b16 %v2299, %v2295
        %v2680 = vpack.c.b16 %v2300, %v2296
        %v2681 = vpack.c.b16 %v2301, %v2297
        %v2682 = vpack.c.b16 %v2306, %v2302
        %v2683 = vpack.c.b16 %v2307, %v2303
        %v2684 = vpack.c.b16 %v2308, %v2304
        %v2685 = vpack.c.b16 %v2309, %v2305
        %v2686 = vpack.c.b16 %v2314, %v2310
        %v2687 = vpack.c.b16 %v2315, %v2311
        %v2688 = vpack.c.b16 %v2316, %v2312
        %v2689 = vpack.c.b16 %v2317, %v2313
        %v2690 = vpack.c.b16 %v2322, %v2318
        %v2691 = vpack.c.b16 %v2323, %v2319
        %v2692 = vpack.c.b16 %v2324, %v2320
        %v2693 = vpack.c.b16 %v2325, %v2321
        %v2694 = vpack.c.b16 %v2330, %v2326
        %v2695 = vpack.c.b16 %v2331, %v2327
        %v2696 = vpack.c.b16 %v2332, %v2328
        %v2697 = vpack.c.b16 %v2333, %v2329
        %v2698 = vpack.c.b16 %v2338, %v2334
        %v2699 = vpack.c.b16 %v2339, %v2335
        %v2700 = vpack.c.b16 %v2340, %v2336
        %v2701 = vpack.c.b16 %v2341, %v2337
        %v2702 = vpack.c.b16 %v2346, %v2342
        %v2703 = vpack.c.b16 %v2347, %v2343
        %v2704 = vpack.c.b16 %v2348, %v2344
        %v2705 = vpack.c.b16 %v2349, %v2345
        %v2706 = vpack.c.b16 %v2354, %v2350
        %v2707 = vpack.c.b16 %v2355, %v2351
        %v2708 = vpack.c.b16 %v2356, %v2352
        %v2709 = vpack.c.b16 %v2357, %v2353
        %v2710 = vpack.c.b16 %v2362, %v2358
        %v2711 = vpack.c.b16 %v2363, %v2359
        %v2712 = vpack.c.b16 %v2364, %v2360
        %v2713 = vpack.c.b16 %v2365, %v2361
        %v2714 = vpack.c.b16 %v2370, %v2366
        %v2715 = vpack.c.b16 %v2371, %v2367
        %v2716 = vpack.c.b16 %v2372, %v2368
        %v2717 = vpack.c.b16 %v2373, %v2369
        %v2718 = vpack.c.b16 %v2378, %v2374
        %v2719 = vpack.c.b16 %v2379, %v2375
        %v2720 = vpack.c.b16 %v2380, %v2376
        %v2721 = vpack.c.b16 %v2381, %v2377
        %v2722 = vpack.c.b16 %v2386, %v2382
        %v2723 = vpack.c.b16 %v2387, %v2383
        %v2724 = vpack.c.b16 %v2388, %v2384
        %v2725 = vpack.c.b16 %v2389, %v2385
        %v2726 = vpack.c.b16 %v2394, %v2390
        %v2727 = vpack.c.b16 %v2395, %v2391
        %v2728 = vpack.c.b16 %v2396, %v2392
        %v2729 = vpack.c.b16 %v2397, %v2393
        %v2730 = vpack.c.b16 %v2402, %v2398
        %v2731 = vpack.c.b16 %v2403, %v2399
        %v2732 = vpack.c.b16 %v2404, %v2400
        %v2733 = vpack.c.b16 %v2405, %v2401
        %v2734 = vpack.c.b16 %v2410, %v2406
        %v2735 = vpack.c.b16 %v2411, %v2407
        %v2736 = vpack.c.b16 %v2412, %v2408
        %v2737 = vpack.c.b16 %v2413, %v2409
        %v2738 = vpack.c.b16 %v2418, %v2414
        %v2739 = vpack.c.b16 %v2419, %v2415
        %v2740 = vpack.c.b16 %v2420, %v2416
        %v2741 = vpack.c.b16 %v2421, %v2417
        %v2742 = vpack.c.b16 %v2426, %v2422
        %v2743 = vpack.c.b16 %v2427, %v2423
        %v2744 = vpack.c.b16 %v2428, %v2424
        %v2745 = vpack.c.b16 %v2429, %v2425
        %v2746 = vpack.c.b16 %v2434, %v2430
        %v2747 = vpack.c.b16 %v2435, %v2431
        %v2748 = vpack.c.b16 %v2436, %v2432
        %v2749 = vpack.c.b16 %v2437, %v2433
        %v2750 = vpack.c.b16 %v2442, %v2438
        %v2751 = vpack.c.b16 %v2443, %v2439
        %v2752 = vpack.c.b16 %v2444, %v2440
        %v2753 = vpack.c.b16 %v2445, %v2441
        %v2754 = vpack.c.b16 %v2450, %v2446
        %v2755 = vpack.c.b16 %v2451, %v2447
        %v2756 = vpack.c.b16 %v2452, %v2448
        %v2757 = vpack.c.b16 %v2453, %v2449
        %v2758 = vpack.c.b16 %v2458, %v2454
        %v2759 = vpack.c.b16 %v2459, %v2455
        %v2760 = vpack.c.b16 %v2460, %v2456
        %v2761 = vpack.c.b16 %v2461, %v2457
        %v2762 = vpack.c.b16 %v2466, %v2462
        %v2763 = vpack.c.b16 %v2467, %v2463
        %v2764 = vpack.c.b16 %v2468, %v2464
        %v2765 = vpack.c.b16 %v2469, %v2465
        %v2766 = vpack.c.b16 %v2474, %v2470
        %v2767 = vpack.c.b16 %v2475, %v2471
        %v2768 = vpack.c.b16 %v2476, %v2472
        %v2769 = vpack.c.b16 %v2477, %v2473
        %v2770 = vpack.c.b16 %v2482, %v2478
        %v2771 = vpack.c.b16 %v2483, %v2479
        %v2772 = vpack.c.b16 %v2484, %v2480
        %v2773 = vpack.c.b16 %v2485, %v2481
        %v2774 = vpack.c.b16 %v2490, %v2486
        %v2775 = vpack.c.b16 %v2491, %v2487
        %v2776 = vpack.c.b16 %v2492, %v2488
        %v2777 = vpack.c.b16 %v2493, %v2489
        %v2778 = vpack.c.b16 %v2498, %v2494
        %v2779 = vpack.c.b16 %v2499, %v2495
        %v2780 = vpack.c.b16 %v2500, %v2496
        %v2781 = vpack.c.b16 %v2501, %v2497
        %v2782 = vpack.c.b16 %v2506, %v2502
        %v2783 = vpack.c.b16 %v2507, %v2503
        %v2784 = vpack.c.b16 %v2508, %v2504
        %v2785 = vpack.c.b16 %v2509, %v2505
        %v2786 = vpack.c.b16 %v2514, %v2510
        %v2787 = vpack.c.b16 %v2515, %v2511
        %v2788 = vpack.c.b16 %v2516, %v2512
        %v2789 = vpack.c.b16 %v2517, %v2513
        %v2790 = vpack.c.b16 %v2522, %v2518
        %v2791 = vpack.c.b16 %v2523, %v2519
        %v2792 = vpack.c.b16 %v2524, %v2520
        %v2793 = vpack.c.b16 %v2525, %v2521
        %v2794 = vpack.c.b16 %v2530, %v2526
        %v2795 = vpack.c.b16 %v2531, %v2527
        %v2796 = vpack.c.b16 %v2532, %v2528
        %v2797 = vpack.c.b16 %v2533, %v2529
        %v2798 = vpack.c.b16 %v2538, %v2534
        %v2799 = vpack.c.b16 %v2539, %v2535
        %v2800 = vpack.c.b16 %v2540, %v2536
        %v2801 = vpack.c.b16 %v2541, %v2537
        %v2802 = vpack.c.b16 %v2546, %v2542
        %v2803 = vpack.c.b16 %v2547, %v2543
        %v2804 = vpack.c.b16 %v2548, %v2544
        %v2805 = vpack.c.b16 %v2549, %v2545
        %3062 = vmatpush.bf16.msra.mxu0 %v2578
        %3063 = vmatpush.bf16.msra.mxu0 %v2574
        %3064 = vmatpush.bf16.msra.mxu0 %v2570
        %3065 = vmatpush.bf16.msra.mxu0 %v2566
        %3066 = vmatpush.bf16.msra.mxu0 %v2562
        %3067 = vmatpush.bf16.msra.mxu0 %v2558
        %3068 = vmatpush.bf16.msra.mxu0 %v2554
        %3069 = vmatpush.bf16.msra.mxu0 %v2550
        %3070 = vmatmul.bf16.gmra.mxu0 %v1176
        %v3071 = vpop.f32.mrf.mxu0
        %v3072 = vadd.f32 %v1596, %v3071
        %v3073 = vpop.f32.mrf.mxu0
        %v3074 = vadd.f32 %v1598, %v3073
        %3075 = vmatmul.bf16.gmra.mxu0 %v1184
        %v3076 = vpop.f32.mrf.mxu0
        %v3077 = vadd.f32 %v1601, %v3076
        %v3078 = vpop.f32.mrf.mxu0
        %v3079 = vadd.f32 %v1603, %v3078
        %3080 = vmatmul.bf16.gmra.mxu0 %v1192
        %v3081 = vpop.f32.mrf.mxu0
        %v3082 = vadd.f32 %v1606, %v3081
        %v3083 = vpop.f32.mrf.mxu0
        %v3084 = vadd.f32 %v1608, %v3083
        %3085 = vmatmul.bf16.gmra.mxu0 %v1200
        %v3086 = vpop.f32.mrf.mxu0
        %v3087 = vadd.f32 %v1611, %v3086
        %v3088 = vpop.f32.mrf.mxu0
        %v3089 = vadd.f32 %v1613, %v3088
        %3090 = vmatmul.bf16.gmra.mxu0 %v1208
        %v3091 = vpop.f32.mrf.mxu0
        %v3092 = vadd.f32 %v1616, %v3091
        %v3093 = vpop.f32.mrf.mxu0
        %v3094 = vadd.f32 %v1618, %v3093
        %3095 = vmatmul.bf16.gmra.mxu0 %v1216
        %v3096 = vpop.f32.mrf.mxu0
        %v3097 = vadd.f32 %v1621, %v3096
        %v3098 = vpop.f32.mrf.mxu0
        %v3099 = vadd.f32 %v1623, %v3098
        %3100 = vmatmul.bf16.gmra.mxu0 %v1224
        %v3101 = vpop.f32.mrf.mxu0
        %v3102 = vadd.f32 %v1626, %v3101
        %v3103 = vpop.f32.mrf.mxu0
        %v3104 = vadd.f32 %v1628, %v3103
        %3105 = vmatmul.bf16.gmra.mxu0 %v1232
        %v3106 = vpop.f32.mrf.mxu0
        %v3107 = vadd.f32 %v1631, %v3106
        %v3108 = vpop.f32.mrf.mxu0
        %v3109 = vadd.f32 %v1633, %v3108
        %3110 = vdwg.mxu0
        %3111 = vmatpush.bf16.msra.mxu0 %v2610
        %3112 = vmatpush.bf16.msra.mxu0 %v2606
        %3113 = vmatpush.bf16.msra.mxu0 %v2602
        %3114 = vmatpush.bf16.msra.mxu0 %v2598
        %3115 = vmatpush.bf16.msra.mxu0 %v2594
        %3116 = vmatpush.bf16.msra.mxu0 %v2590
        %3117 = vmatpush.bf16.msra.mxu0 %v2586
        %3118 = vmatpush.bf16.msra.mxu0 %v2582
        %3119 = vmatmul.bf16.gmra.mxu0 %v1177
        %v3120 = vpop.f32.mrf.mxu0
        %v3121 = vadd.f32 %v3072, %v3120
        %v3122 = vpop.f32.mrf.mxu0
        %v3123 = vadd.f32 %v3074, %v3122
        %3124 = vmatmul.bf16.gmra.mxu0 %v1185
        %v3125 = vpop.f32.mrf.mxu0
        %v3126 = vadd.f32 %v3077, %v3125
        %v3127 = vpop.f32.mrf.mxu0
        %v3128 = vadd.f32 %v3079, %v3127
        %3129 = vmatmul.bf16.gmra.mxu0 %v1193
        %v3130 = vpop.f32.mrf.mxu0
        %v3131 = vadd.f32 %v3082, %v3130
        %v3132 = vpop.f32.mrf.mxu0
        %v3133 = vadd.f32 %v3084, %v3132
        %3134 = vmatmul.bf16.gmra.mxu0 %v1201
        %v3135 = vpop.f32.mrf.mxu0
        %v3136 = vadd.f32 %v3087, %v3135
        %v3137 = vpop.f32.mrf.mxu0
        %v3138 = vadd.f32 %v3089, %v3137
        %3139 = vmatmul.bf16.gmra.mxu0 %v1209
        %v3140 = vpop.f32.mrf.mxu0
        %v3141 = vadd.f32 %v3092, %v3140
        %v3142 = vpop.f32.mrf.mxu0
        %v3143 = vadd.f32 %v3094, %v3142
        %3144 = vmatmul.bf16.gmra.mxu0 %v1217
        %v3145 = vpop.f32.mrf.mxu0
        %v3146 = vadd.f32 %v3097, %v3145
        %v3147 = vpop.f32.mrf.mxu0
        %v3148 = vadd.f32 %v3099, %v3147
        %3149 = vmatmul.bf16.gmra.mxu0 %v1225
        %v3150 = vpop.f32.mrf.mxu0
        %v3151 = vadd.f32 %v3102, %v3150
        %v3152 = vpop.f32.mrf.mxu0
        %v3153 = vadd.f32 %v3104, %v3152
        %3154 = vmatmul.bf16.gmra.mxu0 %v1233
        %v3155 = vpop.f32.mrf.mxu0
        %v3156 = vadd.f32 %v3107, %v3155
        %v3157 = vpop.f32.mrf.mxu0
        %v3158 = vadd.f32 %v3109, %v3157
        %3159 = vdwg.mxu0
        %3160 = vmatpush.bf16.msra.mxu0 %v2642
        %3161 = vmatpush.bf16.msra.mxu0 %v2638
        %3162 = vmatpush.bf16.msra.mxu0 %v2634
        %3163 = vmatpush.bf16.msra.mxu0 %v2630
        %3164 = vmatpush.bf16.msra.mxu0 %v2626
        %3165 = vmatpush.bf16.msra.mxu0 %v2622
        %3166 = vmatpush.bf16.msra.mxu0 %v2618
        %3167 = vmatpush.bf16.msra.mxu0 %v2614
        %3168 = vmatmul.bf16.gmra.mxu0 %v1178
        %v3169 = vpop.f32.mrf.mxu0
        %v3170 = vadd.f32 %v3121, %v3169
        %v3171 = vpop.f32.mrf.mxu0
        %v3172 = vadd.f32 %v3123, %v3171
        %3173 = vmatmul.bf16.gmra.mxu0 %v1186
        %v3174 = vpop.f32.mrf.mxu0
        %v3175 = vadd.f32 %v3126, %v3174
        %v3176 = vpop.f32.mrf.mxu0
        %v3177 = vadd.f32 %v3128, %v3176
        %3178 = vmatmul.bf16.gmra.mxu0 %v1194
        %v3179 = vpop.f32.mrf.mxu0
        %v3180 = vadd.f32 %v3131, %v3179
        %v3181 = vpop.f32.mrf.mxu0
        %v3182 = vadd.f32 %v3133, %v3181
        %3183 = vmatmul.bf16.gmra.mxu0 %v1202
        %v3184 = vpop.f32.mrf.mxu0
        %v3185 = vadd.f32 %v3136, %v3184
        %v3186 = vpop.f32.mrf.mxu0
        %v3187 = vadd.f32 %v3138, %v3186
        %3188 = vmatmul.bf16.gmra.mxu0 %v1210
        %v3189 = vpop.f32.mrf.mxu0
        %v3190 = vadd.f32 %v3141, %v3189
        %v3191 = vpop.f32.mrf.mxu0
        %v3192 = vadd.f32 %v3143, %v3191
        %3193 = vmatmul.bf16.gmra.mxu0 %v1218
        %v3194 = vpop.f32.mrf.mxu0
        %v3195 = vadd.f32 %v3146, %v3194
        %v3196 = vpop.f32.mrf.mxu0
        %v3197 = vadd.f32 %v3148, %v3196
        %3198 = vmatmul.bf16.gmra.mxu0 %v1226
        %v3199 = vpop.f32.mrf.mxu0
        %v3200 = vadd.f32 %v3151, %v3199
        %v3201 = vpop.f32.mrf.mxu0
        %v3202 = vadd.f32 %v3153, %v3201
        %3203 = vmatmul.bf16.gmra.mxu0 %v1234
        %v3204 = vpop.f32.mrf.mxu0
        %v3205 = vadd.f32 %v3156, %v3204
        %v3206 = vpop.f32.mrf.mxu0
        %v3207 = vadd.f32 %v3158, %v3206
        %3208 = vdwg.mxu0
        %3209 = vmatpush.bf16.msra.mxu0 %v2674
        %3210 = vmatpush.bf16.msra.mxu0 %v2670
        %3211 = vmatpush.bf16.msra.mxu0 %v2666
        %3212 = vmatpush.bf16.msra.mxu0 %v2662
        %3213 = vmatpush.bf16.msra.mxu0 %v2658
        %3214 = vmatpush.bf16.msra.mxu0 %v2654
        %3215 = vmatpush.bf16.msra.mxu0 %v2650
        %3216 = vmatpush.bf16.msra.mxu0 %v2646
        %3217 = vmatmul.bf16.gmra.mxu0 %v1179
        %v3218 = vpop.f32.mrf.mxu0
        %v3219 = vadd.f32 %v3170, %v3218
        %v3220 = vpop.f32.mrf.mxu0
        %v3221 = vadd.f32 %v3172, %v3220
        %3222 = vmatmul.bf16.gmra.mxu0 %v1187
        %v3223 = vpop.f32.mrf.mxu0
        %v3224 = vadd.f32 %v3175, %v3223
        %v3225 = vpop.f32.mrf.mxu0
        %v3226 = vadd.f32 %v3177, %v3225
        %3227 = vmatmul.bf16.gmra.mxu0 %v1195
        %v3228 = vpop.f32.mrf.mxu0
        %v3229 = vadd.f32 %v3180, %v3228
        %v3230 = vpop.f32.mrf.mxu0
        %v3231 = vadd.f32 %v3182, %v3230
        %3232 = vmatmul.bf16.gmra.mxu0 %v1203
        %v3233 = vpop.f32.mrf.mxu0
        %v3234 = vadd.f32 %v3185, %v3233
        %v3235 = vpop.f32.mrf.mxu0
        %v3236 = vadd.f32 %v3187, %v3235
        %3237 = vmatmul.bf16.gmra.mxu0 %v1211
        %v3238 = vpop.f32.mrf.mxu0
        %v3239 = vadd.f32 %v3190, %v3238
        %v3240 = vpop.f32.mrf.mxu0
        %v3241 = vadd.f32 %v3192, %v3240
        %3242 = vmatmul.bf16.gmra.mxu0 %v1219
        %v3243 = vpop.f32.mrf.mxu0
        %v3244 = vadd.f32 %v3195, %v3243
        %v3245 = vpop.f32.mrf.mxu0
        %v3246 = vadd.f32 %v3197, %v3245
        %3247 = vmatmul.bf16.gmra.mxu0 %v1227
        %v3248 = vpop.f32.mrf.mxu0
        %v3249 = vadd.f32 %v3200, %v3248
        %v3250 = vpop.f32.mrf.mxu0
        %v3251 = vadd.f32 %v3202, %v3250
        %3252 = vmatmul.bf16.gmra.mxu0 %v1235
        %v3253 = vpop.f32.mrf.mxu0
        %v3254 = vadd.f32 %v3205, %v3253
        %v3255 = vpop.f32.mrf.mxu0
        %v3256 = vadd.f32 %v3207, %v3255
        %3257 = vdwg.mxu0
        %3258 = vmatpush.bf16.msra.mxu0 %v2706
        %3259 = vmatpush.bf16.msra.mxu0 %v2702
        %3260 = vmatpush.bf16.msra.mxu0 %v2698
        %3261 = vmatpush.bf16.msra.mxu0 %v2694
        %3262 = vmatpush.bf16.msra.mxu0 %v2690
        %3263 = vmatpush.bf16.msra.mxu0 %v2686
        %3264 = vmatpush.bf16.msra.mxu0 %v2682
        %3265 = vmatpush.bf16.msra.mxu0 %v2678
        %3266 = vmatmul.bf16.gmra.mxu0 %v1180
        %v3267 = vpop.f32.mrf.mxu0
        %v3268 = vadd.f32 %v3219, %v3267
        %v3269 = vpop.f32.mrf.mxu0
        %v3270 = vadd.f32 %v3221, %v3269
        %3271 = vmatmul.bf16.gmra.mxu0 %v1188
        %v3272 = vpop.f32.mrf.mxu0
        %v3273 = vadd.f32 %v3224, %v3272
        %v3274 = vpop.f32.mrf.mxu0
        %v3275 = vadd.f32 %v3226, %v3274
        %3276 = vmatmul.bf16.gmra.mxu0 %v1196
        %v3277 = vpop.f32.mrf.mxu0
        %v3278 = vadd.f32 %v3229, %v3277
        %v3279 = vpop.f32.mrf.mxu0
        %v3280 = vadd.f32 %v3231, %v3279
        %3281 = vmatmul.bf16.gmra.mxu0 %v1204
        %v3282 = vpop.f32.mrf.mxu0
        %v3283 = vadd.f32 %v3234, %v3282
        %v3284 = vpop.f32.mrf.mxu0
        %v3285 = vadd.f32 %v3236, %v3284
        %3286 = vmatmul.bf16.gmra.mxu0 %v1212
        %v3287 = vpop.f32.mrf.mxu0
        %v3288 = vadd.f32 %v3239, %v3287
        %v3289 = vpop.f32.mrf.mxu0
        %v3290 = vadd.f32 %v3241, %v3289
        %3291 = vmatmul.bf16.gmra.mxu0 %v1220
        %v3292 = vpop.f32.mrf.mxu0
        %v3293 = vadd.f32 %v3244, %v3292
        %v3294 = vpop.f32.mrf.mxu0
        %v3295 = vadd.f32 %v3246, %v3294
        %3296 = vmatmul.bf16.gmra.mxu0 %v1228
        %v3297 = vpop.f32.mrf.mxu0
        %v3298 = vadd.f32 %v3249, %v3297
        %v3299 = vpop.f32.mrf.mxu0
        %v3300 = vadd.f32 %v3251, %v3299
        %3301 = vmatmul.bf16.gmra.mxu0 %v1236
        %v3302 = vpop.f32.mrf.mxu0
        %v3303 = vadd.f32 %v3254, %v3302
        %v3304 = vpop.f32.mrf.mxu0
        %v3305 = vadd.f32 %v3256, %v3304
        %3306 = vdwg.mxu0
        %3307 = vmatpush.bf16.msra.mxu0 %v2738
        %3308 = vmatpush.bf16.msra.mxu0 %v2734
        %3309 = vmatpush.bf16.msra.mxu0 %v2730
        %3310 = vmatpush.bf16.msra.mxu0 %v2726
        %3311 = vmatpush.bf16.msra.mxu0 %v2722
        %3312 = vmatpush.bf16.msra.mxu0 %v2718
        %3313 = vmatpush.bf16.msra.mxu0 %v2714
        %3314 = vmatpush.bf16.msra.mxu0 %v2710
        %3315 = vmatmul.bf16.gmra.mxu0 %v1181
        %v3316 = vpop.f32.mrf.mxu0
        %v3317 = vadd.f32 %v3268, %v3316
        %v3318 = vpop.f32.mrf.mxu0
        %v3319 = vadd.f32 %v3270, %v3318
        %3320 = vmatmul.bf16.gmra.mxu0 %v1189
        %v3321 = vpop.f32.mrf.mxu0
        %v3322 = vadd.f32 %v3273, %v3321
        %v3323 = vpop.f32.mrf.mxu0
        %v3324 = vadd.f32 %v3275, %v3323
        %3325 = vmatmul.bf16.gmra.mxu0 %v1197
        %v3326 = vpop.f32.mrf.mxu0
        %v3327 = vadd.f32 %v3278, %v3326
        %v3328 = vpop.f32.mrf.mxu0
        %v3329 = vadd.f32 %v3280, %v3328
        %3330 = vmatmul.bf16.gmra.mxu0 %v1205
        %v3331 = vpop.f32.mrf.mxu0
        %v3332 = vadd.f32 %v3283, %v3331
        %v3333 = vpop.f32.mrf.mxu0
        %v3334 = vadd.f32 %v3285, %v3333
        %3335 = vmatmul.bf16.gmra.mxu0 %v1213
        %v3336 = vpop.f32.mrf.mxu0
        %v3337 = vadd.f32 %v3288, %v3336
        %v3338 = vpop.f32.mrf.mxu0
        %v3339 = vadd.f32 %v3290, %v3338
        %3340 = vmatmul.bf16.gmra.mxu0 %v1221
        %v3341 = vpop.f32.mrf.mxu0
        %v3342 = vadd.f32 %v3293, %v3341
        %v3343 = vpop.f32.mrf.mxu0
        %v3344 = vadd.f32 %v3295, %v3343
        %3345 = vmatmul.bf16.gmra.mxu0 %v1229
        %v3346 = vpop.f32.mrf.mxu0
        %v3347 = vadd.f32 %v3298, %v3346
        %v3348 = vpop.f32.mrf.mxu0
        %v3349 = vadd.f32 %v3300, %v3348
        %3350 = vmatmul.bf16.gmra.mxu0 %v1237
        %v3351 = vpop.f32.mrf.mxu0
        %v3352 = vadd.f32 %v3303, %v3351
        %v3353 = vpop.f32.mrf.mxu0
        %v3354 = vadd.f32 %v3305, %v3353
        %3355 = vdwg.mxu0
        %3356 = vmatpush.bf16.msra.mxu0 %v2770
        %3357 = vmatpush.bf16.msra.mxu0 %v2766
        %3358 = vmatpush.bf16.msra.mxu0 %v2762
        %3359 = vmatpush.bf16.msra.mxu0 %v2758
        %3360 = vmatpush.bf16.msra.mxu0 %v2754
        %3361 = vmatpush.bf16.msra.mxu0 %v2750
        %3362 = vmatpush.bf16.msra.mxu0 %v2746
        %3363 = vmatpush.bf16.msra.mxu0 %v2742
        %3364 = vmatmul.bf16.gmra.mxu0 %v1182
        %v3365 = vpop.f32.mrf.mxu0
        %v3366 = vadd.f32 %v3317, %v3365
        %v3367 = vpop.f32.mrf.mxu0
        %v3368 = vadd.f32 %v3319, %v3367
        %3369 = vmatmul.bf16.gmra.mxu0 %v1190
        %v3370 = vpop.f32.mrf.mxu0
        %v3371 = vadd.f32 %v3322, %v3370
        %v3372 = vpop.f32.mrf.mxu0
        %v3373 = vadd.f32 %v3324, %v3372
        %3374 = vmatmul.bf16.gmra.mxu0 %v1198
        %v3375 = vpop.f32.mrf.mxu0
        %v3376 = vadd.f32 %v3327, %v3375
        %v3377 = vpop.f32.mrf.mxu0
        %v3378 = vadd.f32 %v3329, %v3377
        %3379 = vmatmul.bf16.gmra.mxu0 %v1206
        %v3380 = vpop.f32.mrf.mxu0
        %v3381 = vadd.f32 %v3332, %v3380
        %v3382 = vpop.f32.mrf.mxu0
        %v3383 = vadd.f32 %v3334, %v3382
        %3384 = vmatmul.bf16.gmra.mxu0 %v1214
        %v3385 = vpop.f32.mrf.mxu0
        %v3386 = vadd.f32 %v3337, %v3385
        %v3387 = vpop.f32.mrf.mxu0
        %v3388 = vadd.f32 %v3339, %v3387
        %3389 = vmatmul.bf16.gmra.mxu0 %v1222
        %v3390 = vpop.f32.mrf.mxu0
        %v3391 = vadd.f32 %v3342, %v3390
        %v3392 = vpop.f32.mrf.mxu0
        %v3393 = vadd.f32 %v3344, %v3392
        %3394 = vmatmul.bf16.gmra.mxu0 %v1230
        %v3395 = vpop.f32.mrf.mxu0
        %v3396 = vadd.f32 %v3347, %v3395
        %v3397 = vpop.f32.mrf.mxu0
        %v3398 = vadd.f32 %v3349, %v3397
        %3399 = vmatmul.bf16.gmra.mxu0 %v1238
        %v3400 = vpop.f32.mrf.mxu0
        %v3401 = vadd.f32 %v3352, %v3400
        %v3402 = vpop.f32.mrf.mxu0
        %v3403 = vadd.f32 %v3354, %v3402
        %3404 = vdwg.mxu0
        %3405 = vmatpush.bf16.msra.mxu0 %v2802
        %3406 = vmatpush.bf16.msra.mxu0 %v2798
        %3407 = vmatpush.bf16.msra.mxu0 %v2794
        %3408 = vmatpush.bf16.msra.mxu0 %v2790
        %3409 = vmatpush.bf16.msra.mxu0 %v2786
        %3410 = vmatpush.bf16.msra.mxu0 %v2782
        %3411 = vmatpush.bf16.msra.mxu0 %v2778
        %3412 = vmatpush.bf16.msra.mxu0 %v2774
        %3413 = vmatmul.bf16.gmra.mxu0 %v1183
        %v3414 = vpop.f32.mrf.mxu0
        %v3415 = vadd.f32 %v3366, %v3414
        %v3416 = vpop.f32.mrf.mxu0
        %v3417 = vadd.f32 %v3368, %v3416
        %3418 = vmatmul.bf16.gmra.mxu0 %v1191
        %v3419 = vpop.f32.mrf.mxu0
        %v3420 = vadd.f32 %v3371, %v3419
        %v3421 = vpop.f32.mrf.mxu0
        %v3422 = vadd.f32 %v3373, %v3421
        %3423 = vmatmul.bf16.gmra.mxu0 %v1199
        %v3424 = vpop.f32.mrf.mxu0
        %v3425 = vadd.f32 %v3376, %v3424
        %v3426 = vpop.f32.mrf.mxu0
        %v3427 = vadd.f32 %v3378, %v3426
        %3428 = vmatmul.bf16.gmra.mxu0 %v1207
        %v3429 = vpop.f32.mrf.mxu0
        %v3430 = vadd.f32 %v3381, %v3429
        %v3431 = vpop.f32.mrf.mxu0
        %v3432 = vadd.f32 %v3383, %v3431
        %3433 = vmatmul.bf16.gmra.mxu0 %v1215
        %v3434 = vpop.f32.mrf.mxu0
        %v3435 = vadd.f32 %v3386, %v3434
        %v3436 = vpop.f32.mrf.mxu0
        %v3437 = vadd.f32 %v3388, %v3436
        %3438 = vmatmul.bf16.gmra.mxu0 %v1223
        %v3439 = vpop.f32.mrf.mxu0
        %v3440 = vadd.f32 %v3391, %v3439
        %v3441 = vpop.f32.mrf.mxu0
        %v3442 = vadd.f32 %v3393, %v3441
        %3443 = vmatmul.bf16.gmra.mxu0 %v1231
        %v3444 = vpop.f32.mrf.mxu0
        %v3445 = vadd.f32 %v3396, %v3444
        %v3446 = vpop.f32.mrf.mxu0
        %v3447 = vadd.f32 %v3398, %v3446
        %3448 = vmatmul.bf16.gmra.mxu0 %v1239
        %v3449 = vpop.f32.mrf.mxu0
        %v3450 = vadd.f32 %v3401, %v3449
        %v3451 = vpop.f32.mrf.mxu0
        %v3452 = vadd.f32 %v3403, %v3451
        %3453 = vdwg.mxu0
        %3454 = vmatpush.bf16.msra.mxu0 %v2579
        %3455 = vmatpush.bf16.msra.mxu0 %v2575
        %3456 = vmatpush.bf16.msra.mxu0 %v2571
        %3457 = vmatpush.bf16.msra.mxu0 %v2567
        %3458 = vmatpush.bf16.msra.mxu0 %v2563
        %3459 = vmatpush.bf16.msra.mxu0 %v2559
        %3460 = vmatpush.bf16.msra.mxu0 %v2555
        %3461 = vmatpush.bf16.msra.mxu0 %v2551
        %3462 = vmatmul.bf16.gmra.mxu0 %v1176
        %v3463 = vpop.f32.mrf.mxu0
        %v3464 = vadd.f32 %v1645, %v3463
        %v3465 = vpop.f32.mrf.mxu0
        %v3466 = vadd.f32 %v1647, %v3465
        %3467 = vmatmul.bf16.gmra.mxu0 %v1184
        %v3468 = vpop.f32.mrf.mxu0
        %v3469 = vadd.f32 %v1650, %v3468
        %v3470 = vpop.f32.mrf.mxu0
        %v3471 = vadd.f32 %v1652, %v3470
        %3472 = vmatmul.bf16.gmra.mxu0 %v1192
        %v3473 = vpop.f32.mrf.mxu0
        %v3474 = vadd.f32 %v1655, %v3473
        %v3475 = vpop.f32.mrf.mxu0
        %v3476 = vadd.f32 %v1657, %v3475
        %3477 = vmatmul.bf16.gmra.mxu0 %v1200
        %v3478 = vpop.f32.mrf.mxu0
        %v3479 = vadd.f32 %v1660, %v3478
        %v3480 = vpop.f32.mrf.mxu0
        %v3481 = vadd.f32 %v1662, %v3480
        %3482 = vmatmul.bf16.gmra.mxu0 %v1208
        %v3483 = vpop.f32.mrf.mxu0
        %v3484 = vadd.f32 %v1665, %v3483
        %v3485 = vpop.f32.mrf.mxu0
        %v3486 = vadd.f32 %v1667, %v3485
        %3487 = vmatmul.bf16.gmra.mxu0 %v1216
        %v3488 = vpop.f32.mrf.mxu0
        %v3489 = vadd.f32 %v1670, %v3488
        %v3490 = vpop.f32.mrf.mxu0
        %v3491 = vadd.f32 %v1672, %v3490
        %3492 = vmatmul.bf16.gmra.mxu0 %v1224
        %v3493 = vpop.f32.mrf.mxu0
        %v3494 = vadd.f32 %v1675, %v3493
        %v3495 = vpop.f32.mrf.mxu0
        %v3496 = vadd.f32 %v1677, %v3495
        %3497 = vmatmul.bf16.gmra.mxu0 %v1232
        %v3498 = vpop.f32.mrf.mxu0
        %v3499 = vadd.f32 %v1680, %v3498
        %v3500 = vpop.f32.mrf.mxu0
        %v3501 = vadd.f32 %v1682, %v3500
        %3502 = vdwg.mxu0
        %3503 = vmatpush.bf16.msra.mxu0 %v2611
        %3504 = vmatpush.bf16.msra.mxu0 %v2607
        %3505 = vmatpush.bf16.msra.mxu0 %v2603
        %3506 = vmatpush.bf16.msra.mxu0 %v2599
        %3507 = vmatpush.bf16.msra.mxu0 %v2595
        %3508 = vmatpush.bf16.msra.mxu0 %v2591
        %3509 = vmatpush.bf16.msra.mxu0 %v2587
        %3510 = vmatpush.bf16.msra.mxu0 %v2583
        %3511 = vmatmul.bf16.gmra.mxu0 %v1177
        %v3512 = vpop.f32.mrf.mxu0
        %v3513 = vadd.f32 %v3464, %v3512
        %v3514 = vpop.f32.mrf.mxu0
        %v3515 = vadd.f32 %v3466, %v3514
        %3516 = vmatmul.bf16.gmra.mxu0 %v1185
        %v3517 = vpop.f32.mrf.mxu0
        %v3518 = vadd.f32 %v3469, %v3517
        %v3519 = vpop.f32.mrf.mxu0
        %v3520 = vadd.f32 %v3471, %v3519
        %3521 = vmatmul.bf16.gmra.mxu0 %v1193
        %v3522 = vpop.f32.mrf.mxu0
        %v3523 = vadd.f32 %v3474, %v3522
        %v3524 = vpop.f32.mrf.mxu0
        %v3525 = vadd.f32 %v3476, %v3524
        %3526 = vmatmul.bf16.gmra.mxu0 %v1201
        %v3527 = vpop.f32.mrf.mxu0
        %v3528 = vadd.f32 %v3479, %v3527
        %v3529 = vpop.f32.mrf.mxu0
        %v3530 = vadd.f32 %v3481, %v3529
        %3531 = vmatmul.bf16.gmra.mxu0 %v1209
        %v3532 = vpop.f32.mrf.mxu0
        %v3533 = vadd.f32 %v3484, %v3532
        %v3534 = vpop.f32.mrf.mxu0
        %v3535 = vadd.f32 %v3486, %v3534
        %3536 = vmatmul.bf16.gmra.mxu0 %v1217
        %v3537 = vpop.f32.mrf.mxu0
        %v3538 = vadd.f32 %v3489, %v3537
        %v3539 = vpop.f32.mrf.mxu0
        %v3540 = vadd.f32 %v3491, %v3539
        %3541 = vmatmul.bf16.gmra.mxu0 %v1225
        %v3542 = vpop.f32.mrf.mxu0
        %v3543 = vadd.f32 %v3494, %v3542
        %v3544 = vpop.f32.mrf.mxu0
        %v3545 = vadd.f32 %v3496, %v3544
        %3546 = vmatmul.bf16.gmra.mxu0 %v1233
        %v3547 = vpop.f32.mrf.mxu0
        %v3548 = vadd.f32 %v3499, %v3547
        %v3549 = vpop.f32.mrf.mxu0
        %v3550 = vadd.f32 %v3501, %v3549
        %3551 = vdwg.mxu0
        %3552 = vmatpush.bf16.msra.mxu0 %v2643
        %3553 = vmatpush.bf16.msra.mxu0 %v2639
        %3554 = vmatpush.bf16.msra.mxu0 %v2635
        %3555 = vmatpush.bf16.msra.mxu0 %v2631
        %3556 = vmatpush.bf16.msra.mxu0 %v2627
        %3557 = vmatpush.bf16.msra.mxu0 %v2623
        %3558 = vmatpush.bf16.msra.mxu0 %v2619
        %3559 = vmatpush.bf16.msra.mxu0 %v2615
        %3560 = vmatmul.bf16.gmra.mxu0 %v1178
        %v3561 = vpop.f32.mrf.mxu0
        %v3562 = vadd.f32 %v3513, %v3561
        %v3563 = vpop.f32.mrf.mxu0
        %v3564 = vadd.f32 %v3515, %v3563
        %3565 = vmatmul.bf16.gmra.mxu0 %v1186
        %v3566 = vpop.f32.mrf.mxu0
        %v3567 = vadd.f32 %v3518, %v3566
        %v3568 = vpop.f32.mrf.mxu0
        %v3569 = vadd.f32 %v3520, %v3568
        %3570 = vmatmul.bf16.gmra.mxu0 %v1194
        %v3571 = vpop.f32.mrf.mxu0
        %v3572 = vadd.f32 %v3523, %v3571
        %v3573 = vpop.f32.mrf.mxu0
        %v3574 = vadd.f32 %v3525, %v3573
        %3575 = vmatmul.bf16.gmra.mxu0 %v1202
        %v3576 = vpop.f32.mrf.mxu0
        %v3577 = vadd.f32 %v3528, %v3576
        %v3578 = vpop.f32.mrf.mxu0
        %v3579 = vadd.f32 %v3530, %v3578
        %3580 = vmatmul.bf16.gmra.mxu0 %v1210
        %v3581 = vpop.f32.mrf.mxu0
        %v3582 = vadd.f32 %v3533, %v3581
        %v3583 = vpop.f32.mrf.mxu0
        %v3584 = vadd.f32 %v3535, %v3583
        %3585 = vmatmul.bf16.gmra.mxu0 %v1218
        %v3586 = vpop.f32.mrf.mxu0
        %v3587 = vadd.f32 %v3538, %v3586
        %v3588 = vpop.f32.mrf.mxu0
        %v3589 = vadd.f32 %v3540, %v3588
        %3590 = vmatmul.bf16.gmra.mxu0 %v1226
        %v3591 = vpop.f32.mrf.mxu0
        %v3592 = vadd.f32 %v3543, %v3591
        %v3593 = vpop.f32.mrf.mxu0
        %v3594 = vadd.f32 %v3545, %v3593
        %3595 = vmatmul.bf16.gmra.mxu0 %v1234
        %v3596 = vpop.f32.mrf.mxu0
        %v3597 = vadd.f32 %v3548, %v3596
        %v3598 = vpop.f32.mrf.mxu0
        %v3599 = vadd.f32 %v3550, %v3598
        %3600 = vdwg.mxu0
        %3601 = vmatpush.bf16.msra.mxu0 %v2675
        %3602 = vmatpush.bf16.msra.mxu0 %v2671
        %3603 = vmatpush.bf16.msra.mxu0 %v2667
        %3604 = vmatpush.bf16.msra.mxu0 %v2663
        %3605 = vmatpush.bf16.msra.mxu0 %v2659
        %3606 = vmatpush.bf16.msra.mxu0 %v2655
        %3607 = vmatpush.bf16.msra.mxu0 %v2651
        %3608 = vmatpush.bf16.msra.mxu0 %v2647
        %3609 = vmatmul.bf16.gmra.mxu0 %v1179
        %v3610 = vpop.f32.mrf.mxu0
        %v3611 = vadd.f32 %v3562, %v3610
        %v3612 = vpop.f32.mrf.mxu0
        %v3613 = vadd.f32 %v3564, %v3612
        %3614 = vmatmul.bf16.gmra.mxu0 %v1187
        %v3615 = vpop.f32.mrf.mxu0
        %v3616 = vadd.f32 %v3567, %v3615
        %v3617 = vpop.f32.mrf.mxu0
        %v3618 = vadd.f32 %v3569, %v3617
        %3619 = vmatmul.bf16.gmra.mxu0 %v1195
        %v3620 = vpop.f32.mrf.mxu0
        %v3621 = vadd.f32 %v3572, %v3620
        %v3622 = vpop.f32.mrf.mxu0
        %v3623 = vadd.f32 %v3574, %v3622
        %3624 = vmatmul.bf16.gmra.mxu0 %v1203
        %v3625 = vpop.f32.mrf.mxu0
        %v3626 = vadd.f32 %v3577, %v3625
        %v3627 = vpop.f32.mrf.mxu0
        %v3628 = vadd.f32 %v3579, %v3627
        %3629 = vmatmul.bf16.gmra.mxu0 %v1211
        %v3630 = vpop.f32.mrf.mxu0
        %v3631 = vadd.f32 %v3582, %v3630
        %v3632 = vpop.f32.mrf.mxu0
        %v3633 = vadd.f32 %v3584, %v3632
        %3634 = vmatmul.bf16.gmra.mxu0 %v1219
        %v3635 = vpop.f32.mrf.mxu0
        %v3636 = vadd.f32 %v3587, %v3635
        %v3637 = vpop.f32.mrf.mxu0
        %v3638 = vadd.f32 %v3589, %v3637
        %3639 = vmatmul.bf16.gmra.mxu0 %v1227
        %v3640 = vpop.f32.mrf.mxu0
        %v3641 = vadd.f32 %v3592, %v3640
        %v3642 = vpop.f32.mrf.mxu0
        %v3643 = vadd.f32 %v3594, %v3642
        %3644 = vmatmul.bf16.gmra.mxu0 %v1235
        %v3645 = vpop.f32.mrf.mxu0
        %v3646 = vadd.f32 %v3597, %v3645
        %v3647 = vpop.f32.mrf.mxu0
        %v3648 = vadd.f32 %v3599, %v3647
        %3649 = vdwg.mxu0
        %3650 = vmatpush.bf16.msra.mxu0 %v2707
        %3651 = vmatpush.bf16.msra.mxu0 %v2703
        %3652 = vmatpush.bf16.msra.mxu0 %v2699
        %3653 = vmatpush.bf16.msra.mxu0 %v2695
        %3654 = vmatpush.bf16.msra.mxu0 %v2691
        %3655 = vmatpush.bf16.msra.mxu0 %v2687
        %3656 = vmatpush.bf16.msra.mxu0 %v2683
        %3657 = vmatpush.bf16.msra.mxu0 %v2679
        %3658 = vmatmul.bf16.gmra.mxu0 %v1180
        %v3659 = vpop.f32.mrf.mxu0
        %v3660 = vadd.f32 %v3611, %v3659
        %v3661 = vpop.f32.mrf.mxu0
        %v3662 = vadd.f32 %v3613, %v3661
        %3663 = vmatmul.bf16.gmra.mxu0 %v1188
        %v3664 = vpop.f32.mrf.mxu0
        %v3665 = vadd.f32 %v3616, %v3664
        %v3666 = vpop.f32.mrf.mxu0
        %v3667 = vadd.f32 %v3618, %v3666
        %3668 = vmatmul.bf16.gmra.mxu0 %v1196
        %v3669 = vpop.f32.mrf.mxu0
        %v3670 = vadd.f32 %v3621, %v3669
        %v3671 = vpop.f32.mrf.mxu0
        %v3672 = vadd.f32 %v3623, %v3671
        %3673 = vmatmul.bf16.gmra.mxu0 %v1204
        %v3674 = vpop.f32.mrf.mxu0
        %v3675 = vadd.f32 %v3626, %v3674
        %v3676 = vpop.f32.mrf.mxu0
        %v3677 = vadd.f32 %v3628, %v3676
        %3678 = vmatmul.bf16.gmra.mxu0 %v1212
        %v3679 = vpop.f32.mrf.mxu0
        %v3680 = vadd.f32 %v3631, %v3679
        %v3681 = vpop.f32.mrf.mxu0
        %v3682 = vadd.f32 %v3633, %v3681
        %3683 = vmatmul.bf16.gmra.mxu0 %v1220
        %v3684 = vpop.f32.mrf.mxu0
        %v3685 = vadd.f32 %v3636, %v3684
        %v3686 = vpop.f32.mrf.mxu0
        %v3687 = vadd.f32 %v3638, %v3686
        %3688 = vmatmul.bf16.gmra.mxu0 %v1228
        %v3689 = vpop.f32.mrf.mxu0
        %v3690 = vadd.f32 %v3641, %v3689
        %v3691 = vpop.f32.mrf.mxu0
        %v3692 = vadd.f32 %v3643, %v3691
        %3693 = vmatmul.bf16.gmra.mxu0 %v1236
        %v3694 = vpop.f32.mrf.mxu0
        %v3695 = vadd.f32 %v3646, %v3694
        %v3696 = vpop.f32.mrf.mxu0
        %v3697 = vadd.f32 %v3648, %v3696
        %3698 = vdwg.mxu0
        %3699 = vmatpush.bf16.msra.mxu0 %v2739
        %3700 = vmatpush.bf16.msra.mxu0 %v2735
        %3701 = vmatpush.bf16.msra.mxu0 %v2731
        %3702 = vmatpush.bf16.msra.mxu0 %v2727
        %3703 = vmatpush.bf16.msra.mxu0 %v2723
        %3704 = vmatpush.bf16.msra.mxu0 %v2719
        %3705 = vmatpush.bf16.msra.mxu0 %v2715
        %3706 = vmatpush.bf16.msra.mxu0 %v2711
        %3707 = vmatmul.bf16.gmra.mxu0 %v1181
        %v3708 = vpop.f32.mrf.mxu0
        %v3709 = vadd.f32 %v3660, %v3708
        %v3710 = vpop.f32.mrf.mxu0
        %v3711 = vadd.f32 %v3662, %v3710
        %3712 = vmatmul.bf16.gmra.mxu0 %v1189
        %v3713 = vpop.f32.mrf.mxu0
        %v3714 = vadd.f32 %v3665, %v3713
        %v3715 = vpop.f32.mrf.mxu0
        %v3716 = vadd.f32 %v3667, %v3715
        %3717 = vmatmul.bf16.gmra.mxu0 %v1197
        %v3718 = vpop.f32.mrf.mxu0
        %v3719 = vadd.f32 %v3670, %v3718
        %v3720 = vpop.f32.mrf.mxu0
        %v3721 = vadd.f32 %v3672, %v3720
        %3722 = vmatmul.bf16.gmra.mxu0 %v1205
        %v3723 = vpop.f32.mrf.mxu0
        %v3724 = vadd.f32 %v3675, %v3723
        %v3725 = vpop.f32.mrf.mxu0
        %v3726 = vadd.f32 %v3677, %v3725
        %3727 = vmatmul.bf16.gmra.mxu0 %v1213
        %v3728 = vpop.f32.mrf.mxu0
        %v3729 = vadd.f32 %v3680, %v3728
        %v3730 = vpop.f32.mrf.mxu0
        %v3731 = vadd.f32 %v3682, %v3730
        %3732 = vmatmul.bf16.gmra.mxu0 %v1221
        %v3733 = vpop.f32.mrf.mxu0
        %v3734 = vadd.f32 %v3685, %v3733
        %v3735 = vpop.f32.mrf.mxu0
        %v3736 = vadd.f32 %v3687, %v3735
        %3737 = vmatmul.bf16.gmra.mxu0 %v1229
        %v3738 = vpop.f32.mrf.mxu0
        %v3739 = vadd.f32 %v3690, %v3738
        %v3740 = vpop.f32.mrf.mxu0
        %v3741 = vadd.f32 %v3692, %v3740
        %3742 = vmatmul.bf16.gmra.mxu0 %v1237
        %v3743 = vpop.f32.mrf.mxu0
        %v3744 = vadd.f32 %v3695, %v3743
        %v3745 = vpop.f32.mrf.mxu0
        %v3746 = vadd.f32 %v3697, %v3745
        %3747 = vdwg.mxu0
        %3748 = vmatpush.bf16.msra.mxu0 %v2771
        %3749 = vmatpush.bf16.msra.mxu0 %v2767
        %3750 = vmatpush.bf16.msra.mxu0 %v2763
        %3751 = vmatpush.bf16.msra.mxu0 %v2759
        %3752 = vmatpush.bf16.msra.mxu0 %v2755
        %3753 = vmatpush.bf16.msra.mxu0 %v2751
        %3754 = vmatpush.bf16.msra.mxu0 %v2747
        %3755 = vmatpush.bf16.msra.mxu0 %v2743
        %3756 = vmatmul.bf16.gmra.mxu0 %v1182
        %v3757 = vpop.f32.mrf.mxu0
        %v3758 = vadd.f32 %v3709, %v3757
        %v3759 = vpop.f32.mrf.mxu0
        %v3760 = vadd.f32 %v3711, %v3759
        %3761 = vmatmul.bf16.gmra.mxu0 %v1190
        %v3762 = vpop.f32.mrf.mxu0
        %v3763 = vadd.f32 %v3714, %v3762
        %v3764 = vpop.f32.mrf.mxu0
        %v3765 = vadd.f32 %v3716, %v3764
        %3766 = vmatmul.bf16.gmra.mxu0 %v1198
        %v3767 = vpop.f32.mrf.mxu0
        %v3768 = vadd.f32 %v3719, %v3767
        %v3769 = vpop.f32.mrf.mxu0
        %v3770 = vadd.f32 %v3721, %v3769
        %3771 = vmatmul.bf16.gmra.mxu0 %v1206
        %v3772 = vpop.f32.mrf.mxu0
        %v3773 = vadd.f32 %v3724, %v3772
        %v3774 = vpop.f32.mrf.mxu0
        %v3775 = vadd.f32 %v3726, %v3774
        %3776 = vmatmul.bf16.gmra.mxu0 %v1214
        %v3777 = vpop.f32.mrf.mxu0
        %v3778 = vadd.f32 %v3729, %v3777
        %v3779 = vpop.f32.mrf.mxu0
        %v3780 = vadd.f32 %v3731, %v3779
        %3781 = vmatmul.bf16.gmra.mxu0 %v1222
        %v3782 = vpop.f32.mrf.mxu0
        %v3783 = vadd.f32 %v3734, %v3782
        %v3784 = vpop.f32.mrf.mxu0
        %v3785 = vadd.f32 %v3736, %v3784
        %3786 = vmatmul.bf16.gmra.mxu0 %v1230
        %v3787 = vpop.f32.mrf.mxu0
        %v3788 = vadd.f32 %v3739, %v3787
        %v3789 = vpop.f32.mrf.mxu0
        %v3790 = vadd.f32 %v3741, %v3789
        %3791 = vmatmul.bf16.gmra.mxu0 %v1238
        %v3792 = vpop.f32.mrf.mxu0
        %v3793 = vadd.f32 %v3744, %v3792
        %v3794 = vpop.f32.mrf.mxu0
        %v3795 = vadd.f32 %v3746, %v3794
        %3796 = vdwg.mxu0
        %3797 = vmatpush.bf16.msra.mxu0 %v2803
        %3798 = vmatpush.bf16.msra.mxu0 %v2799
        %3799 = vmatpush.bf16.msra.mxu0 %v2795
        %3800 = vmatpush.bf16.msra.mxu0 %v2791
        %3801 = vmatpush.bf16.msra.mxu0 %v2787
        %3802 = vmatpush.bf16.msra.mxu0 %v2783
        %3803 = vmatpush.bf16.msra.mxu0 %v2779
        %3804 = vmatpush.bf16.msra.mxu0 %v2775
        %3805 = vmatmul.bf16.gmra.mxu0 %v1183
        %v3806 = vpop.f32.mrf.mxu0
        %v3807 = vadd.f32 %v3758, %v3806
        %v3808 = vpop.f32.mrf.mxu0
        %v3809 = vadd.f32 %v3760, %v3808
        %3810 = vmatmul.bf16.gmra.mxu0 %v1191
        %v3811 = vpop.f32.mrf.mxu0
        %v3812 = vadd.f32 %v3763, %v3811
        %v3813 = vpop.f32.mrf.mxu0
        %v3814 = vadd.f32 %v3765, %v3813
        %3815 = vmatmul.bf16.gmra.mxu0 %v1199
        %v3816 = vpop.f32.mrf.mxu0
        %v3817 = vadd.f32 %v3768, %v3816
        %v3818 = vpop.f32.mrf.mxu0
        %v3819 = vadd.f32 %v3770, %v3818
        %3820 = vmatmul.bf16.gmra.mxu0 %v1207
        %v3821 = vpop.f32.mrf.mxu0
        %v3822 = vadd.f32 %v3773, %v3821
        %v3823 = vpop.f32.mrf.mxu0
        %v3824 = vadd.f32 %v3775, %v3823
        %3825 = vmatmul.bf16.gmra.mxu0 %v1215
        %v3826 = vpop.f32.mrf.mxu0
        %v3827 = vadd.f32 %v3778, %v3826
        %v3828 = vpop.f32.mrf.mxu0
        %v3829 = vadd.f32 %v3780, %v3828
        %3830 = vmatmul.bf16.gmra.mxu0 %v1223
        %v3831 = vpop.f32.mrf.mxu0
        %v3832 = vadd.f32 %v3783, %v3831
        %v3833 = vpop.f32.mrf.mxu0
        %v3834 = vadd.f32 %v3785, %v3833
        %3835 = vmatmul.bf16.gmra.mxu0 %v1231
        %v3836 = vpop.f32.mrf.mxu0
        %v3837 = vadd.f32 %v3788, %v3836
        %v3838 = vpop.f32.mrf.mxu0
        %v3839 = vadd.f32 %v3790, %v3838
        %3840 = vmatmul.bf16.gmra.mxu0 %v1239
        %v3841 = vpop.f32.mrf.mxu0
        %v3842 = vadd.f32 %v3793, %v3841
        %v3843 = vpop.f32.mrf.mxu0
        %v3844 = vadd.f32 %v3795, %v3843
        %3845 = vdwg.mxu0
        %3846 = vmatpush.bf16.msra.mxu0 %v2580
        %3847 = vmatpush.bf16.msra.mxu0 %v2576
        %3848 = vmatpush.bf16.msra.mxu0 %v2572
        %3849 = vmatpush.bf16.msra.mxu0 %v2568
        %3850 = vmatpush.bf16.msra.mxu0 %v2564
        %3851 = vmatpush.bf16.msra.mxu0 %v2560
        %3852 = vmatpush.bf16.msra.mxu0 %v2556
        %3853 = vmatpush.bf16.msra.mxu0 %v2552
        %3854 = vmatmul.bf16.gmra.mxu0 %v1176
        %v3855 = vpop.f32.mrf.mxu0
        %v3856 = vadd.f32 %v1694, %v3855
        %v3857 = vpop.f32.mrf.mxu0
        %v3858 = vadd.f32 %v1696, %v3857
        %3859 = vmatmul.bf16.gmra.mxu0 %v1184
        %v3860 = vpop.f32.mrf.mxu0
        %v3861 = vadd.f32 %v1699, %v3860
        %v3862 = vpop.f32.mrf.mxu0
        %v3863 = vadd.f32 %v1701, %v3862
        %3864 = vmatmul.bf16.gmra.mxu0 %v1192
        %v3865 = vpop.f32.mrf.mxu0
        %v3866 = vadd.f32 %v1704, %v3865
        %v3867 = vpop.f32.mrf.mxu0
        %v3868 = vadd.f32 %v1706, %v3867
        %3869 = vmatmul.bf16.gmra.mxu0 %v1200
        %v3870 = vpop.f32.mrf.mxu0
        %v3871 = vadd.f32 %v1709, %v3870
        %v3872 = vpop.f32.mrf.mxu0
        %v3873 = vadd.f32 %v1711, %v3872
        %3874 = vmatmul.bf16.gmra.mxu0 %v1208
        %v3875 = vpop.f32.mrf.mxu0
        %v3876 = vadd.f32 %v1714, %v3875
        %v3877 = vpop.f32.mrf.mxu0
        %v3878 = vadd.f32 %v1716, %v3877
        %3879 = vmatmul.bf16.gmra.mxu0 %v1216
        %v3880 = vpop.f32.mrf.mxu0
        %v3881 = vadd.f32 %v1719, %v3880
        %v3882 = vpop.f32.mrf.mxu0
        %v3883 = vadd.f32 %v1721, %v3882
        %3884 = vmatmul.bf16.gmra.mxu0 %v1224
        %v3885 = vpop.f32.mrf.mxu0
        %v3886 = vadd.f32 %v1724, %v3885
        %v3887 = vpop.f32.mrf.mxu0
        %v3888 = vadd.f32 %v1726, %v3887
        %3889 = vmatmul.bf16.gmra.mxu0 %v1232
        %v3890 = vpop.f32.mrf.mxu0
        %v3891 = vadd.f32 %v1729, %v3890
        %v3892 = vpop.f32.mrf.mxu0
        %v3893 = vadd.f32 %v1731, %v3892
        %3894 = vdwg.mxu0
        %3895 = vmatpush.bf16.msra.mxu0 %v2612
        %3896 = vmatpush.bf16.msra.mxu0 %v2608
        %3897 = vmatpush.bf16.msra.mxu0 %v2604
        %3898 = vmatpush.bf16.msra.mxu0 %v2600
        %3899 = vmatpush.bf16.msra.mxu0 %v2596
        %3900 = vmatpush.bf16.msra.mxu0 %v2592
        %3901 = vmatpush.bf16.msra.mxu0 %v2588
        %3902 = vmatpush.bf16.msra.mxu0 %v2584
        %3903 = vmatmul.bf16.gmra.mxu0 %v1177
        %v3904 = vpop.f32.mrf.mxu0
        %v3905 = vadd.f32 %v3856, %v3904
        %v3906 = vpop.f32.mrf.mxu0
        %v3907 = vadd.f32 %v3858, %v3906
        %3908 = vmatmul.bf16.gmra.mxu0 %v1185
        %v3909 = vpop.f32.mrf.mxu0
        %v3910 = vadd.f32 %v3861, %v3909
        %v3911 = vpop.f32.mrf.mxu0
        %v3912 = vadd.f32 %v3863, %v3911
        %3913 = vmatmul.bf16.gmra.mxu0 %v1193
        %v3914 = vpop.f32.mrf.mxu0
        %v3915 = vadd.f32 %v3866, %v3914
        %v3916 = vpop.f32.mrf.mxu0
        %v3917 = vadd.f32 %v3868, %v3916
        %3918 = vmatmul.bf16.gmra.mxu0 %v1201
        %v3919 = vpop.f32.mrf.mxu0
        %v3920 = vadd.f32 %v3871, %v3919
        %v3921 = vpop.f32.mrf.mxu0
        %v3922 = vadd.f32 %v3873, %v3921
        %3923 = vmatmul.bf16.gmra.mxu0 %v1209
        %v3924 = vpop.f32.mrf.mxu0
        %v3925 = vadd.f32 %v3876, %v3924
        %v3926 = vpop.f32.mrf.mxu0
        %v3927 = vadd.f32 %v3878, %v3926
        %3928 = vmatmul.bf16.gmra.mxu0 %v1217
        %v3929 = vpop.f32.mrf.mxu0
        %v3930 = vadd.f32 %v3881, %v3929
        %v3931 = vpop.f32.mrf.mxu0
        %v3932 = vadd.f32 %v3883, %v3931
        %3933 = vmatmul.bf16.gmra.mxu0 %v1225
        %v3934 = vpop.f32.mrf.mxu0
        %v3935 = vadd.f32 %v3886, %v3934
        %v3936 = vpop.f32.mrf.mxu0
        %v3937 = vadd.f32 %v3888, %v3936
        %3938 = vmatmul.bf16.gmra.mxu0 %v1233
        %v3939 = vpop.f32.mrf.mxu0
        %v3940 = vadd.f32 %v3891, %v3939
        %v3941 = vpop.f32.mrf.mxu0
        %v3942 = vadd.f32 %v3893, %v3941
        %3943 = vdwg.mxu0
        %3944 = vmatpush.bf16.msra.mxu0 %v2644
        %3945 = vmatpush.bf16.msra.mxu0 %v2640
        %3946 = vmatpush.bf16.msra.mxu0 %v2636
        %3947 = vmatpush.bf16.msra.mxu0 %v2632
        %3948 = vmatpush.bf16.msra.mxu0 %v2628
        %3949 = vmatpush.bf16.msra.mxu0 %v2624
        %3950 = vmatpush.bf16.msra.mxu0 %v2620
        %3951 = vmatpush.bf16.msra.mxu0 %v2616
        %3952 = vmatmul.bf16.gmra.mxu0 %v1178
        %v3953 = vpop.f32.mrf.mxu0
        %v3954 = vadd.f32 %v3905, %v3953
        %v3955 = vpop.f32.mrf.mxu0
        %v3956 = vadd.f32 %v3907, %v3955
        %3957 = vmatmul.bf16.gmra.mxu0 %v1186
        %v3958 = vpop.f32.mrf.mxu0
        %v3959 = vadd.f32 %v3910, %v3958
        %v3960 = vpop.f32.mrf.mxu0
        %v3961 = vadd.f32 %v3912, %v3960
        %3962 = vmatmul.bf16.gmra.mxu0 %v1194
        %v3963 = vpop.f32.mrf.mxu0
        %v3964 = vadd.f32 %v3915, %v3963
        %v3965 = vpop.f32.mrf.mxu0
        %v3966 = vadd.f32 %v3917, %v3965
        %3967 = vmatmul.bf16.gmra.mxu0 %v1202
        %v3968 = vpop.f32.mrf.mxu0
        %v3969 = vadd.f32 %v3920, %v3968
        %v3970 = vpop.f32.mrf.mxu0
        %v3971 = vadd.f32 %v3922, %v3970
        %3972 = vmatmul.bf16.gmra.mxu0 %v1210
        %v3973 = vpop.f32.mrf.mxu0
        %v3974 = vadd.f32 %v3925, %v3973
        %v3975 = vpop.f32.mrf.mxu0
        %v3976 = vadd.f32 %v3927, %v3975
        %3977 = vmatmul.bf16.gmra.mxu0 %v1218
        %v3978 = vpop.f32.mrf.mxu0
        %v3979 = vadd.f32 %v3930, %v3978
        %v3980 = vpop.f32.mrf.mxu0
        %v3981 = vadd.f32 %v3932, %v3980
        %3982 = vmatmul.bf16.gmra.mxu0 %v1226
        %v3983 = vpop.f32.mrf.mxu0
        %v3984 = vadd.f32 %v3935, %v3983
        %v3985 = vpop.f32.mrf.mxu0
        %v3986 = vadd.f32 %v3937, %v3985
        %3987 = vmatmul.bf16.gmra.mxu0 %v1234
        %v3988 = vpop.f32.mrf.mxu0
        %v3989 = vadd.f32 %v3940, %v3988
        %v3990 = vpop.f32.mrf.mxu0
        %v3991 = vadd.f32 %v3942, %v3990
        %3992 = vdwg.mxu0
        %3993 = vmatpush.bf16.msra.mxu0 %v2676
        %3994 = vmatpush.bf16.msra.mxu0 %v2672
        %3995 = vmatpush.bf16.msra.mxu0 %v2668
        %3996 = vmatpush.bf16.msra.mxu0 %v2664
        %3997 = vmatpush.bf16.msra.mxu0 %v2660
        %3998 = vmatpush.bf16.msra.mxu0 %v2656
        %3999 = vmatpush.bf16.msra.mxu0 %v2652
        %4000 = vmatpush.bf16.msra.mxu0 %v2648
        %4001 = vmatmul.bf16.gmra.mxu0 %v1179
        %v4002 = vpop.f32.mrf.mxu0
        %v4003 = vadd.f32 %v3954, %v4002
        %v4004 = vpop.f32.mrf.mxu0
        %v4005 = vadd.f32 %v3956, %v4004
        %4006 = vmatmul.bf16.gmra.mxu0 %v1187
        %v4007 = vpop.f32.mrf.mxu0
        %v4008 = vadd.f32 %v3959, %v4007
        %v4009 = vpop.f32.mrf.mxu0
        %v4010 = vadd.f32 %v3961, %v4009
        %4011 = vmatmul.bf16.gmra.mxu0 %v1195
        %v4012 = vpop.f32.mrf.mxu0
        %v4013 = vadd.f32 %v3964, %v4012
        %v4014 = vpop.f32.mrf.mxu0
        %v4015 = vadd.f32 %v3966, %v4014
        %4016 = vmatmul.bf16.gmra.mxu0 %v1203
        %v4017 = vpop.f32.mrf.mxu0
        %v4018 = vadd.f32 %v3969, %v4017
        %v4019 = vpop.f32.mrf.mxu0
        %v4020 = vadd.f32 %v3971, %v4019
        %4021 = vmatmul.bf16.gmra.mxu0 %v1211
        %v4022 = vpop.f32.mrf.mxu0
        %v4023 = vadd.f32 %v3974, %v4022
        %v4024 = vpop.f32.mrf.mxu0
        %v4025 = vadd.f32 %v3976, %v4024
        %4026 = vmatmul.bf16.gmra.mxu0 %v1219
        %v4027 = vpop.f32.mrf.mxu0
        %v4028 = vadd.f32 %v3979, %v4027
        %v4029 = vpop.f32.mrf.mxu0
        %v4030 = vadd.f32 %v3981, %v4029
        %4031 = vmatmul.bf16.gmra.mxu0 %v1227
        %v4032 = vpop.f32.mrf.mxu0
        %v4033 = vadd.f32 %v3984, %v4032
        %v4034 = vpop.f32.mrf.mxu0
        %v4035 = vadd.f32 %v3986, %v4034
        %4036 = vmatmul.bf16.gmra.mxu0 %v1235
        %v4037 = vpop.f32.mrf.mxu0
        %v4038 = vadd.f32 %v3989, %v4037
        %v4039 = vpop.f32.mrf.mxu0
        %v4040 = vadd.f32 %v3991, %v4039
        %4041 = vdwg.mxu0
        %4042 = vmatpush.bf16.msra.mxu0 %v2708
        %4043 = vmatpush.bf16.msra.mxu0 %v2704
        %4044 = vmatpush.bf16.msra.mxu0 %v2700
        %4045 = vmatpush.bf16.msra.mxu0 %v2696
        %4046 = vmatpush.bf16.msra.mxu0 %v2692
        %4047 = vmatpush.bf16.msra.mxu0 %v2688
        %4048 = vmatpush.bf16.msra.mxu0 %v2684
        %4049 = vmatpush.bf16.msra.mxu0 %v2680
        %4050 = vmatmul.bf16.gmra.mxu0 %v1180
        %v4051 = vpop.f32.mrf.mxu0
        %v4052 = vadd.f32 %v4003, %v4051
        %v4053 = vpop.f32.mrf.mxu0
        %v4054 = vadd.f32 %v4005, %v4053
        %4055 = vmatmul.bf16.gmra.mxu0 %v1188
        %v4056 = vpop.f32.mrf.mxu0
        %v4057 = vadd.f32 %v4008, %v4056
        %v4058 = vpop.f32.mrf.mxu0
        %v4059 = vadd.f32 %v4010, %v4058
        %4060 = vmatmul.bf16.gmra.mxu0 %v1196
        %v4061 = vpop.f32.mrf.mxu0
        %v4062 = vadd.f32 %v4013, %v4061
        %v4063 = vpop.f32.mrf.mxu0
        %v4064 = vadd.f32 %v4015, %v4063
        %4065 = vmatmul.bf16.gmra.mxu0 %v1204
        %v4066 = vpop.f32.mrf.mxu0
        %v4067 = vadd.f32 %v4018, %v4066
        %v4068 = vpop.f32.mrf.mxu0
        %v4069 = vadd.f32 %v4020, %v4068
        %4070 = vmatmul.bf16.gmra.mxu0 %v1212
        %v4071 = vpop.f32.mrf.mxu0
        %v4072 = vadd.f32 %v4023, %v4071
        %v4073 = vpop.f32.mrf.mxu0
        %v4074 = vadd.f32 %v4025, %v4073
        %4075 = vmatmul.bf16.gmra.mxu0 %v1220
        %v4076 = vpop.f32.mrf.mxu0
        %v4077 = vadd.f32 %v4028, %v4076
        %v4078 = vpop.f32.mrf.mxu0
        %v4079 = vadd.f32 %v4030, %v4078
        %4080 = vmatmul.bf16.gmra.mxu0 %v1228
        %v4081 = vpop.f32.mrf.mxu0
        %v4082 = vadd.f32 %v4033, %v4081
        %v4083 = vpop.f32.mrf.mxu0
        %v4084 = vadd.f32 %v4035, %v4083
        %4085 = vmatmul.bf16.gmra.mxu0 %v1236
        %v4086 = vpop.f32.mrf.mxu0
        %v4087 = vadd.f32 %v4038, %v4086
        %v4088 = vpop.f32.mrf.mxu0
        %v4089 = vadd.f32 %v4040, %v4088
        %4090 = vdwg.mxu0
        %4091 = vmatpush.bf16.msra.mxu0 %v2740
        %4092 = vmatpush.bf16.msra.mxu0 %v2736
        %4093 = vmatpush.bf16.msra.mxu0 %v2732
        %4094 = vmatpush.bf16.msra.mxu0 %v2728
        %4095 = vmatpush.bf16.msra.mxu0 %v2724
        %4096 = vmatpush.bf16.msra.mxu0 %v2720
        %4097 = vmatpush.bf16.msra.mxu0 %v2716
        %4098 = vmatpush.bf16.msra.mxu0 %v2712
        %4099 = vmatmul.bf16.gmra.mxu0 %v1181
        %v4100 = vpop.f32.mrf.mxu0
        %v4101 = vadd.f32 %v4052, %v4100
        %v4102 = vpop.f32.mrf.mxu0
        %v4103 = vadd.f32 %v4054, %v4102
        %4104 = vmatmul.bf16.gmra.mxu0 %v1189
        %v4105 = vpop.f32.mrf.mxu0
        %v4106 = vadd.f32 %v4057, %v4105
        %v4107 = vpop.f32.mrf.mxu0
        %v4108 = vadd.f32 %v4059, %v4107
        %4109 = vmatmul.bf16.gmra.mxu0 %v1197
        %v4110 = vpop.f32.mrf.mxu0
        %v4111 = vadd.f32 %v4062, %v4110
        %v4112 = vpop.f32.mrf.mxu0
        %v4113 = vadd.f32 %v4064, %v4112
        %4114 = vmatmul.bf16.gmra.mxu0 %v1205
        %v4115 = vpop.f32.mrf.mxu0
        %v4116 = vadd.f32 %v4067, %v4115
        %v4117 = vpop.f32.mrf.mxu0
        %v4118 = vadd.f32 %v4069, %v4117
        %4119 = vmatmul.bf16.gmra.mxu0 %v1213
        %v4120 = vpop.f32.mrf.mxu0
        %v4121 = vadd.f32 %v4072, %v4120
        %v4122 = vpop.f32.mrf.mxu0
        %v4123 = vadd.f32 %v4074, %v4122
        %4124 = vmatmul.bf16.gmra.mxu0 %v1221
        %v4125 = vpop.f32.mrf.mxu0
        %v4126 = vadd.f32 %v4077, %v4125
        %v4127 = vpop.f32.mrf.mxu0
        %v4128 = vadd.f32 %v4079, %v4127
        %4129 = vmatmul.bf16.gmra.mxu0 %v1229
        %v4130 = vpop.f32.mrf.mxu0
        %v4131 = vadd.f32 %v4082, %v4130
        %v4132 = vpop.f32.mrf.mxu0
        %v4133 = vadd.f32 %v4084, %v4132
        %4134 = vmatmul.bf16.gmra.mxu0 %v1237
        %v4135 = vpop.f32.mrf.mxu0
        %v4136 = vadd.f32 %v4087, %v4135
        %v4137 = vpop.f32.mrf.mxu0
        %v4138 = vadd.f32 %v4089, %v4137
        %4139 = vdwg.mxu0
        %4140 = vmatpush.bf16.msra.mxu0 %v2772
        %4141 = vmatpush.bf16.msra.mxu0 %v2768
        %4142 = vmatpush.bf16.msra.mxu0 %v2764
        %4143 = vmatpush.bf16.msra.mxu0 %v2760
        %4144 = vmatpush.bf16.msra.mxu0 %v2756
        %4145 = vmatpush.bf16.msra.mxu0 %v2752
        %4146 = vmatpush.bf16.msra.mxu0 %v2748
        %4147 = vmatpush.bf16.msra.mxu0 %v2744
        %4148 = vmatmul.bf16.gmra.mxu0 %v1182
        %v4149 = vpop.f32.mrf.mxu0
        %v4150 = vadd.f32 %v4101, %v4149
        %v4151 = vpop.f32.mrf.mxu0
        %v4152 = vadd.f32 %v4103, %v4151
        %4153 = vmatmul.bf16.gmra.mxu0 %v1190
        %v4154 = vpop.f32.mrf.mxu0
        %v4155 = vadd.f32 %v4106, %v4154
        %v4156 = vpop.f32.mrf.mxu0
        %v4157 = vadd.f32 %v4108, %v4156
        %4158 = vmatmul.bf16.gmra.mxu0 %v1198
        %v4159 = vpop.f32.mrf.mxu0
        %v4160 = vadd.f32 %v4111, %v4159
        %v4161 = vpop.f32.mrf.mxu0
        %v4162 = vadd.f32 %v4113, %v4161
        %4163 = vmatmul.bf16.gmra.mxu0 %v1206
        %v4164 = vpop.f32.mrf.mxu0
        %v4165 = vadd.f32 %v4116, %v4164
        %v4166 = vpop.f32.mrf.mxu0
        %v4167 = vadd.f32 %v4118, %v4166
        %4168 = vmatmul.bf16.gmra.mxu0 %v1214
        %v4169 = vpop.f32.mrf.mxu0
        %v4170 = vadd.f32 %v4121, %v4169
        %v4171 = vpop.f32.mrf.mxu0
        %v4172 = vadd.f32 %v4123, %v4171
        %4173 = vmatmul.bf16.gmra.mxu0 %v1222
        %v4174 = vpop.f32.mrf.mxu0
        %v4175 = vadd.f32 %v4126, %v4174
        %v4176 = vpop.f32.mrf.mxu0
        %v4177 = vadd.f32 %v4128, %v4176
        %4178 = vmatmul.bf16.gmra.mxu0 %v1230
        %v4179 = vpop.f32.mrf.mxu0
        %v4180 = vadd.f32 %v4131, %v4179
        %v4181 = vpop.f32.mrf.mxu0
        %v4182 = vadd.f32 %v4133, %v4181
        %4183 = vmatmul.bf16.gmra.mxu0 %v1238
        %v4184 = vpop.f32.mrf.mxu0
        %v4185 = vadd.f32 %v4136, %v4184
        %v4186 = vpop.f32.mrf.mxu0
        %v4187 = vadd.f32 %v4138, %v4186
        %4188 = vdwg.mxu0
        %4189 = vmatpush.bf16.msra.mxu0 %v2804
        %4190 = vmatpush.bf16.msra.mxu0 %v2800
        %4191 = vmatpush.bf16.msra.mxu0 %v2796
        %4192 = vmatpush.bf16.msra.mxu0 %v2792
        %4193 = vmatpush.bf16.msra.mxu0 %v2788
        %4194 = vmatpush.bf16.msra.mxu0 %v2784
        %4195 = vmatpush.bf16.msra.mxu0 %v2780
        %4196 = vmatpush.bf16.msra.mxu0 %v2776
        %4197 = vmatmul.bf16.gmra.mxu0 %v1183
        %v4198 = vpop.f32.mrf.mxu0
        %v4199 = vadd.f32 %v4150, %v4198
        %v4200 = vpop.f32.mrf.mxu0
        %v4201 = vadd.f32 %v4152, %v4200
        %4202 = vmatmul.bf16.gmra.mxu0 %v1191
        %v4203 = vpop.f32.mrf.mxu0
        %v4204 = vadd.f32 %v4155, %v4203
        %v4205 = vpop.f32.mrf.mxu0
        %v4206 = vadd.f32 %v4157, %v4205
        %4207 = vmatmul.bf16.gmra.mxu0 %v1199
        %v4208 = vpop.f32.mrf.mxu0
        %v4209 = vadd.f32 %v4160, %v4208
        %v4210 = vpop.f32.mrf.mxu0
        %v4211 = vadd.f32 %v4162, %v4210
        %4212 = vmatmul.bf16.gmra.mxu0 %v1207
        %v4213 = vpop.f32.mrf.mxu0
        %v4214 = vadd.f32 %v4165, %v4213
        %v4215 = vpop.f32.mrf.mxu0
        %v4216 = vadd.f32 %v4167, %v4215
        %4217 = vmatmul.bf16.gmra.mxu0 %v1215
        %v4218 = vpop.f32.mrf.mxu0
        %v4219 = vadd.f32 %v4170, %v4218
        %v4220 = vpop.f32.mrf.mxu0
        %v4221 = vadd.f32 %v4172, %v4220
        %4222 = vmatmul.bf16.gmra.mxu0 %v1223
        %v4223 = vpop.f32.mrf.mxu0
        %v4224 = vadd.f32 %v4175, %v4223
        %v4225 = vpop.f32.mrf.mxu0
        %v4226 = vadd.f32 %v4177, %v4225
        %4227 = vmatmul.bf16.gmra.mxu0 %v1231
        %v4228 = vpop.f32.mrf.mxu0
        %v4229 = vadd.f32 %v4180, %v4228
        %v4230 = vpop.f32.mrf.mxu0
        %v4231 = vadd.f32 %v4182, %v4230
        %4232 = vmatmul.bf16.gmra.mxu0 %v1239
        %v4233 = vpop.f32.mrf.mxu0
        %v4234 = vadd.f32 %v4185, %v4233
        %v4235 = vpop.f32.mrf.mxu0
        %v4236 = vadd.f32 %v4187, %v4235
        %4237 = vdwg.mxu0
        %4238 = vmatpush.bf16.msra.mxu0 %v2581
        %4239 = vmatpush.bf16.msra.mxu0 %v2577
        %4240 = vmatpush.bf16.msra.mxu0 %v2573
        %4241 = vmatpush.bf16.msra.mxu0 %v2569
        %4242 = vmatpush.bf16.msra.mxu0 %v2565
        %4243 = vmatpush.bf16.msra.mxu0 %v2561
        %4244 = vmatpush.bf16.msra.mxu0 %v2557
        %4245 = vmatpush.bf16.msra.mxu0 %v2553
        %4246 = vmatmul.bf16.gmra.mxu0 %v1176
        %v4247 = vpop.f32.mrf.mxu0
        %v4248 = vadd.f32 %v1743, %v4247
        %v4249 = vpop.f32.mrf.mxu0
        %v4250 = vadd.f32 %v1745, %v4249
        %4251 = vmatmul.bf16.gmra.mxu0 %v1184
        %v4252 = vpop.f32.mrf.mxu0
        %v4253 = vadd.f32 %v1748, %v4252
        %v4254 = vpop.f32.mrf.mxu0
        %v4255 = vadd.f32 %v1750, %v4254
        %4256 = vmatmul.bf16.gmra.mxu0 %v1192
        %v4257 = vpop.f32.mrf.mxu0
        %v4258 = vadd.f32 %v1753, %v4257
        %v4259 = vpop.f32.mrf.mxu0
        %v4260 = vadd.f32 %v1755, %v4259
        %4261 = vmatmul.bf16.gmra.mxu0 %v1200
        %v4262 = vpop.f32.mrf.mxu0
        %v4263 = vadd.f32 %v1758, %v4262
        %v4264 = vpop.f32.mrf.mxu0
        %v4265 = vadd.f32 %v1760, %v4264
        %4266 = vmatmul.bf16.gmra.mxu0 %v1208
        %v4267 = vpop.f32.mrf.mxu0
        %v4268 = vadd.f32 %v1763, %v4267
        %v4269 = vpop.f32.mrf.mxu0
        %v4270 = vadd.f32 %v1765, %v4269
        %4271 = vmatmul.bf16.gmra.mxu0 %v1216
        %v4272 = vpop.f32.mrf.mxu0
        %v4273 = vadd.f32 %v1768, %v4272
        %v4274 = vpop.f32.mrf.mxu0
        %v4275 = vadd.f32 %v1770, %v4274
        %4276 = vmatmul.bf16.gmra.mxu0 %v1224
        %v4277 = vpop.f32.mrf.mxu0
        %v4278 = vadd.f32 %v1773, %v4277
        %v4279 = vpop.f32.mrf.mxu0
        %v4280 = vadd.f32 %v1775, %v4279
        %4281 = vmatmul.bf16.gmra.mxu0 %v1232
        %v4282 = vpop.f32.mrf.mxu0
        %v4283 = vadd.f32 %v1778, %v4282
        %v4284 = vpop.f32.mrf.mxu0
        %v4285 = vadd.f32 %v1780, %v4284
        %4286 = vdwg.mxu0
        %4287 = vmatpush.bf16.msra.mxu0 %v2613
        %4288 = vmatpush.bf16.msra.mxu0 %v2609
        %4289 = vmatpush.bf16.msra.mxu0 %v2605
        %4290 = vmatpush.bf16.msra.mxu0 %v2601
        %4291 = vmatpush.bf16.msra.mxu0 %v2597
        %4292 = vmatpush.bf16.msra.mxu0 %v2593
        %4293 = vmatpush.bf16.msra.mxu0 %v2589
        %4294 = vmatpush.bf16.msra.mxu0 %v2585
        %4295 = vmatmul.bf16.gmra.mxu0 %v1177
        %v4296 = vpop.f32.mrf.mxu0
        %v4297 = vadd.f32 %v4248, %v4296
        %v4298 = vpop.f32.mrf.mxu0
        %v4299 = vadd.f32 %v4250, %v4298
        %4300 = vmatmul.bf16.gmra.mxu0 %v1185
        %v4301 = vpop.f32.mrf.mxu0
        %v4302 = vadd.f32 %v4253, %v4301
        %v4303 = vpop.f32.mrf.mxu0
        %v4304 = vadd.f32 %v4255, %v4303
        %4305 = vmatmul.bf16.gmra.mxu0 %v1193
        %v4306 = vpop.f32.mrf.mxu0
        %v4307 = vadd.f32 %v4258, %v4306
        %v4308 = vpop.f32.mrf.mxu0
        %v4309 = vadd.f32 %v4260, %v4308
        %4310 = vmatmul.bf16.gmra.mxu0 %v1201
        %v4311 = vpop.f32.mrf.mxu0
        %v4312 = vadd.f32 %v4263, %v4311
        %v4313 = vpop.f32.mrf.mxu0
        %v4314 = vadd.f32 %v4265, %v4313
        %4315 = vmatmul.bf16.gmra.mxu0 %v1209
        %v4316 = vpop.f32.mrf.mxu0
        %v4317 = vadd.f32 %v4268, %v4316
        %v4318 = vpop.f32.mrf.mxu0
        %v4319 = vadd.f32 %v4270, %v4318
        %4320 = vmatmul.bf16.gmra.mxu0 %v1217
        %v4321 = vpop.f32.mrf.mxu0
        %v4322 = vadd.f32 %v4273, %v4321
        %v4323 = vpop.f32.mrf.mxu0
        %v4324 = vadd.f32 %v4275, %v4323
        %4325 = vmatmul.bf16.gmra.mxu0 %v1225
        %v4326 = vpop.f32.mrf.mxu0
        %v4327 = vadd.f32 %v4278, %v4326
        %v4328 = vpop.f32.mrf.mxu0
        %v4329 = vadd.f32 %v4280, %v4328
        %4330 = vmatmul.bf16.gmra.mxu0 %v1233
        %v4331 = vpop.f32.mrf.mxu0
        %v4332 = vadd.f32 %v4283, %v4331
        %v4333 = vpop.f32.mrf.mxu0
        %v4334 = vadd.f32 %v4285, %v4333
        %4335 = vdwg.mxu0
        %4336 = vmatpush.bf16.msra.mxu0 %v2645
        %4337 = vmatpush.bf16.msra.mxu0 %v2641
        %4338 = vmatpush.bf16.msra.mxu0 %v2637
        %4339 = vmatpush.bf16.msra.mxu0 %v2633
        %4340 = vmatpush.bf16.msra.mxu0 %v2629
        %4341 = vmatpush.bf16.msra.mxu0 %v2625
        %4342 = vmatpush.bf16.msra.mxu0 %v2621
        %4343 = vmatpush.bf16.msra.mxu0 %v2617
        %4344 = vmatmul.bf16.gmra.mxu0 %v1178
        %v4345 = vpop.f32.mrf.mxu0
        %v4346 = vadd.f32 %v4297, %v4345
        %v4347 = vpop.f32.mrf.mxu0
        %v4348 = vadd.f32 %v4299, %v4347
        %4349 = vmatmul.bf16.gmra.mxu0 %v1186
        %v4350 = vpop.f32.mrf.mxu0
        %v4351 = vadd.f32 %v4302, %v4350
        %v4352 = vpop.f32.mrf.mxu0
        %v4353 = vadd.f32 %v4304, %v4352
        %4354 = vmatmul.bf16.gmra.mxu0 %v1194
        %v4355 = vpop.f32.mrf.mxu0
        %v4356 = vadd.f32 %v4307, %v4355
        %v4357 = vpop.f32.mrf.mxu0
        %v4358 = vadd.f32 %v4309, %v4357
        %4359 = vmatmul.bf16.gmra.mxu0 %v1202
        %v4360 = vpop.f32.mrf.mxu0
        %v4361 = vadd.f32 %v4312, %v4360
        %v4362 = vpop.f32.mrf.mxu0
        %v4363 = vadd.f32 %v4314, %v4362
        %4364 = vmatmul.bf16.gmra.mxu0 %v1210
        %v4365 = vpop.f32.mrf.mxu0
        %v4366 = vadd.f32 %v4317, %v4365
        %v4367 = vpop.f32.mrf.mxu0
        %v4368 = vadd.f32 %v4319, %v4367
        %4369 = vmatmul.bf16.gmra.mxu0 %v1218
        %v4370 = vpop.f32.mrf.mxu0
        %v4371 = vadd.f32 %v4322, %v4370
        %v4372 = vpop.f32.mrf.mxu0
        %v4373 = vadd.f32 %v4324, %v4372
        %4374 = vmatmul.bf16.gmra.mxu0 %v1226
        %v4375 = vpop.f32.mrf.mxu0
        %v4376 = vadd.f32 %v4327, %v4375
        %v4377 = vpop.f32.mrf.mxu0
        %v4378 = vadd.f32 %v4329, %v4377
        %4379 = vmatmul.bf16.gmra.mxu0 %v1234
        %v4380 = vpop.f32.mrf.mxu0
        %v4381 = vadd.f32 %v4332, %v4380
        %v4382 = vpop.f32.mrf.mxu0
        %v4383 = vadd.f32 %v4334, %v4382
        %4384 = vdwg.mxu0
        %4385 = vmatpush.bf16.msra.mxu0 %v2677
        %4386 = vmatpush.bf16.msra.mxu0 %v2673
        %4387 = vmatpush.bf16.msra.mxu0 %v2669
        %4388 = vmatpush.bf16.msra.mxu0 %v2665
        %4389 = vmatpush.bf16.msra.mxu0 %v2661
        %4390 = vmatpush.bf16.msra.mxu0 %v2657
        %4391 = vmatpush.bf16.msra.mxu0 %v2653
        %4392 = vmatpush.bf16.msra.mxu0 %v2649
        %4393 = vmatmul.bf16.gmra.mxu0 %v1179
        %v4394 = vpop.f32.mrf.mxu0
        %v4395 = vadd.f32 %v4346, %v4394
        %v4396 = vpop.f32.mrf.mxu0
        %v4397 = vadd.f32 %v4348, %v4396
        %4398 = vmatmul.bf16.gmra.mxu0 %v1187
        %v4399 = vpop.f32.mrf.mxu0
        %v4400 = vadd.f32 %v4351, %v4399
        %v4401 = vpop.f32.mrf.mxu0
        %v4402 = vadd.f32 %v4353, %v4401
        %4403 = vmatmul.bf16.gmra.mxu0 %v1195
        %v4404 = vpop.f32.mrf.mxu0
        %v4405 = vadd.f32 %v4356, %v4404
        %v4406 = vpop.f32.mrf.mxu0
        %v4407 = vadd.f32 %v4358, %v4406
        %4408 = vmatmul.bf16.gmra.mxu0 %v1203
        %v4409 = vpop.f32.mrf.mxu0
        %v4410 = vadd.f32 %v4361, %v4409
        %v4411 = vpop.f32.mrf.mxu0
        %v4412 = vadd.f32 %v4363, %v4411
        %4413 = vmatmul.bf16.gmra.mxu0 %v1211
        %v4414 = vpop.f32.mrf.mxu0
        %v4415 = vadd.f32 %v4366, %v4414
        %v4416 = vpop.f32.mrf.mxu0
        %v4417 = vadd.f32 %v4368, %v4416
        %4418 = vmatmul.bf16.gmra.mxu0 %v1219
        %v4419 = vpop.f32.mrf.mxu0
        %v4420 = vadd.f32 %v4371, %v4419
        %v4421 = vpop.f32.mrf.mxu0
        %v4422 = vadd.f32 %v4373, %v4421
        %4423 = vmatmul.bf16.gmra.mxu0 %v1227
        %v4424 = vpop.f32.mrf.mxu0
        %v4425 = vadd.f32 %v4376, %v4424
        %v4426 = vpop.f32.mrf.mxu0
        %v4427 = vadd.f32 %v4378, %v4426
        %4428 = vmatmul.bf16.gmra.mxu0 %v1235
        %v4429 = vpop.f32.mrf.mxu0
        %v4430 = vadd.f32 %v4381, %v4429
        %v4431 = vpop.f32.mrf.mxu0
        %v4432 = vadd.f32 %v4383, %v4431
        %4433 = vdwg.mxu0
        %4434 = vmatpush.bf16.msra.mxu0 %v2709
        %4435 = vmatpush.bf16.msra.mxu0 %v2705
        %4436 = vmatpush.bf16.msra.mxu0 %v2701
        %4437 = vmatpush.bf16.msra.mxu0 %v2697
        %4438 = vmatpush.bf16.msra.mxu0 %v2693
        %4439 = vmatpush.bf16.msra.mxu0 %v2689
        %4440 = vmatpush.bf16.msra.mxu0 %v2685
        %4441 = vmatpush.bf16.msra.mxu0 %v2681
        %4442 = vmatmul.bf16.gmra.mxu0 %v1180
        %v4443 = vpop.f32.mrf.mxu0
        %v4444 = vadd.f32 %v4395, %v4443
        %v4445 = vpop.f32.mrf.mxu0
        %v4446 = vadd.f32 %v4397, %v4445
        %4447 = vmatmul.bf16.gmra.mxu0 %v1188
        %v4448 = vpop.f32.mrf.mxu0
        %v4449 = vadd.f32 %v4400, %v4448
        %v4450 = vpop.f32.mrf.mxu0
        %v4451 = vadd.f32 %v4402, %v4450
        %4452 = vmatmul.bf16.gmra.mxu0 %v1196
        %v4453 = vpop.f32.mrf.mxu0
        %v4454 = vadd.f32 %v4405, %v4453
        %v4455 = vpop.f32.mrf.mxu0
        %v4456 = vadd.f32 %v4407, %v4455
        %4457 = vmatmul.bf16.gmra.mxu0 %v1204
        %v4458 = vpop.f32.mrf.mxu0
        %v4459 = vadd.f32 %v4410, %v4458
        %v4460 = vpop.f32.mrf.mxu0
        %v4461 = vadd.f32 %v4412, %v4460
        %4462 = vmatmul.bf16.gmra.mxu0 %v1212
        %v4463 = vpop.f32.mrf.mxu0
        %v4464 = vadd.f32 %v4415, %v4463
        %v4465 = vpop.f32.mrf.mxu0
        %v4466 = vadd.f32 %v4417, %v4465
        %4467 = vmatmul.bf16.gmra.mxu0 %v1220
        %v4468 = vpop.f32.mrf.mxu0
        %v4469 = vadd.f32 %v4420, %v4468
        %v4470 = vpop.f32.mrf.mxu0
        %v4471 = vadd.f32 %v4422, %v4470
        %4472 = vmatmul.bf16.gmra.mxu0 %v1228
        %v4473 = vpop.f32.mrf.mxu0
        %v4474 = vadd.f32 %v4425, %v4473
        %v4475 = vpop.f32.mrf.mxu0
        %v4476 = vadd.f32 %v4427, %v4475
        %4477 = vmatmul.bf16.gmra.mxu0 %v1236
        %v4478 = vpop.f32.mrf.mxu0
        %v4479 = vadd.f32 %v4430, %v4478
        %v4480 = vpop.f32.mrf.mxu0
        %v4481 = vadd.f32 %v4432, %v4480
        %4482 = vdwg.mxu0
        %4483 = vmatpush.bf16.msra.mxu0 %v2741
        %4484 = vmatpush.bf16.msra.mxu0 %v2737
        %4485 = vmatpush.bf16.msra.mxu0 %v2733
        %4486 = vmatpush.bf16.msra.mxu0 %v2729
        %4487 = vmatpush.bf16.msra.mxu0 %v2725
        %4488 = vmatpush.bf16.msra.mxu0 %v2721
        %4489 = vmatpush.bf16.msra.mxu0 %v2717
        %4490 = vmatpush.bf16.msra.mxu0 %v2713
        %4491 = vmatmul.bf16.gmra.mxu0 %v1181
        %v4492 = vpop.f32.mrf.mxu0
        %v4493 = vadd.f32 %v4444, %v4492
        %v4494 = vpop.f32.mrf.mxu0
        %v4495 = vadd.f32 %v4446, %v4494
        %4496 = vmatmul.bf16.gmra.mxu0 %v1189
        %v4497 = vpop.f32.mrf.mxu0
        %v4498 = vadd.f32 %v4449, %v4497
        %v4499 = vpop.f32.mrf.mxu0
        %v4500 = vadd.f32 %v4451, %v4499
        %4501 = vmatmul.bf16.gmra.mxu0 %v1197
        %v4502 = vpop.f32.mrf.mxu0
        %v4503 = vadd.f32 %v4454, %v4502
        %v4504 = vpop.f32.mrf.mxu0
        %v4505 = vadd.f32 %v4456, %v4504
        %4506 = vmatmul.bf16.gmra.mxu0 %v1205
        %v4507 = vpop.f32.mrf.mxu0
        %v4508 = vadd.f32 %v4459, %v4507
        %v4509 = vpop.f32.mrf.mxu0
        %v4510 = vadd.f32 %v4461, %v4509
        %4511 = vmatmul.bf16.gmra.mxu0 %v1213
        %v4512 = vpop.f32.mrf.mxu0
        %v4513 = vadd.f32 %v4464, %v4512
        %v4514 = vpop.f32.mrf.mxu0
        %v4515 = vadd.f32 %v4466, %v4514
        %4516 = vmatmul.bf16.gmra.mxu0 %v1221
        %v4517 = vpop.f32.mrf.mxu0
        %v4518 = vadd.f32 %v4469, %v4517
        %v4519 = vpop.f32.mrf.mxu0
        %v4520 = vadd.f32 %v4471, %v4519
        %4521 = vmatmul.bf16.gmra.mxu0 %v1229
        %v4522 = vpop.f32.mrf.mxu0
        %v4523 = vadd.f32 %v4474, %v4522
        %v4524 = vpop.f32.mrf.mxu0
        %v4525 = vadd.f32 %v4476, %v4524
        %4526 = vmatmul.bf16.gmra.mxu0 %v1237
        %v4527 = vpop.f32.mrf.mxu0
        %v4528 = vadd.f32 %v4479, %v4527
        %v4529 = vpop.f32.mrf.mxu0
        %v4530 = vadd.f32 %v4481, %v4529
        %4531 = vdwg.mxu0
        %4532 = vmatpush.bf16.msra.mxu0 %v2773
        %4533 = vmatpush.bf16.msra.mxu0 %v2769
        %4534 = vmatpush.bf16.msra.mxu0 %v2765
        %4535 = vmatpush.bf16.msra.mxu0 %v2761
        %4536 = vmatpush.bf16.msra.mxu0 %v2757
        %4537 = vmatpush.bf16.msra.mxu0 %v2753
        %4538 = vmatpush.bf16.msra.mxu0 %v2749
        %4539 = vmatpush.bf16.msra.mxu0 %v2745
        %4540 = vmatmul.bf16.gmra.mxu0 %v1182
        %v4541 = vpop.f32.mrf.mxu0
        %v4542 = vadd.f32 %v4493, %v4541
        %v4543 = vpop.f32.mrf.mxu0
        %v4544 = vadd.f32 %v4495, %v4543
        %4545 = vmatmul.bf16.gmra.mxu0 %v1190
        %v4546 = vpop.f32.mrf.mxu0
        %v4547 = vadd.f32 %v4498, %v4546
        %v4548 = vpop.f32.mrf.mxu0
        %v4549 = vadd.f32 %v4500, %v4548
        %4550 = vmatmul.bf16.gmra.mxu0 %v1198
        %v4551 = vpop.f32.mrf.mxu0
        %v4552 = vadd.f32 %v4503, %v4551
        %v4553 = vpop.f32.mrf.mxu0
        %v4554 = vadd.f32 %v4505, %v4553
        %4555 = vmatmul.bf16.gmra.mxu0 %v1206
        %v4556 = vpop.f32.mrf.mxu0
        %v4557 = vadd.f32 %v4508, %v4556
        %v4558 = vpop.f32.mrf.mxu0
        %v4559 = vadd.f32 %v4510, %v4558
        %4560 = vmatmul.bf16.gmra.mxu0 %v1214
        %v4561 = vpop.f32.mrf.mxu0
        %v4562 = vadd.f32 %v4513, %v4561
        %v4563 = vpop.f32.mrf.mxu0
        %v4564 = vadd.f32 %v4515, %v4563
        %4565 = vmatmul.bf16.gmra.mxu0 %v1222
        %v4566 = vpop.f32.mrf.mxu0
        %v4567 = vadd.f32 %v4518, %v4566
        %v4568 = vpop.f32.mrf.mxu0
        %v4569 = vadd.f32 %v4520, %v4568
        %4570 = vmatmul.bf16.gmra.mxu0 %v1230
        %v4571 = vpop.f32.mrf.mxu0
        %v4572 = vadd.f32 %v4523, %v4571
        %v4573 = vpop.f32.mrf.mxu0
        %v4574 = vadd.f32 %v4525, %v4573
        %4575 = vmatmul.bf16.gmra.mxu0 %v1238
        %v4576 = vpop.f32.mrf.mxu0
        %v4577 = vadd.f32 %v4528, %v4576
        %v4578 = vpop.f32.mrf.mxu0
        %v4579 = vadd.f32 %v4530, %v4578
        %4580 = vdwg.mxu0
        %4581 = vmatpush.bf16.msra.mxu0 %v2805
        %4582 = vmatpush.bf16.msra.mxu0 %v2801
        %4583 = vmatpush.bf16.msra.mxu0 %v2797
        %4584 = vmatpush.bf16.msra.mxu0 %v2793
        %4585 = vmatpush.bf16.msra.mxu0 %v2789
        %4586 = vmatpush.bf16.msra.mxu0 %v2785
        %4587 = vmatpush.bf16.msra.mxu0 %v2781
        %4588 = vmatpush.bf16.msra.mxu0 %v2777
        %4589 = vmatmul.bf16.gmra.mxu0 %v1183
        %v4590 = vpop.f32.mrf.mxu0
        %v4591 = vadd.f32 %v4542, %v4590
        %v4592 = vpop.f32.mrf.mxu0
        %v4593 = vadd.f32 %v4544, %v4592
        %4594 = vmatmul.bf16.gmra.mxu0 %v1191
        %v4595 = vpop.f32.mrf.mxu0
        %v4596 = vadd.f32 %v4547, %v4595
        %v4597 = vpop.f32.mrf.mxu0
        %v4598 = vadd.f32 %v4549, %v4597
        %4599 = vmatmul.bf16.gmra.mxu0 %v1199
        %v4600 = vpop.f32.mrf.mxu0
        %v4601 = vadd.f32 %v4552, %v4600
        %v4602 = vpop.f32.mrf.mxu0
        %v4603 = vadd.f32 %v4554, %v4602
        %4604 = vmatmul.bf16.gmra.mxu0 %v1207
        %v4605 = vpop.f32.mrf.mxu0
        %v4606 = vadd.f32 %v4557, %v4605
        %v4607 = vpop.f32.mrf.mxu0
        %v4608 = vadd.f32 %v4559, %v4607
        %4609 = vmatmul.bf16.gmra.mxu0 %v1215
        %v4610 = vpop.f32.mrf.mxu0
        %v4611 = vadd.f32 %v4562, %v4610
        %v4612 = vpop.f32.mrf.mxu0
        %v4613 = vadd.f32 %v4564, %v4612
        %4614 = vmatmul.bf16.gmra.mxu0 %v1223
        %v4615 = vpop.f32.mrf.mxu0
        %v4616 = vadd.f32 %v4567, %v4615
        %v4617 = vpop.f32.mrf.mxu0
        %v4618 = vadd.f32 %v4569, %v4617
        %4619 = vmatmul.bf16.gmra.mxu0 %v1231
        %v4620 = vpop.f32.mrf.mxu0
        %v4621 = vadd.f32 %v4572, %v4620
        %v4622 = vpop.f32.mrf.mxu0
        %v4623 = vadd.f32 %v4574, %v4622
        %4624 = vmatmul.bf16.gmra.mxu0 %v1239
        %v4625 = vpop.f32.mrf.mxu0
        %v4626 = vadd.f32 %v4577, %v4625
        %v4627 = vpop.f32.mrf.mxu0
        %v4628 = vadd.f32 %v4579, %v4627
        %4629 = vdwg.mxu0
        %v4630 = vld [vmem:[%s6] sm:$0xf]
        %v4632 = vperm.slane %v4630, 0
        %v4633 = vperm.slane %v4630, 1
        %v4634 = vperm.slane %v4630, 2
        %v4635 = vperm.slane %v4630, 3
        %v4640 = vadd.f32 %v3415, %v4632
        %v4641 = vadd.f32 %v3807, %v4633
        %v4642 = vadd.f32 %v4199, %v4634
        %v4643 = vadd.f32 %v4591, %v4635
        %v4644 = vadd.f32 %v3417, %v4632
        %v4645 = vadd.f32 %v3809, %v4633
        %v4646 = vadd.f32 %v4201, %v4634
        %v4647 = vadd.f32 %v4593, %v4635
        %v4648 = vadd.f32 %v3420, %v4632
        %v4649 = vadd.f32 %v3812, %v4633
        %v4650 = vadd.f32 %v4204, %v4634
        %v4651 = vadd.f32 %v4596, %v4635
        %v4652 = vadd.f32 %v3422, %v4632
        %v4653 = vadd.f32 %v3814, %v4633
        %v4654 = vadd.f32 %v4206, %v4634
        %v4655 = vadd.f32 %v4598, %v4635
        %v4656 = vadd.f32 %v3425, %v4632
        %v4657 = vadd.f32 %v3817, %v4633
        %v4658 = vadd.f32 %v4209, %v4634
        %v4659 = vadd.f32 %v4601, %v4635
        %v4660 = vadd.f32 %v3427, %v4632
        %v4661 = vadd.f32 %v3819, %v4633
        %v4662 = vadd.f32 %v4211, %v4634
        %v4663 = vadd.f32 %v4603, %v4635
        %v4664 = vadd.f32 %v3430, %v4632
        %v4665 = vadd.f32 %v3822, %v4633
        %v4666 = vadd.f32 %v4214, %v4634
        %v4667 = vadd.f32 %v4606, %v4635
        %v4668 = vadd.f32 %v3432, %v4632
        %v4669 = vadd.f32 %v3824, %v4633
        %v4670 = vadd.f32 %v4216, %v4634
        %v4671 = vadd.f32 %v4608, %v4635
        %v4672 = vadd.f32 %v3435, %v4632
        %v4673 = vadd.f32 %v3827, %v4633
        %v4674 = vadd.f32 %v4219, %v4634
        %v4675 = vadd.f32 %v4611, %v4635
        %v4676 = vadd.f32 %v3437, %v4632
        %v4677 = vadd.f32 %v3829, %v4633
        %v4678 = vadd.f32 %v4221, %v4634
        %v4679 = vadd.f32 %v4613, %v4635
        %v4680 = vadd.f32 %v3440, %v4632
        %v4681 = vadd.f32 %v3832, %v4633
        %v4682 = vadd.f32 %v4224, %v4634
        %v4683 = vadd.f32 %v4616, %v4635
        %v4684 = vadd.f32 %v3442, %v4632
        %v4685 = vadd.f32 %v3834, %v4633
        %v4686 = vadd.f32 %v4226, %v4634
        %v4687 = vadd.f32 %v4618, %v4635
        %v4688 = vadd.f32 %v3445, %v4632
        %v4689 = vadd.f32 %v3837, %v4633
        %v4690 = vadd.f32 %v4229, %v4634
        %v4691 = vadd.f32 %v4621, %v4635
        %v4692 = vadd.f32 %v3447, %v4632
        %v4693 = vadd.f32 %v3839, %v4633
        %v4694 = vadd.f32 %v4231, %v4634
        %v4695 = vadd.f32 %v4623, %v4635
        %v4696 = vadd.f32 %v3450, %v4632
        %v4697 = vadd.f32 %v3842, %v4633
        %v4698 = vadd.f32 %v4234, %v4634
        %v4699 = vadd.f32 %v4626, %v4635
        %v4700 = vadd.f32 %v3452, %v4632
        %v4701 = vadd.f32 %v3844, %v4633
        %v4702 = vadd.f32 %v4236, %v4634
        %v4703 = vadd.f32 %v4628, %v4635
        %v4704 = vmax.f32 %v4640, 0.0
        %v4705 = vmax.f32 %v4641, 0.0
        %v4706 = vmax.f32 %v4642, 0.0
        %v4707 = vmax.f32 %v4643, 0.0
        %v4708 = vmax.f32 %v4644, 0.0
        %v4709 = vmax.f32 %v4645, 0.0
        %v4710 = vmax.f32 %v4646, 0.0
        %v4711 = vmax.f32 %v4647, 0.0
        %v4712 = vmax.f32 %v4648, 0.0
        %v4713 = vmax.f32 %v4649, 0.0
        %v4714 = vmax.f32 %v4650, 0.0
        %v4715 = vmax.f32 %v4651, 0.0
        %v4716 = vmax.f32 %v4652, 0.0
        %v4717 = vmax.f32 %v4653, 0.0
        %v4718 = vmax.f32 %v4654, 0.0
        %v4719 = vmax.f32 %v4655, 0.0
        %v4720 = vmax.f32 %v4656, 0.0
        %v4721 = vmax.f32 %v4657, 0.0
        %v4722 = vmax.f32 %v4658, 0.0
        %v4723 = vmax.f32 %v4659, 0.0
        %v4724 = vmax.f32 %v4660, 0.0
        %v4725 = vmax.f32 %v4661, 0.0
        %v4726 = vmax.f32 %v4662, 0.0
        %v4727 = vmax.f32 %v4663, 0.0
        %v4728 = vmax.f32 %v4664, 0.0
        %v4729 = vmax.f32 %v4665, 0.0
        %v4730 = vmax.f32 %v4666, 0.0
        %v4731 = vmax.f32 %v4667, 0.0
        %v4732 = vmax.f32 %v4668, 0.0
        %v4733 = vmax.f32 %v4669, 0.0
        %v4734 = vmax.f32 %v4670, 0.0
        %v4735 = vmax.f32 %v4671, 0.0
        %v4736 = vmax.f32 %v4672, 0.0
        %v4737 = vmax.f32 %v4673, 0.0
        %v4738 = vmax.f32 %v4674, 0.0
        %v4739 = vmax.f32 %v4675, 0.0
        %v4740 = vmax.f32 %v4676, 0.0
        %v4741 = vmax.f32 %v4677, 0.0
        %v4742 = vmax.f32 %v4678, 0.0
        %v4743 = vmax.f32 %v4679, 0.0
        %v4744 = vmax.f32 %v4680, 0.0
        %v4745 = vmax.f32 %v4681, 0.0
        %v4746 = vmax.f32 %v4682, 0.0
        %v4747 = vmax.f32 %v4683, 0.0
        %v4748 = vmax.f32 %v4684, 0.0
        %v4749 = vmax.f32 %v4685, 0.0
        %v4750 = vmax.f32 %v4686, 0.0
        %v4751 = vmax.f32 %v4687, 0.0
        %v4752 = vmax.f32 %v4688, 0.0
        %v4753 = vmax.f32 %v4689, 0.0
        %v4754 = vmax.f32 %v4690, 0.0
        %v4755 = vmax.f32 %v4691, 0.0
        %v4756 = vmax.f32 %v4692, 0.0
        %v4757 = vmax.f32 %v4693, 0.0
        %v4758 = vmax.f32 %v4694, 0.0
        %v4759 = vmax.f32 %v4695, 0.0
        %v4760 = vmax.f32 %v4696, 0.0
        %v4761 = vmax.f32 %v4697, 0.0
        %v4762 = vmax.f32 %v4698, 0.0
        %v4763 = vmax.f32 %v4699, 0.0
        %v4764 = vmax.f32 %v4700, 0.0
        %v4765 = vmax.f32 %v4701, 0.0
        %v4766 = vmax.f32 %v4702, 0.0
        %v4767 = vmax.f32 %v4703, 0.0
        %v4768 = vpack.c.bf16 %v4708, %v4704
        %v4769 = vpack.c.bf16 %v4709, %v4705
        %v4770 = vpack.c.bf16 %v4710, %v4706
        %v4771 = vpack.c.bf16 %v4711, %v4707
        %v4772 = vpack.c.bf16 %v4716, %v4712
        %v4773 = vpack.c.bf16 %v4717, %v4713
        %v4774 = vpack.c.bf16 %v4718, %v4714
        %v4775 = vpack.c.bf16 %v4719, %v4715
        %v4776 = vpack.c.bf16 %v4724, %v4720
        %v4777 = vpack.c.bf16 %v4725, %v4721
        %v4778 = vpack.c.bf16 %v4726, %v4722
        %v4779 = vpack.c.bf16 %v4727, %v4723
        %v4780 = vpack.c.bf16 %v4732, %v4728
        %v4781 = vpack.c.bf16 %v4733, %v4729
        %v4782 = vpack.c.bf16 %v4734, %v4730
        %v4783 = vpack.c.bf16 %v4735, %v4731
        %v4784 = vpack.c.bf16 %v4740, %v4736
        %v4785 = vpack.c.bf16 %v4741, %v4737
        %v4786 = vpack.c.bf16 %v4742, %v4738
        %v4787 = vpack.c.bf16 %v4743, %v4739
        %v4788 = vpack.c.bf16 %v4748, %v4744
        %v4789 = vpack.c.bf16 %v4749, %v4745
        %v4790 = vpack.c.bf16 %v4750, %v4746
        %v4791 = vpack.c.bf16 %v4751, %v4747
        %v4792 = vpack.c.bf16 %v4756, %v4752
        %v4793 = vpack.c.bf16 %v4757, %v4753
        %v4794 = vpack.c.bf16 %v4758, %v4754
        %v4795 = vpack.c.bf16 %v4759, %v4755
        %v4796 = vpack.c.bf16 %v4764, %v4760
        %v4797 = vpack.c.bf16 %v4765, %v4761
        %v4798 = vpack.c.bf16 %v4766, %v4762
        %v4799 = vpack.c.bf16 %v4767, %v4763
        %v4800 = vld [vmem:[#allocation6] sm:$0xff]
        %v4801 = vld [vmem:[#allocation6 + $0x8] sm:$0xf]
        %v4802 = vld [vmem:[#allocation6 + $0xc] sm:$0xff]
        %v4803 = vld [vmem:[#allocation6 + $0x14] sm:$0xf]
        %v4804 = vld [vmem:[#allocation6 + $0x18] sm:$0xff]
        %v4805 = vld [vmem:[#allocation6 + $0x20] sm:$0xf]
        %v4806 = vld [vmem:[#allocation6 + $0x24] sm:$0xff]
        %v4807 = vld [vmem:[#allocation6 + $0x2c] sm:$0xf]
        %v4808 = vld [vmem:[#allocation6 + $0x30] sm:$0xff]
        %v4809 = vld [vmem:[#allocation6 + $0x38] sm:$0xf]
        %v4810 = vld [vmem:[#allocation6 + $0x3c] sm:$0xff]
        %v4811 = vld [vmem:[#allocation6 + $0x44] sm:$0xf]
        %v4812 = vld [vmem:[#allocation6 + $0x48] sm:$0xff]
        %v4813 = vld [vmem:[#allocation6 + $0x50] sm:$0xf]
        %v4814 = vld [vmem:[#allocation6 + $0x54] sm:$0xff]
        %v4815 = vld [vmem:[#allocation6 + $0x5c] sm:$0xf]
        %v4816 = vld [vmem:[#allocation6 + $0x60] sm:$0xff]
        %v4817 = vld [vmem:[#allocation6 + $0x68] sm:$0xf]
        %v4818 = vld [vmem:[#allocation6 + $0x6c] sm:$0xff]
        %v4819 = vld [vmem:[#allocation6 + $0x74] sm:$0xf]
        %v4820 = vld [vmem:[#allocation6 + $0x78] sm:$0xff]
        %v4821 = vld [vmem:[#allocation6 + $0x80] sm:$0xf]
        %v4822 = vld [vmem:[#allocation6 + $0x84] sm:$0xff]
        %v4823 = vld [vmem:[#allocation6 + $0x8c] sm:$0xf]
        %v4824 = vld [vmem:[#allocation6 + $0x90] sm:$0xff]
        %v4825 = vld [vmem:[#allocation6 + $0x98] sm:$0xf]
        %v4826 = vld [vmem:[#allocation6 + $0x9c] sm:$0xff]
        %v4827 = vld [vmem:[#allocation6 + $0xa4] sm:$0xf]
        %v4828 = vld [vmem:[#allocation6 + $0xa8] sm:$0xff]
        %v4829 = vld [vmem:[#allocation6 + $0xb0] sm:$0xf]
        %v4830 = vld [vmem:[#allocation6 + $0xb4] sm:$0xff]
        %v4831 = vld [vmem:[#allocation6 + $0xbc] sm:$0xf]
        %v4832 = vld [vmem:[#allocation6 + $0xc0] sm:$0xff]
        %v4833 = vld [vmem:[#allocation6 + $0xc8] sm:$0xf]
        %v4834 = vld [vmem:[#allocation6 + $0xcc] sm:$0xff]
        %v4835 = vld [vmem:[#allocation6 + $0xd4] sm:$0xf]
        %v4836 = vld [vmem:[#allocation6 + $0xd8] sm:$0xff]
        %v4837 = vld [vmem:[#allocation6 + $0xe0] sm:$0xf]
        %v4838 = vld [vmem:[#allocation6 + $0xe4] sm:$0xff]
        %v4839 = vld [vmem:[#allocation6 + $0xec] sm:$0xf]
        %v4840 = vld [vmem:[#allocation6 + $0xf0] sm:$0xff]
        %v4841 = vld [vmem:[#allocation6 + $0xf8] sm:$0xf]
        %v4842 = vld [vmem:[#allocation6 + $0xfc] sm:$0xff]
        %v4843 = vld [vmem:[#allocation6 + $0x104] sm:$0xf]
        %v4844 = vld [vmem:[#allocation6 + $0x108] sm:$0xff]
        %v4845 = vld [vmem:[#allocation6 + $0x110] sm:$0xf]
        %v4846 = vld [vmem:[#allocation6 + $0x114] sm:$0xff]
        %v4847 = vld [vmem:[#allocation6 + $0x11c] sm:$0xf]
        %v4848 = vld [vmem:[#allocation6 + $0x120] sm:$0xff]
        %v4849 = vld [vmem:[#allocation6 + $0x128] sm:$0xf]
        %v4850 = vld [vmem:[#allocation6 + $0x12c] sm:$0xff]
        %v4851 = vld [vmem:[#allocation6 + $0x134] sm:$0xf]
        %v4852 = vld [vmem:[#allocation6 + $0x138] sm:$0xff]
        %v4853 = vld [vmem:[#allocation6 + $0x140] sm:$0xf]
        %v4854 = vld [vmem:[#allocation6 + $0x144] sm:$0xff]
        %v4855 = vld [vmem:[#allocation6 + $0x14c] sm:$0xf]
        %v4856 = vld [vmem:[#allocation6 + $0x150] sm:$0xff]
        %v4857 = vld [vmem:[#allocation6 + $0x158] sm:$0xf]
        %v4858 = vld [vmem:[#allocation6 + $0x15c] sm:$0xff]
        %v4859 = vld [vmem:[#allocation6 + $0x164] sm:$0xf]
        %v4860 = vld [vmem:[#allocation6 + $0x168] sm:$0xff]
        %v4861 = vld [vmem:[#allocation6 + $0x170] sm:$0xf]
        %v4862 = vld [vmem:[#allocation6 + $0x174] sm:$0xff]
        %v4863 = vld [vmem:[#allocation6 + $0x17c] sm:$0xf]
        %v4864 = vld [vmem:[#allocation6 + $0x180] sm:$0xff]
        %v4865 = vld [vmem:[#allocation6 + $0x188] sm:$0xf]
        %v4866 = vld [vmem:[#allocation6 + $0x18c] sm:$0xff]
        %v4867 = vld [vmem:[#allocation6 + $0x194] sm:$0xf]
        %v4868 = vld [vmem:[#allocation6 + $0x198] sm:$0xff]
        %v4869 = vld [vmem:[#allocation6 + $0x1a0] sm:$0xf]
        %v4870 = vld [vmem:[#allocation6 + $0x1a4] sm:$0xff]
        %v4871 = vld [vmem:[#allocation6 + $0x1ac] sm:$0xf]
        %v4872 = vld [vmem:[#allocation6 + $0x1b0] sm:$0xff]
        %v4873 = vld [vmem:[#allocation6 + $0x1b8] sm:$0xf]
        %v4874 = vld [vmem:[#allocation6 + $0x1bc] sm:$0xff]
        %v4875 = vld [vmem:[#allocation6 + $0x1c4] sm:$0xf]
        %v4876 = vld [vmem:[#allocation6 + $0x1c8] sm:$0xff]
        %v4877 = vld [vmem:[#allocation6 + $0x1d0] sm:$0xf]
        %v4878 = vld [vmem:[#allocation6 + $0x1d4] sm:$0xff]
        %v4879 = vld [vmem:[#allocation6 + $0x1dc] sm:$0xf]
        %v4880 = vld [vmem:[#allocation6 + $0x1e0] sm:$0xff]
        %v4881 = vld [vmem:[#allocation6 + $0x1e8] sm:$0xf]
        %v4882 = vld [vmem:[#allocation6 + $0x1ec] sm:$0xff]
        %v4883 = vld [vmem:[#allocation6 + $0x1f4] sm:$0xf]
        %v4884 = vld [vmem:[#allocation6 + $0x1f8] sm:$0xff]
        %v4885 = vld [vmem:[#allocation6 + $0x200] sm:$0xf]
        %v4886 = vld [vmem:[#allocation6 + $0x204] sm:$0xff]
        %v4887 = vld [vmem:[#allocation6 + $0x20c] sm:$0xf]
        %v4888 = vld [vmem:[#allocation6 + $0x210] sm:$0xff]
        %v4889 = vld [vmem:[#allocation6 + $0x218] sm:$0xf]
        %v4890 = vld [vmem:[#allocation6 + $0x21c] sm:$0xff]
        %v4891 = vld [vmem:[#allocation6 + $0x224] sm:$0xf]
        %v4892 = vld [vmem:[#allocation6 + $0x228] sm:$0xff]
        %v4893 = vld [vmem:[#allocation6 + $0x230] sm:$0xf]
        %v4894 = vld [vmem:[#allocation6 + $0x234] sm:$0xff]
        %v4895 = vld [vmem:[#allocation6 + $0x23c] sm:$0xf]
        %v4896 = vld [vmem:[#allocation6 + $0x240] sm:$0xff]
        %v4897 = vld [vmem:[#allocation6 + $0x248] sm:$0xf]
        %v4898 = vld [vmem:[#allocation6 + $0x24c] sm:$0xff]
        %v4899 = vld [vmem:[#allocation6 + $0x254] sm:$0xf]
        %v4900 = vld [vmem:[#allocation6 + $0x258] sm:$0xff]
        %v4901 = vld [vmem:[#allocation6 + $0x260] sm:$0xf]
        %v4902 = vld [vmem:[#allocation6 + $0x264] sm:$0xff]
        %v4903 = vld [vmem:[#allocation6 + $0x26c] sm:$0xf]
        %v4904 = vld [vmem:[#allocation6 + $0x270] sm:$0xff]
        %v4905 = vld [vmem:[#allocation6 + $0x278] sm:$0xf]
        %v4906 = vld [vmem:[#allocation6 + $0x27c] sm:$0xff]
        %v4907 = vld [vmem:[#allocation6 + $0x284] sm:$0xf]
        %v4908 = vld [vmem:[#allocation6 + $0x288] sm:$0xff]
        %v4909 = vld [vmem:[#allocation6 + $0x290] sm:$0xf]
        %v4910 = vld [vmem:[#allocation6 + $0x294] sm:$0xff]
        %v4911 = vld [vmem:[#allocation6 + $0x29c] sm:$0xf]
        %v4912 = vld [vmem:[#allocation6 + $0x2a0] sm:$0xff]
        %v4913 = vld [vmem:[#allocation6 + $0x2a8] sm:$0xf]
        %v4914 = vld [vmem:[#allocation6 + $0x2ac] sm:$0xff]
        %v4915 = vld [vmem:[#allocation6 + $0x2b4] sm:$0xf]
        %v4916 = vld [vmem:[#allocation6 + $0x2b8] sm:$0xff]
        %v4917 = vld [vmem:[#allocation6 + $0x2c0] sm:$0xf]
        %v4918 = vld [vmem:[#allocation6 + $0x2c4] sm:$0xff]
        %v4919 = vld [vmem:[#allocation6 + $0x2cc] sm:$0xf]
        %v4920 = vld [vmem:[#allocation6 + $0x2d0] sm:$0xff]
        %v4921 = vld [vmem:[#allocation6 + $0x2d8] sm:$0xf]
        %v4922 = vld [vmem:[#allocation6 + $0x2dc] sm:$0xff]
        %v4923 = vld [vmem:[#allocation6 + $0x2e4] sm:$0xf]
        %v4924 = vld [vmem:[#allocation6 + $0x2e8] sm:$0xff]
        %v4925 = vld [vmem:[#allocation6 + $0x2f0] sm:$0xf]
        %v4926 = vld [vmem:[#allocation6 + $0x2f4] sm:$0xff]
        %v4927 = vld [vmem:[#allocation6 + $0x2fc] sm:$0xf]
        %v4928 = vld [vmem:[%s8] sm:$0x7]
        %v4930 = vperm.slane %v4928, 0
        %v4931 = vperm.slane %v4928, 1
        %v4932 = vperm.slane %v4928, 2
        %v5064 = vunpack.c.l.b16 %v4800
        %v5065 = vunpack.c.h.b16 %v4800
        %v5066 = vunpack.c.l.b16 %v4801
        %v5067 = vunpack.c.l.b16 %v4802
        %v5068 = vunpack.c.h.b16 %v4802
        %v5069 = vunpack.c.l.b16 %v4803
        %v5070 = vunpack.c.l.b16 %v4804
        %v5071 = vunpack.c.h.b16 %v4804
        %v5072 = vunpack.c.l.b16 %v4805
        %v5073 = vunpack.c.l.b16 %v4806
        %v5074 = vunpack.c.h.b16 %v4806
        %v5075 = vunpack.c.l.b16 %v4807
        %v5076 = vunpack.c.l.b16 %v4808
        %v5077 = vunpack.c.h.b16 %v4808
        %v5078 = vunpack.c.l.b16 %v4809
        %v5079 = vunpack.c.l.b16 %v4810
        %v5080 = vunpack.c.h.b16 %v4810
        %v5081 = vunpack.c.l.b16 %v4811
        %v5082 = vunpack.c.l.b16 %v4812
        %v5083 = vunpack.c.h.b16 %v4812
        %v5084 = vunpack.c.l.b16 %v4813
        %v5085 = vunpack.c.l.b16 %v4814
        %v5086 = vunpack.c.h.b16 %v4814
        %v5087 = vunpack.c.l.b16 %v4815
        %v5088 = vunpack.c.l.b16 %v4816
        %v5089 = vunpack.c.h.b16 %v4816
        %v5090 = vunpack.c.l.b16 %v4817
        %v5091 = vunpack.c.l.b16 %v4818
        %v5092 = vunpack.c.h.b16 %v4818
        %v5093 = vunpack.c.l.b16 %v4819
        %v5094 = vunpack.c.l.b16 %v4820
        %v5095 = vunpack.c.h.b16 %v4820
        %v5096 = vunpack.c.l.b16 %v4821
        %v5097 = vunpack.c.l.b16 %v4822
        %v5098 = vunpack.c.h.b16 %v4822
        %v5099 = vunpack.c.l.b16 %v4823
        %v5100 = vunpack.c.l.b16 %v4824
        %v5101 = vunpack.c.h.b16 %v4824
        %v5102 = vunpack.c.l.b16 %v4825
        %v5103 = vunpack.c.l.b16 %v4826
        %v5104 = vunpack.c.h.b16 %v4826
        %v5105 = vunpack.c.l.b16 %v4827
        %v5106 = vunpack.c.l.b16 %v4828
        %v5107 = vunpack.c.h.b16 %v4828
        %v5108 = vunpack.c.l.b16 %v4829
        %v5109 = vunpack.c.l.b16 %v4830
        %v5110 = vunpack.c.h.b16 %v4830
        %v5111 = vunpack.c.l.b16 %v4831
        %v5112 = vunpack.c.l.b16 %v4832
        %v5113 = vunpack.c.h.b16 %v4832
        %v5114 = vunpack.c.l.b16 %v4833
        %v5115 = vunpack.c.l.b16 %v4834
        %v5116 = vunpack.c.h.b16 %v4834
        %v5117 = vunpack.c.l.b16 %v4835
        %v5118 = vunpack.c.l.b16 %v4836
        %v5119 = vunpack.c.h.b16 %v4836
        %v5120 = vunpack.c.l.b16 %v4837
        %v5121 = vunpack.c.l.b16 %v4838
        %v5122 = vunpack.c.h.b16 %v4838
        %v5123 = vunpack.c.l.b16 %v4839
        %v5124 = vunpack.c.l.b16 %v4840
        %v5125 = vunpack.c.h.b16 %v4840
        %v5126 = vunpack.c.l.b16 %v4841
        %v5127 = vunpack.c.l.b16 %v4842
        %v5128 = vunpack.c.h.b16 %v4842
        %v5129 = vunpack.c.l.b16 %v4843
        %v5130 = vunpack.c.l.b16 %v4844
        %v5131 = vunpack.c.h.b16 %v4844
        %v5132 = vunpack.c.l.b16 %v4845
        %v5133 = vunpack.c.l.b16 %v4846
        %v5134 = vunpack.c.h.b16 %v4846
        %v5135 = vunpack.c.l.b16 %v4847
        %v5136 = vunpack.c.l.b16 %v4848
        %v5137 = vunpack.c.h.b16 %v4848
        %v5138 = vunpack.c.l.b16 %v4849
        %v5139 = vunpack.c.l.b16 %v4850
        %v5140 = vunpack.c.h.b16 %v4850
        %v5141 = vunpack.c.l.b16 %v4851
        %v5142 = vunpack.c.l.b16 %v4852
        %v5143 = vunpack.c.h.b16 %v4852
        %v5144 = vunpack.c.l.b16 %v4853
        %v5145 = vunpack.c.l.b16 %v4854
        %v5146 = vunpack.c.h.b16 %v4854
        %v5147 = vunpack.c.l.b16 %v4855
        %v5148 = vunpack.c.l.b16 %v4856
        %v5149 = vunpack.c.h.b16 %v4856
        %v5150 = vunpack.c.l.b16 %v4857
        %v5151 = vunpack.c.l.b16 %v4858
        %v5152 = vunpack.c.h.b16 %v4858
        %v5153 = vunpack.c.l.b16 %v4859
        %v5154 = vunpack.c.l.b16 %v4860
        %v5155 = vunpack.c.h.b16 %v4860
        %v5156 = vunpack.c.l.b16 %v4861
        %v5157 = vunpack.c.l.b16 %v4862
        %v5158 = vunpack.c.h.b16 %v4862
        %v5159 = vunpack.c.l.b16 %v4863
        %v5160 = vunpack.c.l.b16 %v4864
        %v5161 = vunpack.c.h.b16 %v4864
        %v5162 = vunpack.c.l.b16 %v4865
        %v5163 = vunpack.c.l.b16 %v4866
        %v5164 = vunpack.c.h.b16 %v4866
        %v5165 = vunpack.c.l.b16 %v4867
        %v5166 = vunpack.c.l.b16 %v4868
        %v5167 = vunpack.c.h.b16 %v4868
        %v5168 = vunpack.c.l.b16 %v4869
        %v5169 = vunpack.c.l.b16 %v4870
        %v5170 = vunpack.c.h.b16 %v4870
        %v5171 = vunpack.c.l.b16 %v4871
        %v5172 = vunpack.c.l.b16 %v4872
        %v5173 = vunpack.c.h.b16 %v4872
        %v5174 = vunpack.c.l.b16 %v4873
        %v5175 = vunpack.c.l.b16 %v4874
        %v5176 = vunpack.c.h.b16 %v4874
        %v5177 = vunpack.c.l.b16 %v4875
        %v5178 = vunpack.c.l.b16 %v4876
        %v5179 = vunpack.c.h.b16 %v4876
        %v5180 = vunpack.c.l.b16 %v4877
        %v5181 = vunpack.c.l.b16 %v4878
        %v5182 = vunpack.c.h.b16 %v4878
        %v5183 = vunpack.c.l.b16 %v4879
        %v5184 = vunpack.c.l.b16 %v4880
        %v5185 = vunpack.c.h.b16 %v4880
        %v5186 = vunpack.c.l.b16 %v4881
        %v5187 = vunpack.c.l.b16 %v4882
        %v5188 = vunpack.c.h.b16 %v4882
        %v5189 = vunpack.c.l.b16 %v4883
        %v5190 = vunpack.c.l.b16 %v4884
        %v5191 = vunpack.c.h.b16 %v4884
        %v5192 = vunpack.c.l.b16 %v4885
        %v5193 = vunpack.c.l.b16 %v4886
        %v5194 = vunpack.c.h.b16 %v4886
        %v5195 = vunpack.c.l.b16 %v4887
        %v5196 = vunpack.c.l.b16 %v4888
        %v5197 = vunpack.c.h.b16 %v4888
        %v5198 = vunpack.c.l.b16 %v4889
        %v5199 = vunpack.c.l.b16 %v4890
        %v5200 = vunpack.c.h.b16 %v4890
        %v5201 = vunpack.c.l.b16 %v4891
        %v5202 = vunpack.c.l.b16 %v4892
        %v5203 = vunpack.c.h.b16 %v4892
        %v5204 = vunpack.c.l.b16 %v4893
        %v5205 = vunpack.c.l.b16 %v4894
        %v5206 = vunpack.c.h.b16 %v4894
        %v5207 = vunpack.c.l.b16 %v4895
        %v5208 = vunpack.c.l.b16 %v4896
        %v5209 = vunpack.c.h.b16 %v4896
        %v5210 = vunpack.c.l.b16 %v4897
        %v5211 = vunpack.c.l.b16 %v4898
        %v5212 = vunpack.c.h.b16 %v4898
        %v5213 = vunpack.c.l.b16 %v4899
        %v5214 = vunpack.c.l.b16 %v4900
        %v5215 = vunpack.c.h.b16 %v4900
        %v5216 = vunpack.c.l.b16 %v4901
        %v5217 = vunpack.c.l.b16 %v4902
        %v5218 = vunpack.c.h.b16 %v4902
        %v5219 = vunpack.c.l.b16 %v4903
        %v5220 = vunpack.c.l.b16 %v4904
        %v5221 = vunpack.c.h.b16 %v4904
        %v5222 = vunpack.c.l.b16 %v4905
        %v5223 = vunpack.c.l.b16 %v4906
        %v5224 = vunpack.c.h.b16 %v4906
        %v5225 = vunpack.c.l.b16 %v4907
        %v5226 = vunpack.c.l.b16 %v4908
        %v5227 = vunpack.c.h.b16 %v4908
        %v5228 = vunpack.c.l.b16 %v4909
        %v5229 = vunpack.c.l.b16 %v4910
        %v5230 = vunpack.c.h.b16 %v4910
        %v5231 = vunpack.c.l.b16 %v4911
        %v5232 = vunpack.c.l.b16 %v4912
        %v5233 = vunpack.c.h.b16 %v4912
        %v5234 = vunpack.c.l.b16 %v4913
        %v5235 = vunpack.c.l.b16 %v4914
        %v5236 = vunpack.c.h.b16 %v4914
        %v5237 = vunpack.c.l.b16 %v4915
        %v5238 = vunpack.c.l.b16 %v4916
        %v5239 = vunpack.c.h.b16 %v4916
        %v5240 = vunpack.c.l.b16 %v4917
        %v5241 = vunpack.c.l.b16 %v4918
        %v5242 = vunpack.c.h.b16 %v4918
        %v5243 = vunpack.c.l.b16 %v4919
        %v5244 = vunpack.c.l.b16 %v4920
        %v5245 = vunpack.c.h.b16 %v4920
        %v5246 = vunpack.c.l.b16 %v4921
        %v5247 = vunpack.c.l.b16 %v4922
        %v5248 = vunpack.c.h.b16 %v4922
        %v5249 = vunpack.c.l.b16 %v4923
        %v5250 = vunpack.c.l.b16 %v4924
        %v5251 = vunpack.c.h.b16 %v4924
        %v5252 = vunpack.c.l.b16 %v4925
        %v5253 = vunpack.c.l.b16 %v4926
        %v5254 = vunpack.c.h.b16 %v4926
        %v5255 = vunpack.c.l.b16 %v4927
        %v5256 = vpack.c.b16 %v5067, %v5064
        %v5257 = vpack.c.b16 %v5068, %v5065
        %v5258 = vpack.c.b16 %v5069, %v5066
        %v5259 = vpack.c.b16 %v5073, %v5070
        %v5260 = vpack.c.b16 %v5074, %v5071
        %v5261 = vpack.c.b16 %v5075, %v5072
        %v5262 = vpack.c.b16 %v5079, %v5076
        %v5263 = vpack.c.b16 %v5080, %v5077
        %v5264 = vpack.c.b16 %v5081, %v5078
        %v5265 = vpack.c.b16 %v5085, %v5082
        %v5266 = vpack.c.b16 %v5086, %v5083
        %v5267 = vpack.c.b16 %v5087, %v5084
        %v5268 = vpack.c.b16 %v5091, %v5088
        %v5269 = vpack.c.b16 %v5092, %v5089
        %v5270 = vpack.c.b16 %v5093, %v5090
        %v5271 = vpack.c.b16 %v5097, %v5094
        %v5272 = vpack.c.b16 %v5098, %v5095
        %v5273 = vpack.c.b16 %v5099, %v5096
        %v5274 = vpack.c.b16 %v5103, %v5100
        %v5275 = vpack.c.b16 %v5104, %v5101
        %v5276 = vpack.c.b16 %v5105, %v5102
        %v5277 = vpack.c.b16 %v5109, %v5106
        %v5278 = vpack.c.b16 %v5110, %v5107
        %v5279 = vpack.c.b16 %v5111, %v5108
        %v5280 = vpack.c.b16 %v5115, %v5112
        %v5281 = vpack.c.b16 %v5116, %v5113
        %v5282 = vpack.c.b16 %v5117, %v5114
        %v5283 = vpack.c.b16 %v5121, %v5118
        %v5284 = vpack.c.b16 %v5122, %v5119
        %v5285 = vpack.c.b16 %v5123, %v5120
        %v5286 = vpack.c.b16 %v5127, %v5124
        %v5287 = vpack.c.b16 %v5128, %v5125
        %v5288 = vpack.c.b16 %v5129, %v5126
        %v5289 = vpack.c.b16 %v5133, %v5130
        %v5290 = vpack.c.b16 %v5134, %v5131
        %v5291 = vpack.c.b16 %v5135, %v5132
        %v5292 = vpack.c.b16 %v5139, %v5136
        %v5293 = vpack.c.b16 %v5140, %v5137
        %v5294 = vpack.c.b16 %v5141, %v5138
        %v5295 = vpack.c.b16 %v5145, %v5142
        %v5296 = vpack.c.b16 %v5146, %v5143
        %v5297 = vpack.c.b16 %v5147, %v5144
        %v5298 = vpack.c.b16 %v5151, %v5148
        %v5299 = vpack.c.b16 %v5152, %v5149
        %v5300 = vpack.c.b16 %v5153, %v5150
        %v5301 = vpack.c.b16 %v5157, %v5154
        %v5302 = vpack.c.b16 %v5158, %v5155
        %v5303 = vpack.c.b16 %v5159, %v5156
        %v5304 = vpack.c.b16 %v5163, %v5160
        %v5305 = vpack.c.b16 %v5164, %v5161
        %v5306 = vpack.c.b16 %v5165, %v5162
        %v5307 = vpack.c.b16 %v5169, %v5166
        %v5308 = vpack.c.b16 %v5170, %v5167
        %v5309 = vpack.c.b16 %v5171, %v5168
        %v5310 = vpack.c.b16 %v5175, %v5172
        %v5311 = vpack.c.b16 %v5176, %v5173
        %v5312 = vpack.c.b16 %v5177, %v5174
        %v5313 = vpack.c.b16 %v5181, %v5178
        %v5314 = vpack.c.b16 %v5182, %v5179
        %v5315 = vpack.c.b16 %v5183, %v5180
        %v5316 = vpack.c.b16 %v5187, %v5184
        %v5317 = vpack.c.b16 %v5188, %v5185
        %v5318 = vpack.c.b16 %v5189, %v5186
        %v5319 = vpack.c.b16 %v5193, %v5190
        %v5320 = vpack.c.b16 %v5194, %v5191
        %v5321 = vpack.c.b16 %v5195, %v5192
        %v5322 = vpack.c.b16 %v5199, %v5196
        %v5323 = vpack.c.b16 %v5200, %v5197
        %v5324 = vpack.c.b16 %v5201, %v5198
        %v5325 = vpack.c.b16 %v5205, %v5202
        %v5326 = vpack.c.b16 %v5206, %v5203
        %v5327 = vpack.c.b16 %v5207, %v5204
        %v5328 = vpack.c.b16 %v5211, %v5208
        %v5329 = vpack.c.b16 %v5212, %v5209
        %v5330 = vpack.c.b16 %v5213, %v5210
        %v5331 = vpack.c.b16 %v5217, %v5214
        %v5332 = vpack.c.b16 %v5218, %v5215
        %v5333 = vpack.c.b16 %v5219, %v5216
        %v5334 = vpack.c.b16 %v5223, %v5220
        %v5335 = vpack.c.b16 %v5224, %v5221
        %v5336 = vpack.c.b16 %v5225, %v5222
        %v5337 = vpack.c.b16 %v5229, %v5226
        %v5338 = vpack.c.b16 %v5230, %v5227
        %v5339 = vpack.c.b16 %v5231, %v5228
        %v5340 = vpack.c.b16 %v5235, %v5232
        %v5341 = vpack.c.b16 %v5236, %v5233
        %v5342 = vpack.c.b16 %v5237, %v5234
        %v5343 = vpack.c.b16 %v5241, %v5238
        %v5344 = vpack.c.b16 %v5242, %v5239
        %v5345 = vpack.c.b16 %v5243, %v5240
        %v5346 = vpack.c.b16 %v5247, %v5244
        %v5347 = vpack.c.b16 %v5248, %v5245
        %v5348 = vpack.c.b16 %v5249, %v5246
        %v5349 = vpack.c.b16 %v5253, %v5250
        %v5350 = vpack.c.b16 %v5254, %v5251
        %v5351 = vpack.c.b16 %v5255, %v5252
        %5448 = vmatpush.bf16.msra.mxu0 %v5277
        %5449 = vmatpush.bf16.msra.mxu0 %v5274
        %5450 = vmatpush.bf16.msra.mxu0 %v5271
        %5451 = vmatpush.bf16.msra.mxu0 %v5268
        %5452 = vmatpush.bf16.msra.mxu0 %v5265
        %5453 = vmatpush.bf16.msra.mxu0 %v5262
        %5454 = vmatpush.bf16.msra.mxu0 %v5259
        %5455 = vmatpush.bf16.msra.mxu0 %v5256
        %5456 = vmatmul.bf16.gmra.mxu0 %v4768
        %v5457 = vpop.f32.mrf.mxu0
        %v5458 = vadd.f32 %v4930, %v5457
        %v5459 = vpop.f32.mrf.mxu0
        %v5460 = vadd.f32 %v4930, %v5459
        %5461 = vmatmul.bf16.gmra.mxu0 %v4772
        %v5462 = vpop.f32.mrf.mxu0
        %v5463 = vadd.f32 %v4930, %v5462
        %v5464 = vpop.f32.mrf.mxu0
        %v5465 = vadd.f32 %v4930, %v5464
        %5466 = vmatmul.bf16.gmra.mxu0 %v4776
        %v5467 = vpop.f32.mrf.mxu0
        %v5468 = vadd.f32 %v4930, %v5467
        %v5469 = vpop.f32.mrf.mxu0
        %v5470 = vadd.f32 %v4930, %v5469
        %5471 = vmatmul.bf16.gmra.mxu0 %v4780
        %v5472 = vpop.f32.mrf.mxu0
        %v5473 = vadd.f32 %v4930, %v5472
        %v5474 = vpop.f32.mrf.mxu0
        %v5475 = vadd.f32 %v4930, %v5474
        %5476 = vmatmul.bf16.gmra.mxu0 %v4784
        %v5477 = vpop.f32.mrf.mxu0
        %v5478 = vadd.f32 %v4930, %v5477
        %v5479 = vpop.f32.mrf.mxu0
        %v5480 = vadd.f32 %v4930, %v5479
        %5481 = vmatmul.bf16.gmra.mxu0 %v4788
        %v5482 = vpop.f32.mrf.mxu0
        %v5483 = vadd.f32 %v4930, %v5482
        %v5484 = vpop.f32.mrf.mxu0
        %v5485 = vadd.f32 %v4930, %v5484
        %5486 = vmatmul.bf16.gmra.mxu0 %v4792
        %v5487 = vpop.f32.mrf.mxu0
        %v5488 = vadd.f32 %v4930, %v5487
        %v5489 = vpop.f32.mrf.mxu0
        %v5490 = vadd.f32 %v4930, %v5489
        %5491 = vmatmul.bf16.gmra.mxu0 %v4796
        %v5492 = vpop.f32.mrf.mxu0
        %v5493 = vadd.f32 %v4930, %v5492
        %v5494 = vpop.f32.mrf.mxu0
        %v5495 = vadd.f32 %v4930, %v5494
        %5496 = vdwg.mxu0
        %5497 = vmatpush.bf16.msra.mxu0 %v5301
        %5498 = vmatpush.bf16.msra.mxu0 %v5298
        %5499 = vmatpush.bf16.msra.mxu0 %v5295
        %5500 = vmatpush.bf16.msra.mxu0 %v5292
        %5501 = vmatpush.bf16.msra.mxu0 %v5289
        %5502 = vmatpush.bf16.msra.mxu0 %v5286
        %5503 = vmatpush.bf16.msra.mxu0 %v5283
        %5504 = vmatpush.bf16.msra.mxu0 %v5280
        %5505 = vmatmul.bf16.gmra.mxu0 %v4769
        %v5506 = vpop.f32.mrf.mxu0
        %v5507 = vadd.f32 %v5458, %v5506
        %v5508 = vpop.f32.mrf.mxu0
        %v5509 = vadd.f32 %v5460, %v5508
        %5510 = vmatmul.bf16.gmra.mxu0 %v4773
        %v5511 = vpop.f32.mrf.mxu0
        %v5512 = vadd.f32 %v5463, %v5511
        %v5513 = vpop.f32.mrf.mxu0
        %v5514 = vadd.f32 %v5465, %v5513
        %5515 = vmatmul.bf16.gmra.mxu0 %v4777
        %v5516 = vpop.f32.mrf.mxu0
        %v5517 = vadd.f32 %v5468, %v5516
        %v5518 = vpop.f32.mrf.mxu0
        %v5519 = vadd.f32 %v5470, %v5518
        %5520 = vmatmul.bf16.gmra.mxu0 %v4781
        %v5521 = vpop.f32.mrf.mxu0
        %v5522 = vadd.f32 %v5473, %v5521
        %v5523 = vpop.f32.mrf.mxu0
        %v5524 = vadd.f32 %v5475, %v5523
        %5525 = vmatmul.bf16.gmra.mxu0 %v4785
        %v5526 = vpop.f32.mrf.mxu0
        %v5527 = vadd.f32 %v5478, %v5526
        %v5528 = vpop.f32.mrf.mxu0
        %v5529 = vadd.f32 %v5480, %v5528
        %5530 = vmatmul.bf16.gmra.mxu0 %v4789
        %v5531 = vpop.f32.mrf.mxu0
        %v5532 = vadd.f32 %v5483, %v5531
        %v5533 = vpop.f32.mrf.mxu0
        %v5534 = vadd.f32 %v5485, %v5533
        %5535 = vmatmul.bf16.gmra.mxu0 %v4793
        %v5536 = vpop.f32.mrf.mxu0
        %v5537 = vadd.f32 %v5488, %v5536
        %v5538 = vpop.f32.mrf.mxu0
        %v5539 = vadd.f32 %v5490, %v5538
        %5540 = vmatmul.bf16.gmra.mxu0 %v4797
        %v5541 = vpop.f32.mrf.mxu0
        %v5542 = vadd.f32 %v5493, %v5541
        %v5543 = vpop.f32.mrf.mxu0
        %v5544 = vadd.f32 %v5495, %v5543
        %5545 = vdwg.mxu0
        %5546 = vmatpush.bf16.msra.mxu0 %v5325
        %5547 = vmatpush.bf16.msra.mxu0 %v5322
        %5548 = vmatpush.bf16.msra.mxu0 %v5319
        %5549 = vmatpush.bf16.msra.mxu0 %v5316
        %5550 = vmatpush.bf16.msra.mxu0 %v5313
        %5551 = vmatpush.bf16.msra.mxu0 %v5310
        %5552 = vmatpush.bf16.msra.mxu0 %v5307
        %5553 = vmatpush.bf16.msra.mxu0 %v5304
        %5554 = vmatmul.bf16.gmra.mxu0 %v4770
        %v5555 = vpop.f32.mrf.mxu0
        %v5556 = vadd.f32 %v5507, %v5555
        %v5557 = vpop.f32.mrf.mxu0
        %v5558 = vadd.f32 %v5509, %v5557
        %5559 = vmatmul.bf16.gmra.mxu0 %v4774
        %v5560 = vpop.f32.mrf.mxu0
        %v5561 = vadd.f32 %v5512, %v5560
        %v5562 = vpop.f32.mrf.mxu0
        %v5563 = vadd.f32 %v5514, %v5562
        %5564 = vmatmul.bf16.gmra.mxu0 %v4778
        %v5565 = vpop.f32.mrf.mxu0
        %v5566 = vadd.f32 %v5517, %v5565
        %v5567 = vpop.f32.mrf.mxu0
        %v5568 = vadd.f32 %v5519, %v5567
        %5569 = vmatmul.bf16.gmra.mxu0 %v4782
        %v5570 = vpop.f32.mrf.mxu0
        %v5571 = vadd.f32 %v5522, %v5570
        %v5572 = vpop.f32.mrf.mxu0
        %v5573 = vadd.f32 %v5524, %v5572
        %5574 = vmatmul.bf16.gmra.mxu0 %v4786
        %v5575 = vpop.f32.mrf.mxu0
        %v5576 = vadd.f32 %v5527, %v5575
        %v5577 = vpop.f32.mrf.mxu0
        %v5578 = vadd.f32 %v5529, %v5577
        %5579 = vmatmul.bf16.gmra.mxu0 %v4790
        %v5580 = vpop.f32.mrf.mxu0
        %v5581 = vadd.f32 %v5532, %v5580
        %v5582 = vpop.f32.mrf.mxu0
        %v5583 = vadd.f32 %v5534, %v5582
        %5584 = vmatmul.bf16.gmra.mxu0 %v4794
        %v5585 = vpop.f32.mrf.mxu0
        %v5586 = vadd.f32 %v5537, %v5585
        %v5587 = vpop.f32.mrf.mxu0
        %v5588 = vadd.f32 %v5539, %v5587
        %5589 = vmatmul.bf16.gmra.mxu0 %v4798
        %v5590 = vpop.f32.mrf.mxu0
        %v5591 = vadd.f32 %v5542, %v5590
        %v5592 = vpop.f32.mrf.mxu0
        %v5593 = vadd.f32 %v5544, %v5592
        %5594 = vdwg.mxu0
        %5595 = vmatpush.bf16.msra.mxu0 %v5349
        %5596 = vmatpush.bf16.msra.mxu0 %v5346
        %5597 = vmatpush.bf16.msra.mxu0 %v5343
        %5598 = vmatpush.bf16.msra.mxu0 %v5340
        %5599 = vmatpush.bf16.msra.mxu0 %v5337
        %5600 = vmatpush.bf16.msra.mxu0 %v5334
        %5601 = vmatpush.bf16.msra.mxu0 %v5331
        %5602 = vmatpush.bf16.msra.mxu0 %v5328
        %5603 = vmatmul.bf16.gmra.mxu0 %v4771
        %v5604 = vpop.f32.mrf.mxu0
        %v5605 = vadd.f32 %v5556, %v5604
        %v5606 = vpop.f32.mrf.mxu0
        %v5607 = vadd.f32 %v5558, %v5606
        %5608 = vmatmul.bf16.gmra.mxu0 %v4775
        %v5609 = vpop.f32.mrf.mxu0
        %v5610 = vadd.f32 %v5561, %v5609
        %v5611 = vpop.f32.mrf.mxu0
        %v5612 = vadd.f32 %v5563, %v5611
        %5613 = vmatmul.bf16.gmra.mxu0 %v4779
        %v5614 = vpop.f32.mrf.mxu0
        %v5615 = vadd.f32 %v5566, %v5614
        %v5616 = vpop.f32.mrf.mxu0
        %v5617 = vadd.f32 %v5568, %v5616
        %5618 = vmatmul.bf16.gmra.mxu0 %v4783
        %v5619 = vpop.f32.mrf.mxu0
        %v5620 = vadd.f32 %v5571, %v5619
        %v5621 = vpop.f32.mrf.mxu0
        %v5622 = vadd.f32 %v5573, %v5621
        %5623 = vmatmul.bf16.gmra.mxu0 %v4787
        %v5624 = vpop.f32.mrf.mxu0
        %v5625 = vadd.f32 %v5576, %v5624
        %v5626 = vpop.f32.mrf.mxu0
        %v5627 = vadd.f32 %v5578, %v5626
        %5628 = vmatmul.bf16.gmra.mxu0 %v4791
        %v5629 = vpop.f32.mrf.mxu0
        %v5630 = vadd.f32 %v5581, %v5629
        %v5631 = vpop.f32.mrf.mxu0
        %v5632 = vadd.f32 %v5583, %v5631
        %5633 = vmatmul.bf16.gmra.mxu0 %v4795
        %v5634 = vpop.f32.mrf.mxu0
        %v5635 = vadd.f32 %v5586, %v5634
        %v5636 = vpop.f32.mrf.mxu0
        %v5637 = vadd.f32 %v5588, %v5636
        %5638 = vmatmul.bf16.gmra.mxu0 %v4799
        %v5639 = vpop.f32.mrf.mxu0
        %v5640 = vadd.f32 %v5591, %v5639
        %v5641 = vpop.f32.mrf.mxu0
        %v5642 = vadd.f32 %v5593, %v5641
        %5643 = vdwg.mxu0
        %5644 = vmatpush.bf16.msra.mxu0 %v5278
        %5645 = vmatpush.bf16.msra.mxu0 %v5275
        %5646 = vmatpush.bf16.msra.mxu0 %v5272
        %5647 = vmatpush.bf16.msra.mxu0 %v5269
        %5648 = vmatpush.bf16.msra.mxu0 %v5266
        %5649 = vmatpush.bf16.msra.mxu0 %v5263
        %5650 = vmatpush.bf16.msra.mxu0 %v5260
        %5651 = vmatpush.bf16.msra.mxu0 %v5257
        %5652 = vmatmul.bf16.gmra.mxu0 %v4768
        %v5653 = vpop.f32.mrf.mxu0
        %v5654 = vadd.f32 %v4931, %v5653
        %v5655 = vpop.f32.mrf.mxu0
        %v5656 = vadd.f32 %v4931, %v5655
        %5657 = vmatmul.bf16.gmra.mxu0 %v4772
        %v5658 = vpop.f32.mrf.mxu0
        %v5659 = vadd.f32 %v4931, %v5658
        %v5660 = vpop.f32.mrf.mxu0
        %v5661 = vadd.f32 %v4931, %v5660
        %5662 = vmatmul.bf16.gmra.mxu0 %v4776
        %v5663 = vpop.f32.mrf.mxu0
        %v5664 = vadd.f32 %v4931, %v5663
        %v5665 = vpop.f32.mrf.mxu0
        %v5666 = vadd.f32 %v4931, %v5665
        %5667 = vmatmul.bf16.gmra.mxu0 %v4780
        %v5668 = vpop.f32.mrf.mxu0
        %v5669 = vadd.f32 %v4931, %v5668
        %v5670 = vpop.f32.mrf.mxu0
        %v5671 = vadd.f32 %v4931, %v5670
        %5672 = vmatmul.bf16.gmra.mxu0 %v4784
        %v5673 = vpop.f32.mrf.mxu0
        %v5674 = vadd.f32 %v4931, %v5673
        %v5675 = vpop.f32.mrf.mxu0
        %v5676 = vadd.f32 %v4931, %v5675
        %5677 = vmatmul.bf16.gmra.mxu0 %v4788
        %v5678 = vpop.f32.mrf.mxu0
        %v5679 = vadd.f32 %v4931, %v5678
        %v5680 = vpop.f32.mrf.mxu0
        %v5681 = vadd.f32 %v4931, %v5680
        %5682 = vmatmul.bf16.gmra.mxu0 %v4792
        %v5683 = vpop.f32.mrf.mxu0
        %v5684 = vadd.f32 %v4931, %v5683
        %v5685 = vpop.f32.mrf.mxu0
        %v5686 = vadd.f32 %v4931, %v5685
        %5687 = vmatmul.bf16.gmra.mxu0 %v4796
        %v5688 = vpop.f32.mrf.mxu0
        %v5689 = vadd.f32 %v4931, %v5688
        %v5690 = vpop.f32.mrf.mxu0
        %v5691 = vadd.f32 %v4931, %v5690
        %5692 = vdwg.mxu0
        %5693 = vmatpush.bf16.msra.mxu0 %v5302
        %5694 = vmatpush.bf16.msra.mxu0 %v5299
        %5695 = vmatpush.bf16.msra.mxu0 %v5296
        %5696 = vmatpush.bf16.msra.mxu0 %v5293
        %5697 = vmatpush.bf16.msra.mxu0 %v5290
        %5698 = vmatpush.bf16.msra.mxu0 %v5287
        %5699 = vmatpush.bf16.msra.mxu0 %v5284
        %5700 = vmatpush.bf16.msra.mxu0 %v5281
        %5701 = vmatmul.bf16.gmra.mxu0 %v4769
        %v5702 = vpop.f32.mrf.mxu0
        %v5703 = vadd.f32 %v5654, %v5702
        %v5704 = vpop.f32.mrf.mxu0
        %v5705 = vadd.f32 %v5656, %v5704
        %5706 = vmatmul.bf16.gmra.mxu0 %v4773
        %v5707 = vpop.f32.mrf.mxu0
        %v5708 = vadd.f32 %v5659, %v5707
        %v5709 = vpop.f32.mrf.mxu0
        %v5710 = vadd.f32 %v5661, %v5709
        %5711 = vmatmul.bf16.gmra.mxu0 %v4777
        %v5712 = vpop.f32.mrf.mxu0
        %v5713 = vadd.f32 %v5664, %v5712
        %v5714 = vpop.f32.mrf.mxu0
        %v5715 = vadd.f32 %v5666, %v5714
        %5716 = vmatmul.bf16.gmra.mxu0 %v4781
        %v5717 = vpop.f32.mrf.mxu0
        %v5718 = vadd.f32 %v5669, %v5717
        %v5719 = vpop.f32.mrf.mxu0
        %v5720 = vadd.f32 %v5671, %v5719
        %5721 = vmatmul.bf16.gmra.mxu0 %v4785
        %v5722 = vpop.f32.mrf.mxu0
        %v5723 = vadd.f32 %v5674, %v5722
        %v5724 = vpop.f32.mrf.mxu0
        %v5725 = vadd.f32 %v5676, %v5724
        %5726 = vmatmul.bf16.gmra.mxu0 %v4789
        %v5727 = vpop.f32.mrf.mxu0
        %v5728 = vadd.f32 %v5679, %v5727
        %v5729 = vpop.f32.mrf.mxu0
        %v5730 = vadd.f32 %v5681, %v5729
        %5731 = vmatmul.bf16.gmra.mxu0 %v4793
        %v5732 = vpop.f32.mrf.mxu0
        %v5733 = vadd.f32 %v5684, %v5732
        %v5734 = vpop.f32.mrf.mxu0
        %v5735 = vadd.f32 %v5686, %v5734
        %5736 = vmatmul.bf16.gmra.mxu0 %v4797
        %v5737 = vpop.f32.mrf.mxu0
        %v5738 = vadd.f32 %v5689, %v5737
        %v5739 = vpop.f32.mrf.mxu0
        %v5740 = vadd.f32 %v5691, %v5739
        %5741 = vdwg.mxu0
        %5742 = vmatpush.bf16.msra.mxu0 %v5326
        %5743 = vmatpush.bf16.msra.mxu0 %v5323
        %5744 = vmatpush.bf16.msra.mxu0 %v5320
        %5745 = vmatpush.bf16.msra.mxu0 %v5317
        %5746 = vmatpush.bf16.msra.mxu0 %v5314
        %5747 = vmatpush.bf16.msra.mxu0 %v5311
        %5748 = vmatpush.bf16.msra.mxu0 %v5308
        %5749 = vmatpush.bf16.msra.mxu0 %v5305
        %5750 = vmatmul.bf16.gmra.mxu0 %v4770
        %v5751 = vpop.f32.mrf.mxu0
        %v5752 = vadd.f32 %v5703, %v5751
        %v5753 = vpop.f32.mrf.mxu0
        %v5754 = vadd.f32 %v5705, %v5753
        %5755 = vmatmul.bf16.gmra.mxu0 %v4774
        %v5756 = vpop.f32.mrf.mxu0
        %v5757 = vadd.f32 %v5708, %v5756
        %v5758 = vpop.f32.mrf.mxu0
        %v5759 = vadd.f32 %v5710, %v5758
        %5760 = vmatmul.bf16.gmra.mxu0 %v4778
        %v5761 = vpop.f32.mrf.mxu0
        %v5762 = vadd.f32 %v5713, %v5761
        %v5763 = vpop.f32.mrf.mxu0
        %v5764 = vadd.f32 %v5715, %v5763
        %5765 = vmatmul.bf16.gmra.mxu0 %v4782
        %v5766 = vpop.f32.mrf.mxu0
        %v5767 = vadd.f32 %v5718, %v5766
        %v5768 = vpop.f32.mrf.mxu0
        %v5769 = vadd.f32 %v5720, %v5768
        %5770 = vmatmul.bf16.gmra.mxu0 %v4786
        %v5771 = vpop.f32.mrf.mxu0
        %v5772 = vadd.f32 %v5723, %v5771
        %v5773 = vpop.f32.mrf.mxu0
        %v5774 = vadd.f32 %v5725, %v5773
        %5775 = vmatmul.bf16.gmra.mxu0 %v4790
        %v5776 = vpop.f32.mrf.mxu0
        %v5777 = vadd.f32 %v5728, %v5776
        %v5778 = vpop.f32.mrf.mxu0
        %v5779 = vadd.f32 %v5730, %v5778
        %5780 = vmatmul.bf16.gmra.mxu0 %v4794
        %v5781 = vpop.f32.mrf.mxu0
        %v5782 = vadd.f32 %v5733, %v5781
        %v5783 = vpop.f32.mrf.mxu0
        %v5784 = vadd.f32 %v5735, %v5783
        %5785 = vmatmul.bf16.gmra.mxu0 %v4798
        %v5786 = vpop.f32.mrf.mxu0
        %v5787 = vadd.f32 %v5738, %v5786
        %v5788 = vpop.f32.mrf.mxu0
        %v5789 = vadd.f32 %v5740, %v5788
        %5790 = vdwg.mxu0
        %5791 = vmatpush.bf16.msra.mxu0 %v5350
        %5792 = vmatpush.bf16.msra.mxu0 %v5347
        %5793 = vmatpush.bf16.msra.mxu0 %v5344
        %5794 = vmatpush.bf16.msra.mxu0 %v5341
        %5795 = vmatpush.bf16.msra.mxu0 %v5338
        %5796 = vmatpush.bf16.msra.mxu0 %v5335
        %5797 = vmatpush.bf16.msra.mxu0 %v5332
        %5798 = vmatpush.bf16.msra.mxu0 %v5329
        %5799 = vmatmul.bf16.gmra.mxu0 %v4771
        %v5800 = vpop.f32.mrf.mxu0
        %v5801 = vadd.f32 %v5752, %v5800
        %v5802 = vpop.f32.mrf.mxu0
        %v5803 = vadd.f32 %v5754, %v5802
        %5804 = vmatmul.bf16.gmra.mxu0 %v4775
        %v5805 = vpop.f32.mrf.mxu0
        %v5806 = vadd.f32 %v5757, %v5805
        %v5807 = vpop.f32.mrf.mxu0
        %v5808 = vadd.f32 %v5759, %v5807
        %5809 = vmatmul.bf16.gmra.mxu0 %v4779
        %v5810 = vpop.f32.mrf.mxu0
        %v5811 = vadd.f32 %v5762, %v5810
        %v5812 = vpop.f32.mrf.mxu0
        %v5813 = vadd.f32 %v5764, %v5812
        %5814 = vmatmul.bf16.gmra.mxu0 %v4783
        %v5815 = vpop.f32.mrf.mxu0
        %v5816 = vadd.f32 %v5767, %v5815
        %v5817 = vpop.f32.mrf.mxu0
        %v5818 = vadd.f32 %v5769, %v5817
        %5819 = vmatmul.bf16.gmra.mxu0 %v4787
        %v5820 = vpop.f32.mrf.mxu0
        %v5821 = vadd.f32 %v5772, %v5820
        %v5822 = vpop.f32.mrf.mxu0
        %v5823 = vadd.f32 %v5774, %v5822
        %5824 = vmatmul.bf16.gmra.mxu0 %v4791
        %v5825 = vpop.f32.mrf.mxu0
        %v5826 = vadd.f32 %v5777, %v5825
        %v5827 = vpop.f32.mrf.mxu0
        %v5828 = vadd.f32 %v5779, %v5827
        %5829 = vmatmul.bf16.gmra.mxu0 %v4795
        %v5830 = vpop.f32.mrf.mxu0
        %v5831 = vadd.f32 %v5782, %v5830
        %v5832 = vpop.f32.mrf.mxu0
        %v5833 = vadd.f32 %v5784, %v5832
        %5834 = vmatmul.bf16.gmra.mxu0 %v4799
        %v5835 = vpop.f32.mrf.mxu0
        %v5836 = vadd.f32 %v5787, %v5835
        %v5837 = vpop.f32.mrf.mxu0
        %v5838 = vadd.f32 %v5789, %v5837
        %5839 = vdwg.mxu0
        %5840 = vmatpush.bf16.msra.mxu0 %v5279
        %5841 = vmatpush.bf16.msra.mxu0 %v5276
        %5842 = vmatpush.bf16.msra.mxu0 %v5273
        %5843 = vmatpush.bf16.msra.mxu0 %v5270
        %5844 = vmatpush.bf16.msra.mxu0 %v5267
        %5845 = vmatpush.bf16.msra.mxu0 %v5264
        %5846 = vmatpush.bf16.msra.mxu0 %v5261
        %5847 = vmatpush.bf16.msra.mxu0 %v5258
        %5848 = vmatmul.bf16.gmra.mxu0 %v4768
        %v5849 = vpop.f32.mrf.mxu0
        %v5850 = vadd.f32 %v4932, %v5849
        %v5851 = vpop.f32.mrf.mxu0
        %v5852 = vadd.f32 %v4932, %v5851
        %5853 = vmatmul.bf16.gmra.mxu0 %v4772
        %v5854 = vpop.f32.mrf.mxu0
        %v5855 = vadd.f32 %v4932, %v5854
        %v5856 = vpop.f32.mrf.mxu0
        %v5857 = vadd.f32 %v4932, %v5856
        %5858 = vmatmul.bf16.gmra.mxu0 %v4776
        %v5859 = vpop.f32.mrf.mxu0
        %v5860 = vadd.f32 %v4932, %v5859
        %v5861 = vpop.f32.mrf.mxu0
        %v5862 = vadd.f32 %v4932, %v5861
        %5863 = vmatmul.bf16.gmra.mxu0 %v4780
        %v5864 = vpop.f32.mrf.mxu0
        %v5865 = vadd.f32 %v4932, %v5864
        %v5866 = vpop.f32.mrf.mxu0
        %v5867 = vadd.f32 %v4932, %v5866
        %5868 = vmatmul.bf16.gmra.mxu0 %v4784
        %v5869 = vpop.f32.mrf.mxu0
        %v5870 = vadd.f32 %v4932, %v5869
        %v5871 = vpop.f32.mrf.mxu0
        %v5872 = vadd.f32 %v4932, %v5871
        %5873 = vmatmul.bf16.gmra.mxu0 %v4788
        %v5874 = vpop.f32.mrf.mxu0
        %v5875 = vadd.f32 %v4932, %v5874
        %v5876 = vpop.f32.mrf.mxu0
        %v5877 = vadd.f32 %v4932, %v5876
        %5878 = vmatmul.bf16.gmra.mxu0 %v4792
        %v5879 = vpop.f32.mrf.mxu0
        %v5880 = vadd.f32 %v4932, %v5879
        %v5881 = vpop.f32.mrf.mxu0
        %v5882 = vadd.f32 %v4932, %v5881
        %5883 = vmatmul.bf16.gmra.mxu0 %v4796
        %v5884 = vpop.f32.mrf.mxu0
        %v5885 = vadd.f32 %v4932, %v5884
        %v5886 = vpop.f32.mrf.mxu0
        %v5887 = vadd.f32 %v4932, %v5886
        %5888 = vdwg.mxu0
        %5889 = vmatpush.bf16.msra.mxu0 %v5303
        %5890 = vmatpush.bf16.msra.mxu0 %v5300
        %5891 = vmatpush.bf16.msra.mxu0 %v5297
        %5892 = vmatpush.bf16.msra.mxu0 %v5294
        %5893 = vmatpush.bf16.msra.mxu0 %v5291
        %5894 = vmatpush.bf16.msra.mxu0 %v5288
        %5895 = vmatpush.bf16.msra.mxu0 %v5285
        %5896 = vmatpush.bf16.msra.mxu0 %v5282
        %5897 = vmatmul.bf16.gmra.mxu0 %v4769
        %v5898 = vpop.f32.mrf.mxu0
        %v5899 = vadd.f32 %v5850, %v5898
        %v5900 = vpop.f32.mrf.mxu0
        %v5901 = vadd.f32 %v5852, %v5900
        %5902 = vmatmul.bf16.gmra.mxu0 %v4773
        %v5903 = vpop.f32.mrf.mxu0
        %v5904 = vadd.f32 %v5855, %v5903
        %v5905 = vpop.f32.mrf.mxu0
        %v5906 = vadd.f32 %v5857, %v5905
        %5907 = vmatmul.bf16.gmra.mxu0 %v4777
        %v5908 = vpop.f32.mrf.mxu0
        %v5909 = vadd.f32 %v5860, %v5908
        %v5910 = vpop.f32.mrf.mxu0
        %v5911 = vadd.f32 %v5862, %v5910
        %5912 = vmatmul.bf16.gmra.mxu0 %v4781
        %v5913 = vpop.f32.mrf.mxu0
        %v5914 = vadd.f32 %v5865, %v5913
        %v5915 = vpop.f32.mrf.mxu0
        %v5916 = vadd.f32 %v5867, %v5915
        %5917 = vmatmul.bf16.gmra.mxu0 %v4785
        %v5918 = vpop.f32.mrf.mxu0
        %v5919 = vadd.f32 %v5870, %v5918
        %v5920 = vpop.f32.mrf.mxu0
        %v5921 = vadd.f32 %v5872, %v5920
        %5922 = vmatmul.bf16.gmra.mxu0 %v4789
        %v5923 = vpop.f32.mrf.mxu0
        %v5924 = vadd.f32 %v5875, %v5923
        %v5925 = vpop.f32.mrf.mxu0
        %v5926 = vadd.f32 %v5877, %v5925
        %5927 = vmatmul.bf16.gmra.mxu0 %v4793
        %v5928 = vpop.f32.mrf.mxu0
        %v5929 = vadd.f32 %v5880, %v5928
        %v5930 = vpop.f32.mrf.mxu0
        %v5931 = vadd.f32 %v5882, %v5930
        %5932 = vmatmul.bf16.gmra.mxu0 %v4797
        %v5933 = vpop.f32.mrf.mxu0
        %v5934 = vadd.f32 %v5885, %v5933
        %v5935 = vpop.f32.mrf.mxu0
        %v5936 = vadd.f32 %v5887, %v5935
        %5937 = vdwg.mxu0
        %5938 = vmatpush.bf16.msra.mxu0 %v5327
        %5939 = vmatpush.bf16.msra.mxu0 %v5324
        %5940 = vmatpush.bf16.msra.mxu0 %v5321
        %5941 = vmatpush.bf16.msra.mxu0 %v5318
        %5942 = vmatpush.bf16.msra.mxu0 %v5315
        %5943 = vmatpush.bf16.msra.mxu0 %v5312
        %5944 = vmatpush.bf16.msra.mxu0 %v5309
        %5945 = vmatpush.bf16.msra.mxu0 %v5306
        %5946 = vmatmul.bf16.gmra.mxu0 %v4770
        %v5947 = vpop.f32.mrf.mxu0
        %v5948 = vadd.f32 %v5899, %v5947
        %v5949 = vpop.f32.mrf.mxu0
        %v5950 = vadd.f32 %v5901, %v5949
        %5951 = vmatmul.bf16.gmra.mxu0 %v4774
        %v5952 = vpop.f32.mrf.mxu0
        %v5953 = vadd.f32 %v5904, %v5952
        %v5954 = vpop.f32.mrf.mxu0
        %v5955 = vadd.f32 %v5906, %v5954
        %5956 = vmatmul.bf16.gmra.mxu0 %v4778
        %v5957 = vpop.f32.mrf.mxu0
        %v5958 = vadd.f32 %v5909, %v5957
        %v5959 = vpop.f32.mrf.mxu0
        %v5960 = vadd.f32 %v5911, %v5959
        %5961 = vmatmul.bf16.gmra.mxu0 %v4782
        %v5962 = vpop.f32.mrf.mxu0
        %v5963 = vadd.f32 %v5914, %v5962
        %v5964 = vpop.f32.mrf.mxu0
        %v5965 = vadd.f32 %v5916, %v5964
        %5966 = vmatmul.bf16.gmra.mxu0 %v4786
        %v5967 = vpop.f32.mrf.mxu0
        %v5968 = vadd.f32 %v5919, %v5967
        %v5969 = vpop.f32.mrf.mxu0
        %v5970 = vadd.f32 %v5921, %v5969
        %5971 = vmatmul.bf16.gmra.mxu0 %v4790
        %v5972 = vpop.f32.mrf.mxu0
        %v5973 = vadd.f32 %v5924, %v5972
        %v5974 = vpop.f32.mrf.mxu0
        %v5975 = vadd.f32 %v5926, %v5974
        %5976 = vmatmul.bf16.gmra.mxu0 %v4794
        %v5977 = vpop.f32.mrf.mxu0
        %v5978 = vadd.f32 %v5929, %v5977
        %v5979 = vpop.f32.mrf.mxu0
        %v5980 = vadd.f32 %v5931, %v5979
        %5981 = vmatmul.bf16.gmra.mxu0 %v4798
        %v5982 = vpop.f32.mrf.mxu0
        %v5983 = vadd.f32 %v5934, %v5982
        %v5984 = vpop.f32.mrf.mxu0
        %v5985 = vadd.f32 %v5936, %v5984
        %5986 = vdwg.mxu0
        %5987 = vmatpush.bf16.msra.mxu0 %v5351
        %5988 = vmatpush.bf16.msra.mxu0 %v5348
        %5989 = vmatpush.bf16.msra.mxu0 %v5345
        %5990 = vmatpush.bf16.msra.mxu0 %v5342
        %5991 = vmatpush.bf16.msra.mxu0 %v5339
        %5992 = vmatpush.bf16.msra.mxu0 %v5336
        %5993 = vmatpush.bf16.msra.mxu0 %v5333
        %5994 = vmatpush.bf16.msra.mxu0 %v5330
        %5995 = vmatmul.bf16.gmra.mxu0 %v4771
        %v5996 = vpop.f32.mrf.mxu0
        %v5997 = vadd.f32 %v5948, %v5996
        %v5998 = vpop.f32.mrf.mxu0
        %v5999 = vadd.f32 %v5950, %v5998
        %6000 = vmatmul.bf16.gmra.mxu0 %v4775
        %v6001 = vpop.f32.mrf.mxu0
        %v6002 = vadd.f32 %v5953, %v6001
        %v6003 = vpop.f32.mrf.mxu0
        %v6004 = vadd.f32 %v5955, %v6003
        %6005 = vmatmul.bf16.gmra.mxu0 %v4779
        %v6006 = vpop.f32.mrf.mxu0
        %v6007 = vadd.f32 %v5958, %v6006
        %v6008 = vpop.f32.mrf.mxu0
        %v6009 = vadd.f32 %v5960, %v6008
        %6010 = vmatmul.bf16.gmra.mxu0 %v4783
        %v6011 = vpop.f32.mrf.mxu0
        %v6012 = vadd.f32 %v5963, %v6011
        %v6013 = vpop.f32.mrf.mxu0
        %v6014 = vadd.f32 %v5965, %v6013
        %6015 = vmatmul.bf16.gmra.mxu0 %v4787
        %v6016 = vpop.f32.mrf.mxu0
        %v6017 = vadd.f32 %v5968, %v6016
        %v6018 = vpop.f32.mrf.mxu0
        %v6019 = vadd.f32 %v5970, %v6018
        %6020 = vmatmul.bf16.gmra.mxu0 %v4791
        %v6021 = vpop.f32.mrf.mxu0
        %v6022 = vadd.f32 %v5973, %v6021
        %v6023 = vpop.f32.mrf.mxu0
        %v6024 = vadd.f32 %v5975, %v6023
        %6025 = vmatmul.bf16.gmra.mxu0 %v4795
        %v6026 = vpop.f32.mrf.mxu0
        %v6027 = vadd.f32 %v5978, %v6026
        %v6028 = vpop.f32.mrf.mxu0
        %v6029 = vadd.f32 %v5980, %v6028
        %6030 = vmatmul.bf16.gmra.mxu0 %v4799
        %v6031 = vpop.f32.mrf.mxu0
        %v6032 = vadd.f32 %v5983, %v6031
        %v6033 = vpop.f32.mrf.mxu0
        %v6034 = vadd.f32 %v5985, %v6033
        %6035 = vdwg.mxu0
        %v6036 = vmax.f32 %v5605, 0.0
        %v6037 = vmax.f32 %v5801, 0.0
        %v6038 = vmax.f32 %v5997, 0.0
        %v6039 = vmax.f32 %v5607, 0.0
        %v6040 = vmax.f32 %v5803, 0.0
        %v6041 = vmax.f32 %v5999, 0.0
        %v6042 = vmax.f32 %v5610, 0.0
        %v6043 = vmax.f32 %v5806, 0.0
        %v6044 = vmax.f32 %v6002, 0.0
        %v6045 = vmax.f32 %v5612, 0.0
        %v6046 = vmax.f32 %v5808, 0.0
        %v6047 = vmax.f32 %v6004, 0.0
        %v6048 = vmax.f32 %v5615, 0.0
        %v6049 = vmax.f32 %v5811, 0.0
        %v6050 = vmax.f32 %v6007, 0.0
        %v6051 = vmax.f32 %v5617, 0.0
        %v6052 = vmax.f32 %v5813, 0.0
        %v6053 = vmax.f32 %v6009, 0.0
        %v6054 = vmax.f32 %v5620, 0.0
        %v6055 = vmax.f32 %v5816, 0.0
        %v6056 = vmax.f32 %v6012, 0.0
        %v6057 = vmax.f32 %v5622, 0.0
        %v6058 = vmax.f32 %v5818, 0.0
        %v6059 = vmax.f32 %v6014, 0.0
        %v6060 = vmax.f32 %v5625, 0.0
        %v6061 = vmax.f32 %v5821, 0.0
        %v6062 = vmax.f32 %v6017, 0.0
        %v6063 = vmax.f32 %v5627, 0.0
        %v6064 = vmax.f32 %v5823, 0.0
        %v6065 = vmax.f32 %v6019, 0.0
        %v6066 = vmax.f32 %v5630, 0.0
        %v6067 = vmax.f32 %v5826, 0.0
        %v6068 = vmax.f32 %v6022, 0.0
        %v6069 = vmax.f32 %v5632, 0.0
        %v6070 = vmax.f32 %v5828, 0.0
        %v6071 = vmax.f32 %v6024, 0.0
        %v6072 = vmax.f32 %v5635, 0.0
        %v6073 = vmax.f32 %v5831, 0.0
        %v6074 = vmax.f32 %v6027, 0.0
        %v6075 = vmax.f32 %v5637, 0.0
        %v6076 = vmax.f32 %v5833, 0.0
        %v6077 = vmax.f32 %v6029, 0.0
        %v6078 = vmax.f32 %v5640, 0.0
        %v6079 = vmax.f32 %v5836, 0.0
        %v6080 = vmax.f32 %v6032, 0.0
        %v6081 = vmax.f32 %v5642, 0.0
        %v6082 = vmax.f32 %v5838, 0.0
        %v6083 = vmax.f32 %v6034, 0.0
        %v6084 = vld [vmem:[%s9] sm:$0xff]
        %v6085 = vld [vmem:[%s9 + $0x8] sm:$0xff]
        %v6086 = vld [vmem:[%s9 + $0x10] sm:$0xff]
        %6087 = vmatpush.xpose.msra.mxu0 %v6081
        %6088 = vmatpush.xpose.msra.mxu0 %v6078
        %6089 = vmatpush.xpose.msra.mxu0 %v6075
        %6090 = vmatpush.xpose.msra.mxu0 %v6072
        %6091 = vmatpush.xpose.msra.mxu0 %v6069
        %6092 = vmatpush.xpose.msra.mxu0 %v6066
        %6093 = vmatpush.xpose.msra.mxu0 %v6063
        %6094 = vmatpush.xpose.msra.mxu0 %v6060
        %6095 = vmatpush.xpose.msra.mxu0 %v6057
        %6096 = vmatpush.xpose.msra.mxu0 %v6054
        %6097 = vmatpush.xpose.msra.mxu0 %v6051
        %6098 = vmatpush.xpose.msra.mxu0 %v6048
        %6099 = vmatpush.xpose.msra.mxu0 %v6045
        %6100 = vmatpush.xpose.msra.mxu0 %v6042
        %6101 = vmatpush.xpose.msra.mxu0 %v6039
        %6102 = vmatpush.xpose.msra.mxu0 %v6036
        %6103 = vmatmul.f32.gmra.mxu0 %v6084
        %v6104 = vpop.f32.mrf.mxu0
        %v6105 = vadd.f32 0.0, %v6104
        %6106 = vdwg.mxu0
        %6107 = vmatpush.xpose.msra.mxu0 %v6082
        %6108 = vmatpush.xpose.msra.mxu0 %v6079
        %6109 = vmatpush.xpose.msra.mxu0 %v6076
        %6110 = vmatpush.xpose.msra.mxu0 %v6073
        %6111 = vmatpush.xpose.msra.mxu0 %v6070
        %6112 = vmatpush.xpose.msra.mxu0 %v6067
        %6113 = vmatpush.xpose.msra.mxu0 %v6064
        %6114 = vmatpush.xpose.msra.mxu0 %v6061
        %6115 = vmatpush.xpose.msra.mxu0 %v6058
        %6116 = vmatpush.xpose.msra.mxu0 %v6055
        %6117 = vmatpush.xpose.msra.mxu0 %v6052
        %6118 = vmatpush.xpose.msra.mxu0 %v6049
        %6119 = vmatpush.xpose.msra.mxu0 %v6046
        %6120 = vmatpush.xpose.msra.mxu0 %v6043
        %6121 = vmatpush.xpose.msra.mxu0 %v6040
        %6122 = vmatpush.xpose.msra.mxu0 %v6037
        %6123 = vmatmul.f32.gmra.mxu0 %v6085
        %v6124 = vpop.f32.mrf.mxu0
        %v6125 = vadd.f32 %v6105, %v6124
        %6126 = vdwg.mxu0
        %6127 = vmatpush.xpose.msra.mxu0 %v6083
        %6128 = vmatpush.xpose.msra.mxu0 %v6080
        %6129 = vmatpush.xpose.msra.mxu0 %v6077
        %6130 = vmatpush.xpose.msra.mxu0 %v6074
        %6131 = vmatpush.xpose.msra.mxu0 %v6071
        %6132 = vmatpush.xpose.msra.mxu0 %v6068
        %6133 = vmatpush.xpose.msra.mxu0 %v6065
        %6134 = vmatpush.xpose.msra.mxu0 %v6062
        %6135 = vmatpush.xpose.msra.mxu0 %v6059
        %6136 = vmatpush.xpose.msra.mxu0 %v6056
        %6137 = vmatpush.xpose.msra.mxu0 %v6053
        %6138 = vmatpush.xpose.msra.mxu0 %v6050
        %6139 = vmatpush.xpose.msra.mxu0 %v6047
        %6140 = vmatpush.xpose.msra.mxu0 %v6044
        %6141 = vmatpush.xpose.msra.mxu0 %v6041
        %6142 = vmatpush.xpose.msra.mxu0 %v6038
        %6143 = vmatmul.f32.gmra.mxu0 %v6086
        %v6144 = vpop.f32.mrf.mxu0
        %v6145 = vadd.f32 %v6125, %v6144
        %6146 = vdwg.mxu0
        %v6147 = vld [vmem:[#allocation2] sm:$0x1]
        %6149 = vset.pattern.permute.xlu0 0
        %6150 = vperm.xlu0 %6149, %v6147
        %v6151 = vpop.permute.xlu0 %6150
        %v6153 = vperm.slane %v6151, 0
        %v6154 = vadd.f32 %v6145, %v6153
        %6155 = vst [vmem:[%s431] sm:$0x1] %v6154
        %s6156 = sand.u32 %s278, 1
        %s6157 = scalar_lea.sflag [#allocation5], %s6156
        %s6158 = sand.u32 %s278, 1
        %s6159 = scalar_lea.vmem [#allocation8], %s6158
        // Predicated region
        $region73: #{critic_forward.1} parent=63 // pred_check
          %p6160 = pneg %p288
        $region74: #{critic_forward.1} parent=63 // pred_check_branch
          %6162 = sbr.rel (%p6160) target = $region76
        $region75: #{critic_forward.1} parent=63 // pred_region
          %6164 = vsyncadd %s6157, 0
          %s6165 = scalar_lea.hbm %s11, %s29
          %s6167 = sshll.u32 %s6159, 4
          %s6168 = int_to_ptr.vmem [resolvable:$true] %s6167
          %s6169 = sshll.u32 %s6165, 4
          %s6170 = int_to_ptr.hbm [resolvable:$true] %s6169
          %6172 = dma.vmem_to_hbm [thread:$0]  %s6168, 16, %s6170, %s6157
        $region76: #{critic_forward.1} parent=63 // pred_fallthru
          _
      $region64: #{critic_forward.1} parent=5 // pred_fallthru
        _
      %p6173 = scmp.le.s32.totalorder 2, %s24
      // Predicated region
      $region77: #{critic_forward.1} parent=5 // pred_check
        %p6174 = pneg %p6173
      $region78: #{critic_forward.1} parent=5 // pred_check_branch
        %6176 = sbr.rel (%p6174) target = $region80
      $region79: #{critic_forward.1} parent=5 // pred_region
        %s6177 = ssub.s32 %s24, 2
        // Predicated region
        $region81: #{critic_forward.1} parent=79 // pred_check
          %p6178 = pneg %p294
        $region82: #{critic_forward.1} parent=79 // pred_check_branch
          %6180 = sbr.rel (%p6178) target = $region84
        $region83: #{critic_forward.1} parent=79 // pred_region
          %s6181 = sand.u32 %s279, 1
          %s6182 = scalar_lea.sflag [#allocation5], %s6181
          %s6183 = sand.u32 %s279, 1
          %s6184 = scalar_lea.vmem [#allocation8], %s6183
          %6186 = dma.done %s6182, 16
        $region84: #{critic_forward.1} parent=79 // pred_fallthru
          _
      $region80: #{critic_forward.1} parent=5 // pred_fallthru
        _
    $region6: #{critic_forward.1} parent=1 // loop_footer
      %s28 = sadd.s32 1, %s24
    $region7: #{critic_forward.1} parent=1 // loop_footer_branch
      %23 = sbr.rel target = $region3
    $region8: #{critic_forward.1} parent=1 // loop_exit
      _
    %6187 = vsyncpa [#allocation4], 1
    %s6188 = scalar_lea.sflag [#allocation4], 1
    %6189 = vsyncpa %s6188, 1
    %6190 = vsyncpa [#allocation7], 1
    %6191 = vsyncpa [#allocation5], 1
    %s6192 = scalar_lea.sflag [#allocation5], 1
    %6193 = vsyncpa %s6192, 1

</llo_original>
